<compile_context>
chip_gen: v6e
topology: v6e:2x2x1
jax: 0.10.0
libtpu: 0.0.40
codegen_flags: <defaults>
</compile_context>

<pallas_src>
import jax
import jax.numpy as jnp
from jax import lax
from jax.experimental import pallas as pl
from jax.experimental.pallas import tpu as pltpu


def _sa_layer_kernel(xh_ref, xo_ref, wm_ref, bv_ref, xr_ref, attn_ref):
    """Single invocation, whole problem resident in VMEM (~35 KB).

    xh_ref  : (B, C, Nh)   native layout (no wrapper transposes)
    xo_ref  : (B, C, No)
    wm_ref  : (2C, C)      rows [0:C] = Wv, rows [C:2C] = M = Wqk^T Wqk
    bv_ref  : (C, 1)
    xr_ref  : (B, C, Nh)   == torch x_r
    attn_ref: (B, Nh, No)  == torch attention
    """
    B, C, Nh = xh_ref.shape
    No = xo_ref.shape[2]

    wm = wm_ref[...]                                    # (2C, C)
    bv = bv_ref[...]                                    # (C, 1)
    ones_q = jnp.ones((1, Nh), jnp.float32)             # query-axis summing row

    # B is tiny & static -> unrolled; leading-dim indexing is a cheap view
    # (no lane-offset slicing, no concatenation, direct per-batch stores).
    for b in range(B):
        xh_b = xh_ref[b]                                # (C, Nh)
        xo_b = xo_ref[b]                                # (C, No)

        # Fused projection: one MXU pass yields both Wv@xo and M@xo; the row
        # split is sublane-aligned (multiple of 8), so no relayout.
        proj = jnp.dot(wm, xo_b, preferred_element_type=jnp.float32)   # (2C, No)
        v_b = proj[:C, :] + bv                          # (C, No)
        mxo_b = proj[C:, :]                             # (C, No)

        # alpha = q^T k = xh^T (Wqk^T Wqk) xo; contract the C dims directly
        # (transpose folded into dot_general dimension_numbers).
        alpha = lax.dot_general(xh_b, mxo_b, (((0,), (0,)), ((), ())),
                                preferred_element_type=jnp.float32)    # (Nh, No)

        # torch: attention.sum(dim=1, keepdim=True) -> sum over the query (Nh)
        # axis.  Done on the MXU (ones-row matmul; MXU has huge slack here)
        # instead of an XLU sublane reduce; the division becomes an exact
        # reciprocal + VPU multiply.
        denom = jnp.dot(ones_q, alpha,
                        preferred_element_type=jnp.float32)            # (1, No)
        inv = pl.reciprocal(1e-9 + denom, approx=False)                # exact
        attention = alpha * inv                                        # (Nh, No)

        # x_r already permuted: contract the No dims of v (C,No) and
        # attention (Nh,No) -> (C, Nh), folding bmm + final permute.
        x_r = lax.dot_general(v_b, attention, (((1,), (1,)), ((), ())),
                              preferred_element_type=jnp.float32)      # (C, Nh)

        xr_ref[b] = x_r
        attn_ref[b] = attention


def sa_layer_1(xh, xo, w_qk, w_v, b_v):
    """xh: (B, C, Nh), xo: (B, C, No), w_qk: (C//4, C), w_v: (C, C), b_v: (1, C).

    Returns (x_r (B, C, Nh), attention (B, Nh, No)) exactly like the torch module.
    """
    B, C, Nh = xh.shape
    _, _, No = xo.shape

    # Tiny weight-only prep (O(C^2)): exact algebraic fold M = Wqk^T Wqk and
    # the stacked projection weight [Wv ; M].  No activation-sized transposes.
    m = jnp.dot(w_qk.T, w_qk, preferred_element_type=jnp.float32)      # (C, C)
    wm = jnp.concatenate([w_v.astype(jnp.float32), m], axis=0)         # (2C, C)
    bv_col = b_v.reshape(C, 1).astype(jnp.float32)                     # (C, 1)

    vmem = pl.BlockSpec(memory_space=pltpu.MemorySpace.VMEM)

    x_r, attention = pl.pallas_call(
        _sa_layer_kernel,
        out_shape=(
            jax.ShapeDtypeStruct((B, C, Nh), jnp.float32),
            jax.ShapeDtypeStruct((B, Nh, No), jnp.float32),
        ),
        in_specs=[vmem, vmem, vmem, vmem],
        out_specs=(vmem, vmem),
    )(xh, xo, wm, bv_col)
    # TODO(synk): at production GraspNet point counts (N ~ 1k+), add a grid
    # over No tiles marked dimension_semantics=("parallel",) so v7x's second
    # TensorCore is used and VMEM stays bounded; pure overhead at this size.
    return x_r, attention


def sa_layer_1_ref(xh, xo, w_qk, w_v, b_v):
    # Pure-JAX reference mirroring the PyTorch forward literally.
    q = jnp.einsum("oc,bcn->bno", w_qk, xh)                            # (B, Nh, C//4)
    k = jnp.einsum("oc,bcn->bon", w_qk, xo)                            # (B, C//4, No)
    v = jnp.einsum("oc,bcn->bno", w_v, xo) + b_v.reshape(-1)[None, None, :]
    alpha = jnp.einsum("bno,bom->bnm", q, k)                           # (B, Nh, No)
    attention = alpha / (1e-9 + alpha.sum(axis=1, keepdims=True))
    x_r = jnp.einsum("bnm,bmc->bnc", attention, v)                     # (B, Nh, C)
    return jnp.transpose(x_r, (0, 2, 1)), attention


if __name__ == "__main__":
    # Full f32 matmul precision so the Pallas kernel and the XLA reference agree.
    jax.config.update("jax_default_matmul_precision", "highest")

    # Small shapes consistent with the module: channels=16, Nh=32, No=64, B=2.
    B, C, Nh, No = 2, 16, 32, 64
    C4 = C // 4

    key = jax.random.PRNGKey(0)
    k1, k2, k3, k4, k5 = jax.random.split(key, 5)

    # Positive, well-conditioned inputs: the module divides by a *signed* sum
    # over the query axis (no softmax), which for zero-mean data can be
    # arbitrarily close to zero and makes finite-precision comparison
    # meaningless. Positive data keeps the denominator comfortably > 0.
    xh = jax.random.uniform(k1, (B, C, Nh), jnp.float32, 0.5, 1.5)
    xo = jax.random.uniform(k2, (B, C, No), jnp.float32, 0.5, 1.5)
    w_qk = jax.random.uniform(k3, (C4, C), jnp.float32, 0.0, 0.2)   # shared q/k weight
    w_v = jax.random.uniform(k4, (C, C), jnp.float32, 0.0, 0.2)
    b_v = jax.random.uniform(k5, (1, C), jnp.float32, 0.0, 0.1)

    x_r, attention = jax.block_until_ready(
        jax.jit(sa_layer_1)(xh, xo, w_qk, w_v, b_v))

    x_r_ref, attention_ref = sa_layer_1_ref(xh, xo, w_qk, w_v, b_v)

    assert jnp.allclose(x_r, x_r_ref, atol=1e-4, rtol=1e-3), (
        float(jnp.max(jnp.abs(x_r - x_r_ref))))
    assert jnp.allclose(attention, attention_ref, atol=1e-4, rtol=1e-3), (
        float(jnp.max(jnp.abs(attention - attention_ref))))

    print("KERNEL_OK")
</pallas_src>

<mosaic_0001>
module attributes {stable_mosaic.version = 11 : i64} {
  func.func @_sa_layer_kernel(%arg0: memref<2x16x32xf32, #tpu.memory_space<vmem>>, %arg1: memref<2x16x64xf32, #tpu.memory_space<vmem>>, %arg2: memref<32x16xf32, #tpu.memory_space<vmem>>, %arg3: memref<16x1xf32, #tpu.memory_space<vmem>>, %arg4: memref<2x16x32xf32, #tpu.memory_space<vmem>>, %arg5: memref<2x32x64xf32, #tpu.memory_space<vmem>>) attributes {dimension_semantics = [], scalar_prefetch = 0 : i64, scratch_operands = 0 : i64, tpu.core_type = #tpu.core_type<tc>} {
    %c0 = arith.constant 0 : index
    %c0_0 = arith.constant 0 : index
    %0 = vector.load %arg2[%c0, %c0_0] : memref<32x16xf32, #tpu.memory_space<vmem>>, vector<32x16xf32>
    %c0_1 = arith.constant 0 : index
    %c0_2 = arith.constant 0 : index
    %1 = vector.load %arg3[%c0_1, %c0_2] : memref<16x1xf32, #tpu.memory_space<vmem>>, vector<16x1xf32>
    %cst = arith.constant 1.000000e+00 : f32
    %2 = vector.broadcast %cst : f32 to vector<1x32xf32>
    %c0_3 = arith.constant 0 : index
    %c0_4 = arith.constant 0 : index
    %c0_5 = arith.constant 0 : index
    %3 = vector.load %arg0[%c0_3, %c0_4, %c0_5] : memref<2x16x32xf32, #tpu.memory_space<vmem>>, vector<1x16x32xf32>
    %4 = vector.shape_cast %3 : vector<1x16x32xf32> to vector<16x32xf32>
    %c0_6 = arith.constant 0 : index
    %c0_7 = arith.constant 0 : index
    %c0_8 = arith.constant 0 : index
    %5 = vector.load %arg1[%c0_6, %c0_7, %c0_8] : memref<2x16x64xf32, #tpu.memory_space<vmem>>, vector<1x16x64xf32>
    %6 = vector.shape_cast %5 : vector<1x16x64xf32> to vector<16x64xf32>
    %cst_9 = arith.constant dense<0.000000e+00> : vector<32x64xf32>
    %7 = tpu.matmul %0, %6, %cst_9 {dimension_numbers = #tpu.dot_dimension_numbers<[1], [0], [0], [1], [0, 0, 1, 1], [], []>, precision = #tpu.contract_precision<fp32>} : vector<32x16xf32>, vector<16x64xf32>, vector<32x64xf32> -> vector<32x64xf32>
    %8 = vector.extract_strided_slice %7 {offsets = [0, 0], sizes = [16, 64], strides = [1, 1]} : vector<32x64xf32> to vector<16x64xf32>
    %9 = vector.broadcast %1 : vector<16x1xf32> to vector<16x64xf32>
    %10 = arith.addf %8, %9 : vector<16x64xf32>
    %11 = vector.extract_strided_slice %7 {offsets = [16, 0], sizes = [16, 64], strides = [1, 1]} : vector<32x64xf32> to vector<16x64xf32>
    %cst_10 = arith.constant dense<0.000000e+00> : vector<32x64xf32>
    %12 = tpu.matmul %4, %11, %cst_10 {dimension_numbers = #tpu.dot_dimension_numbers<[0], [0], [1], [1], [0, 1, 1, 1], [], []>, precision = #tpu.contract_precision<fp32>} : vector<16x32xf32>, vector<16x64xf32>, vector<32x64xf32> -> vector<32x64xf32>
    %cst_11 = arith.constant dense<0.000000e+00> : vector<1x64xf32>
    %13 = tpu.matmul %2, %12, %cst_11 {dimension_numbers = #tpu.dot_dimension_numbers<[1], [0], [0], [1], [0, 0, 1, 1], [], []>, precision = #tpu.contract_precision<fp32>} : vector<1x32xf32>, vector<32x64xf32>, vector<1x64xf32> -> vector<1x64xf32>
    %cst_12 = arith.constant 9.99999971E-10 : f32
    %14 = vector.broadcast %cst_12 : f32 to vector<1x64xf32>
    %15 = arith.addf %14, %13 : vector<1x64xf32>
    %16 = tpu.reciprocal %15 : vector<1x64xf32> -> vector<1x64xf32>
    %17 = vector.broadcast %16 : vector<1x64xf32> to vector<32x64xf32>
    %18 = arith.mulf %12, %17 : vector<32x64xf32>
    %cst_13 = arith.constant dense<0.000000e+00> : vector<16x32xf32>
    %19 = tpu.matmul %10, %18, %cst_13 {dimension_numbers = #tpu.dot_dimension_numbers<[1], [1], [0], [0], [0, 0, 1, 0], [], []>, precision = #tpu.contract_precision<fp32>} : vector<16x64xf32>, vector<32x64xf32>, vector<16x32xf32> -> vector<16x32xf32>
    %c0_14 = arith.constant 0 : index
    %c0_15 = arith.constant 0 : index
    %c0_16 = arith.constant 0 : index
    %20 = vector.load %arg4[%c0_14, %c0_15, %c0_16] : memref<2x16x32xf32, #tpu.memory_space<vmem>>, vector<1x16x32xf32>
    %21 = vector.shape_cast %20 : vector<1x16x32xf32> to vector<16x32xf32>
    %22 = vector.shape_cast %19 : vector<16x32xf32> to vector<1x16x32xf32>
    tpu.vector_store %arg4[%c0_14, %c0_15, %c0_16], %22 {strides = array<i32>} : memref<2x16x32xf32, #tpu.memory_space<vmem>>, vector<1x16x32xf32>,
    %c0_17 = arith.constant 0 : index
    %c0_18 = arith.constant 0 : index
    %c0_19 = arith.constant 0 : index
    %23 = vector.load %arg5[%c0_17, %c0_18, %c0_19] : memref<2x32x64xf32, #tpu.memory_space<vmem>>, vector<1x32x64xf32>
    %24 = vector.shape_cast %23 : vector<1x32x64xf32> to vector<32x64xf32>
    %25 = vector.shape_cast %18 : vector<32x64xf32> to vector<1x32x64xf32>
    tpu.vector_store %arg5[%c0_17, %c0_18, %c0_19], %25 {strides = array<i32>} : memref<2x32x64xf32, #tpu.memory_space<vmem>>, vector<1x32x64xf32>,
    %c1 = arith.constant 1 : index
    %c0_20 = arith.constant 0 : index
    %c0_21 = arith.constant 0 : index
    %26 = vector.load %arg0[%c1, %c0_20, %c0_21] : memref<2x16x32xf32, #tpu.memory_space<vmem>>, vector<1x16x32xf32>
    %27 = vector.shape_cast %26 : vector<1x16x32xf32> to vector<16x32xf32>
    %c1_22 = arith.constant 1 : index
    %c0_23 = arith.constant 0 : index
    %c0_24 = arith.constant 0 : index
    %28 = vector.load %arg1[%c1_22, %c0_23, %c0_24] : memref<2x16x64xf32, #tpu.memory_space<vmem>>, vector<1x16x64xf32>
    %29 = vector.shape_cast %28 : vector<1x16x64xf32> to vector<16x64xf32>
    %cst_25 = arith.constant dense<0.000000e+00> : vector<32x64xf32>
    %30 = tpu.matmul %0, %29, %cst_25 {dimension_numbers = #tpu.dot_dimension_numbers<[1], [0], [0], [1], [0, 0, 1, 1], [], []>, precision = #tpu.contract_precision<fp32>} : vector<32x16xf32>, vector<16x64xf32>, vector<32x64xf32> -> vector<32x64xf32>
    %31 = vector.extract_strided_slice %30 {offsets = [0, 0], sizes = [16, 64], strides = [1, 1]} : vector<32x64xf32> to vector<16x64xf32>
    %32 = vector.broadcast %1 : vector<16x1xf32> to vector<16x64xf32>
    %33 = arith.addf %31, %32 : vector<16x64xf32>
    %34 = vector.extract_strided_slice %30 {offsets = [16, 0], sizes = [16, 64], strides = [1, 1]} : vector<32x64xf32> to vector<16x64xf32>
    %cst_26 = arith.constant dense<0.000000e+00> : vector<32x64xf32>
    %35 = tpu.matmul %27, %34, %cst_26 {dimension_numbers = #tpu.dot_dimension_numbers<[0], [0], [1], [1], [0, 1, 1, 1], [], []>, precision = #tpu.contract_precision<fp32>} : vector<16x32xf32>, vector<16x64xf32>, vector<32x64xf32> -> vector<32x64xf32>
    %cst_27 = arith.constant dense<0.000000e+00> : vector<1x64xf32>
    %36 = tpu.matmul %2, %35, %cst_27 {dimension_numbers = #tpu.dot_dimension_numbers<[1], [0], [0], [1], [0, 0, 1, 1], [], []>, precision = #tpu.contract_precision<fp32>} : vector<1x32xf32>, vector<32x64xf32>, vector<1x64xf32> -> vector<1x64xf32>
    %cst_28 = arith.constant 9.99999971E-10 : f32
    %37 = vector.broadcast %cst_28 : f32 to vector<1x64xf32>
    %38 = arith.addf %37, %36 : vector<1x64xf32>
    %39 = tpu.reciprocal %38 : vector<1x64xf32> -> vector<1x64xf32>
    %40 = vector.broadcast %39 : vector<1x64xf32> to vector<32x64xf32>
    %41 = arith.mulf %35, %40 : vector<32x64xf32>
    %cst_29 = arith.constant dense<0.000000e+00> : vector<16x32xf32>
    %42 = tpu.matmul %33, %41, %cst_29 {dimension_numbers = #tpu.dot_dimension_numbers<[1], [1], [0], [0], [0, 0, 1, 0], [], []>, precision = #tpu.contract_precision<fp32>} : vector<16x64xf32>, vector<32x64xf32>, vector<16x32xf32> -> vector<16x32xf32>
    %c1_30 = arith.constant 1 : index
    %c0_31 = arith.constant 0 : index
    %c0_32 = arith.constant 0 : index
    %43 = vector.load %arg4[%c1_30, %c0_31, %c0_32] : memref<2x16x32xf32, #tpu.memory_space<vmem>>, vector<1x16x32xf32>
    %44 = vector.shape_cast %43 : vector<1x16x32xf32> to vector<16x32xf32>
    %45 = vector.shape_cast %42 : vector<16x32xf32> to vector<1x16x32xf32>
    tpu.vector_store %arg4[%c1_30, %c0_31, %c0_32], %45 {strides = array<i32>} : memref<2x16x32xf32, #tpu.memory_space<vmem>>, vector<1x16x32xf32>,
    %c1_33 = arith.constant 1 : index
    %c0_34 = arith.constant 0 : index
    %c0_35 = arith.constant 0 : index
    %46 = vector.load %arg5[%c1_33, %c0_34, %c0_35] : memref<2x32x64xf32, #tpu.memory_space<vmem>>, vector<1x32x64xf32>
    %47 = vector.shape_cast %46 : vector<1x32x64xf32> to vector<32x64xf32>
    %48 = vector.shape_cast %41 : vector<32x64xf32> to vector<1x32x64xf32>
    tpu.vector_store %arg5[%c1_33, %c0_34, %c0_35], %48 {strides = array<i32>} : memref<2x32x64xf32, #tpu.memory_space<vmem>>, vector<1x32x64xf32>,
    return
  }
}

</mosaic_0001>

<llo_original>
// kernel: sa_layer_1.1
$region0: #{sa_layer_1.1}
  #allocation0 [shape = 'u32[]', space=smem, size = 0x4, offset = 0x4, fixed_abs, tag = 'smem constant byte address 0x4 - core index']
  #allocation1 [shape = 'u32[144,128]{1,0:T(1,128)}', space=vmem, size = 0x12000, scoped, tag = 'internal scratch']
  %s0 = inlined_call_operand.vmem [shape: f32[2,16,32], index: 0, kind: input, shape index: {}]
  %s1 = inlined_call_operand.vmem [shape: f32[2,16,64], index: 1, kind: input, shape index: {}]
  %s2 = inlined_call_operand.vmem [shape: f32[32,16], index: 2, kind: input, shape index: {}]
  %s3 = inlined_call_operand.vmem [shape: f32[16,1], index: 3, kind: input, shape index: {}]
  %s4 = inlined_call_operand.hbm [shape: f32[2,16,32], index: 4, kind: output, shape index: {0}]
  %s5 = inlined_call_operand.hbm [shape: f32[2,32,64], index: 5, kind: output, shape index: {1}]
  %6 = xla_tuple %s4, %s5
  %s7 = sld [smem:[#allocation0]]
  $region34: #{sa_layer_1.1} parent=0
    _
  %s9 = ssub.s32 1, %s7
  %s10 = scalar_select 0, %s9, %s7
  $region1: #{sa_layer_1.1} parent=0
    #allocation2 [shape = 'u8[16384]{0}', space=vmem, size = 0x4000, scoped, tag = 'output window, operand 0, single buffered']
    #allocation3 [shape = 's32[1]{0}', space=sflag, size = 0x4, scoped, tag = 'scoped memory for sa_layer_1.1']
    #allocation4 [shape = 'u8[32768]{0}', space=vmem, size = 0x8000, scoped, tag = 'output window, operand 1, single buffered']
    #allocation5 [shape = 's32[1]{0}', space=sflag, size = 0x4, scoped, tag = 'scoped memory for sa_layer_1.1']
    %11 = vsyncpa [#allocation3], 0
    %12 = vsyncpa [#allocation5], 0
    // Predicated region
    $region2: #{sa_layer_1.1} parent=1 // pred_check
      _
    $region3: #{sa_layer_1.1} parent=1 // pred_check_branch
      %14 = sbr.rel (0) target = $region5
    $region4: #{sa_layer_1.1} parent=1 // pred_region
      _
    $region5: #{sa_layer_1.1} parent=1 // pred_fallthru
      _
    // Predicated region
    $region6: #{sa_layer_1.1} parent=1 // pred_check
      _
    $region7: #{sa_layer_1.1} parent=1 // pred_check_branch
      %16 = sbr.rel (0) target = $region9
    $region8: #{sa_layer_1.1} parent=1 // pred_region
      _
    $region9: #{sa_layer_1.1} parent=1 // pred_fallthru
      _
    // Predicated region
    $region10: #{sa_layer_1.1} parent=1 // pred_check
      _
    $region11: #{sa_layer_1.1} parent=1 // pred_check_branch
      %18 = sbr.rel (0) target = $region13
    $region12: #{sa_layer_1.1} parent=1 // pred_region
      _
    $region13: #{sa_layer_1.1} parent=1 // pred_fallthru
      _
    // Predicated region
    $region14: #{sa_layer_1.1} parent=1 // pred_check
      _
    $region15: #{sa_layer_1.1} parent=1 // pred_check_branch
      %20 = sbr.rel (0) target = $region17
    $region16: #{sa_layer_1.1} parent=1 // pred_region
      _
    $region17: #{sa_layer_1.1} parent=1 // pred_fallthru
      _
    %v21 = vld [vmem:[%s2] sm:$0xff]
    %v22 = vld [vmem:[%s2 + $0x8] sm:$0xff]
    %v23 = vld [vmem:[%s2 + $0x10] sm:$0xff]
    %v24 = vld [vmem:[%s2 + $0x18] sm:$0xff]
    %v25 = vld [vmem:[%s3] sm:$0xff]
    %v26 = vld [vmem:[%s3 + $0x8] sm:$0xff]
    %v27 = vld [vmem:[%s0] sm:$0xff]
    %v28 = vld [vmem:[%s0 + $0x8] sm:$0xff]
    %v29 = vld [vmem:[%s1] sm:$0xff]
    %v30 = vld [vmem:[%s1 + $0x8] sm:$0xff]
    %vm31 = vcmask 130048
    %v33 = vsel %vm31, %v21, 0
    %v36 = vsel %vm31, %v22, 0
    %v39 = vsel %vm31, %v23, 0
    %v42 = vsel %vm31, %v24, 0
    %44 = vmatprep.subr.mxu0 0.0
    %45 = vmatpush1.msra.mxu0 0.0
    %46 = vmatprep.subr.mxu0 0.0
    %47 = vmatpush1.msra.mxu0 0.0
    %48 = vmatprep.subr.mxu0 0.0
    %49 = vmatpush1.msra.mxu0 0.0
    %50 = vmatprep.subr.mxu0 0.0
    %51 = vmatpush1.msra.mxu0 0.0
    %52 = vmatprep.subr.mxu0 0.0
    %53 = vmatpush1.msra.mxu0 0.0
    %54 = vmatprep.subr.mxu0 0.0
    %55 = vmatpush1.msra.mxu0 0.0
    %56 = vmatprep.subr.mxu0 0.0
    %57 = vmatpush1.msra.mxu0 0.0
    %58 = vmatprep.subr.mxu0 0.0
    %59 = vmatpush1.msra.mxu0 0.0
    %60 = vmatprep.subr.mxu0 0.0
    %61 = vmatpush1.msra.mxu0 0.0
    %62 = vmatprep.subr.mxu0 0.0
    %63 = vmatpush1.msra.mxu0 0.0
    %64 = vmatprep.subr.mxu0 0.0
    %65 = vmatpush1.msra.mxu0 0.0
    %66 = vmatprep.subr.mxu0 0.0
    %67 = vmatpush1.msra.mxu0 0.0
    %68 = vmatprep.subr.mxu0 0.0
    %69 = vmatpush1.msra.mxu0 0.0
    %70 = vmatprep.subr.mxu0 0.0
    %71 = vmatpush1.msra.mxu0 0.0
    %72 = vmatprep.subr.mxu0 0.0
    %v73 = vand.u32 %v30, 4294901760
    %74 = vmatpush1.msra.mxu0 %v73
    %75 = vmatprep.subr.mxu0 0.0
    %v76 = vand.u32 %v29, 4294901760
    %77 = vmatpush1.msra.mxu0 %v76
    %78 = vmatprep.subr.mxu0 0.0
    %79 = vmatpush2.msra.mxu0 0.0
    %80 = vmatprep.subr.mxu0 0.0
    %81 = vmatpush2.msra.mxu0 0.0
    %82 = vmatprep.subr.mxu0 0.0
    %83 = vmatpush2.msra.mxu0 0.0
    %84 = vmatprep.subr.mxu0 0.0
    %85 = vmatpush2.msra.mxu0 0.0
    %86 = vmatprep.subr.mxu0 0.0
    %87 = vmatpush2.msra.mxu0 0.0
    %88 = vmatprep.subr.mxu0 0.0
    %89 = vmatpush2.msra.mxu0 0.0
    %90 = vmatprep.subr.mxu0 0.0
    %91 = vmatpush2.msra.mxu0 0.0
    %92 = vmatprep.subr.mxu0 0.0
    %93 = vmatpush2.msra.mxu0 0.0
    %94 = vmatprep.subr.mxu0 0.0
    %95 = vmatpush2.msra.mxu0 0.0
    %96 = vmatprep.subr.mxu0 0.0
    %97 = vmatpush2.msra.mxu0 0.0
    %98 = vmatprep.subr.mxu0 0.0
    %99 = vmatpush2.msra.mxu0 0.0
    %100 = vmatprep.subr.mxu0 0.0
    %101 = vmatpush2.msra.mxu0 0.0
    %102 = vmatprep.subr.mxu0 0.0
    %103 = vmatpush2.msra.mxu0 0.0
    %104 = vmatprep.subr.mxu0 0.0
    %105 = vmatpush2.msra.mxu0 0.0
    %106 = vmatprep.subr.mxu0 0.0
    %107 = vmatpush2.msra.mxu0 0.0
    %108 = vmatprep.subr.mxu0 0.0
    %109 = vmatpush2.msra.mxu0 0.0
    %110 = vmatprep.mubr.f32.mxu0 0.0
    %v111 = vand.u32 %v33, 4294901760
    %v112 = vsub.f32 %v33, %v111
    %v113 = vand.u32 %v112, 4294901760
    %v114 = vsub.f32 %v112, %v113
    %v115 = vand.u32 %v114, 4294901760
    %116 = vmatmul.mubr.f32.gmra.mxu0 %v115
    %v117 = vpop.f32.mrf.mxu0
    %v118 = vadd.f32 0.0, %v117
    %v119 = vpop.f32.mrf.mxu0
    %120 = vmatprep.mubr.f32.mxu0 0.0
    %v121 = vand.u32 %v36, 4294901760
    %v122 = vsub.f32 %v36, %v121
    %v123 = vand.u32 %v122, 4294901760
    %v124 = vsub.f32 %v122, %v123
    %v125 = vand.u32 %v124, 4294901760
    %126 = vmatmul.mubr.f32.gmra.mxu0 %v125
    %v127 = vpop.f32.mrf.mxu0
    %v128 = vadd.f32 0.0, %v127
    %v129 = vpop.f32.mrf.mxu0
    %130 = vmatprep.mubr.f32.mxu0 0.0
    %v131 = vand.u32 %v39, 4294901760
    %v132 = vsub.f32 %v39, %v131
    %v133 = vand.u32 %v132, 4294901760
    %v134 = vsub.f32 %v132, %v133
    %v135 = vand.u32 %v134, 4294901760
    %136 = vmatmul.mubr.f32.gmra.mxu0 %v135
    %v137 = vpop.f32.mrf.mxu0
    %v138 = vadd.f32 0.0, %v137
    %v139 = vpop.f32.mrf.mxu0
    %140 = vmatprep.mubr.f32.mxu0 0.0
    %v141 = vand.u32 %v42, 4294901760
    %v142 = vsub.f32 %v42, %v141
    %v143 = vand.u32 %v142, 4294901760
    %v144 = vsub.f32 %v142, %v143
    %v145 = vand.u32 %v144, 4294901760
    %146 = vmatmul.mubr.f32.gmra.mxu0 %v145
    %v147 = vpop.f32.mrf.mxu0
    %v148 = vadd.f32 0.0, %v147
    %v149 = vpop.f32.mrf.mxu0
    %150 = vdwg.mxu0
    %151 = vmatprep.subr.mxu0 0.0
    %152 = vmatpush1.msra.mxu0 0.0
    %153 = vmatprep.subr.mxu0 0.0
    %154 = vmatpush1.msra.mxu0 0.0
    %155 = vmatprep.subr.mxu0 0.0
    %156 = vmatpush1.msra.mxu0 0.0
    %157 = vmatprep.subr.mxu0 0.0
    %158 = vmatpush1.msra.mxu0 0.0
    %159 = vmatprep.subr.mxu0 0.0
    %160 = vmatpush1.msra.mxu0 0.0
    %161 = vmatprep.subr.mxu0 0.0
    %162 = vmatpush1.msra.mxu0 0.0
    %163 = vmatprep.subr.mxu0 0.0
    %164 = vmatpush1.msra.mxu0 0.0
    %165 = vmatprep.subr.mxu0 0.0
    %166 = vmatpush1.msra.mxu0 0.0
    %167 = vmatprep.subr.mxu0 0.0
    %168 = vmatpush1.msra.mxu0 0.0
    %169 = vmatprep.subr.mxu0 0.0
    %170 = vmatpush1.msra.mxu0 0.0
    %171 = vmatprep.subr.mxu0 0.0
    %172 = vmatpush1.msra.mxu0 0.0
    %173 = vmatprep.subr.mxu0 0.0
    %174 = vmatpush1.msra.mxu0 0.0
    %175 = vmatprep.subr.mxu0 0.0
    %176 = vmatpush1.msra.mxu0 0.0
    %177 = vmatprep.subr.mxu0 0.0
    %178 = vmatpush1.msra.mxu0 0.0
    %179 = vmatprep.subr.mxu0 0.0
    %v180 = vand.u32 %v30, 4294901760
    %v181 = vsub.f32 %v30, %v180
    %v182 = vand.u32 %v181, 4294901760
    %v183 = vsub.f32 %v181, %v182
    %v184 = vand.u32 %v183, 4294901760
    %185 = vmatpush1.msra.mxu0 %v184
    %186 = vmatprep.subr.mxu0 0.0
    %v187 = vand.u32 %v29, 4294901760
    %v188 = vsub.f32 %v29, %v187
    %v189 = vand.u32 %v188, 4294901760
    %v190 = vsub.f32 %v188, %v189
    %v191 = vand.u32 %v190, 4294901760
    %192 = vmatpush1.msra.mxu0 %v191
    %193 = vmatprep.subr.mxu0 0.0
    %194 = vmatpush2.msra.mxu0 0.0
    %195 = vmatprep.subr.mxu0 0.0
    %196 = vmatpush2.msra.mxu0 0.0
    %197 = vmatprep.subr.mxu0 0.0
    %198 = vmatpush2.msra.mxu0 0.0
    %199 = vmatprep.subr.mxu0 0.0
    %200 = vmatpush2.msra.mxu0 0.0
    %201 = vmatprep.subr.mxu0 0.0
    %202 = vmatpush2.msra.mxu0 0.0
    %203 = vmatprep.subr.mxu0 0.0
    %204 = vmatpush2.msra.mxu0 0.0
    %205 = vmatprep.subr.mxu0 0.0
    %206 = vmatpush2.msra.mxu0 0.0
    %207 = vmatprep.subr.mxu0 0.0
    %208 = vmatpush2.msra.mxu0 0.0
    %209 = vmatprep.subr.mxu0 0.0
    %210 = vmatpush2.msra.mxu0 0.0
    %211 = vmatprep.subr.mxu0 0.0
    %212 = vmatpush2.msra.mxu0 0.0
    %213 = vmatprep.subr.mxu0 0.0
    %214 = vmatpush2.msra.mxu0 0.0
    %215 = vmatprep.subr.mxu0 0.0
    %216 = vmatpush2.msra.mxu0 0.0
    %217 = vmatprep.subr.mxu0 0.0
    %218 = vmatpush2.msra.mxu0 0.0
    %219 = vmatprep.subr.mxu0 0.0
    %220 = vmatpush2.msra.mxu0 0.0
    %221 = vmatprep.subr.mxu0 0.0
    %222 = vmatpush2.msra.mxu0 0.0
    %223 = vmatprep.subr.mxu0 0.0
    %224 = vmatpush2.msra.mxu0 0.0
    %225 = vmatprep.mubr.f32.mxu0 0.0
    %v226 = vand.u32 %v33, 4294901760
    %227 = vmatmul.mubr.f32.gmra.mxu0 %v226
    %v228 = vpop.f32.mrf.mxu0
    %v229 = vadd.f32 %v118, %v228
    %v230 = vpop.f32.mrf.mxu0
    %231 = vmatprep.mubr.f32.mxu0 0.0
    %v232 = vand.u32 %v36, 4294901760
    %233 = vmatmul.mubr.f32.gmra.mxu0 %v232
    %v234 = vpop.f32.mrf.mxu0
    %v235 = vadd.f32 %v128, %v234
    %v236 = vpop.f32.mrf.mxu0
    %237 = vmatprep.mubr.f32.mxu0 0.0
    %v238 = vand.u32 %v39, 4294901760
    %239 = vmatmul.mubr.f32.gmra.mxu0 %v238
    %v240 = vpop.f32.mrf.mxu0
    %v241 = vadd.f32 %v138, %v240
    %v242 = vpop.f32.mrf.mxu0
    %243 = vmatprep.mubr.f32.mxu0 0.0
    %v244 = vand.u32 %v42, 4294901760
    %245 = vmatmul.mubr.f32.gmra.mxu0 %v244
    %v246 = vpop.f32.mrf.mxu0
    %v247 = vadd.f32 %v148, %v246
    %v248 = vpop.f32.mrf.mxu0
    %249 = vdwg.mxu0
    %250 = vmatprep.subr.mxu0 0.0
    %251 = vmatpush1.msra.mxu0 0.0
    %252 = vmatprep.subr.mxu0 0.0
    %253 = vmatpush1.msra.mxu0 0.0
    %254 = vmatprep.subr.mxu0 0.0
    %255 = vmatpush1.msra.mxu0 0.0
    %256 = vmatprep.subr.mxu0 0.0
    %257 = vmatpush1.msra.mxu0 0.0
    %258 = vmatprep.subr.mxu0 0.0
    %259 = vmatpush1.msra.mxu0 0.0
    %260 = vmatprep.subr.mxu0 0.0
    %261 = vmatpush1.msra.mxu0 0.0
    %262 = vmatprep.subr.mxu0 0.0
    %263 = vmatpush1.msra.mxu0 0.0
    %264 = vmatprep.subr.mxu0 0.0
    %265 = vmatpush1.msra.mxu0 0.0
    %266 = vmatprep.subr.mxu0 0.0
    %267 = vmatpush1.msra.mxu0 0.0
    %268 = vmatprep.subr.mxu0 0.0
    %269 = vmatpush1.msra.mxu0 0.0
    %270 = vmatprep.subr.mxu0 0.0
    %271 = vmatpush1.msra.mxu0 0.0
    %272 = vmatprep.subr.mxu0 0.0
    %273 = vmatpush1.msra.mxu0 0.0
    %274 = vmatprep.subr.mxu0 0.0
    %275 = vmatpush1.msra.mxu0 0.0
    %276 = vmatprep.subr.mxu0 0.0
    %277 = vmatpush1.msra.mxu0 0.0
    %278 = vmatprep.subr.mxu0 0.0
    %v279 = vand.u32 %v30, 4294901760
    %v280 = vsub.f32 %v30, %v279
    %281 = vmatpush1.msra.mxu0 %v280
    %282 = vmatprep.subr.mxu0 0.0
    %v283 = vand.u32 %v29, 4294901760
    %v284 = vsub.f32 %v29, %v283
    %285 = vmatpush1.msra.mxu0 %v284
    %286 = vmatprep.subr.mxu0 0.0
    %287 = vmatpush2.msra.mxu0 0.0
    %288 = vmatprep.subr.mxu0 0.0
    %289 = vmatpush2.msra.mxu0 0.0
    %290 = vmatprep.subr.mxu0 0.0
    %291 = vmatpush2.msra.mxu0 0.0
    %292 = vmatprep.subr.mxu0 0.0
    %293 = vmatpush2.msra.mxu0 0.0
    %294 = vmatprep.subr.mxu0 0.0
    %295 = vmatpush2.msra.mxu0 0.0
    %296 = vmatprep.subr.mxu0 0.0
    %297 = vmatpush2.msra.mxu0 0.0
    %298 = vmatprep.subr.mxu0 0.0
    %299 = vmatpush2.msra.mxu0 0.0
    %300 = vmatprep.subr.mxu0 0.0
    %301 = vmatpush2.msra.mxu0 0.0
    %302 = vmatprep.subr.mxu0 0.0
    %303 = vmatpush2.msra.mxu0 0.0
    %304 = vmatprep.subr.mxu0 0.0
    %305 = vmatpush2.msra.mxu0 0.0
    %306 = vmatprep.subr.mxu0 0.0
    %307 = vmatpush2.msra.mxu0 0.0
    %308 = vmatprep.subr.mxu0 0.0
    %309 = vmatpush2.msra.mxu0 0.0
    %310 = vmatprep.subr.mxu0 0.0
    %311 = vmatpush2.msra.mxu0 0.0
    %312 = vmatprep.subr.mxu0 0.0
    %313 = vmatpush2.msra.mxu0 0.0
    %314 = vmatprep.subr.mxu0 0.0
    %315 = vmatpush2.msra.mxu0 0.0
    %316 = vmatprep.subr.mxu0 0.0
    %317 = vmatpush2.msra.mxu0 0.0
    %318 = vmatprep.mubr.f32.mxu0 0.0
    %v319 = vand.u32 %v33, 4294901760
    %v320 = vsub.f32 %v33, %v319
    %321 = vmatmul.mubr.f32.gmra.mxu0 %v320
    %v322 = vpop.f32.mrf.mxu0
    %v323 = vadd.f32 %v229, %v322
    %v324 = vpop.f32.mrf.mxu0
    %325 = vmatprep.mubr.f32.mxu0 0.0
    %v326 = vand.u32 %v36, 4294901760
    %v327 = vsub.f32 %v36, %v326
    %328 = vmatmul.mubr.f32.gmra.mxu0 %v327
    %v329 = vpop.f32.mrf.mxu0
    %v330 = vadd.f32 %v235, %v329
    %v331 = vpop.f32.mrf.mxu0
    %332 = vmatprep.mubr.f32.mxu0 0.0
    %v333 = vand.u32 %v39, 4294901760
    %v334 = vsub.f32 %v39, %v333
    %335 = vmatmul.mubr.f32.gmra.mxu0 %v334
    %v336 = vpop.f32.mrf.mxu0
    %v337 = vadd.f32 %v241, %v336
    %v338 = vpop.f32.mrf.mxu0
    %339 = vmatprep.mubr.f32.mxu0 0.0
    %v340 = vand.u32 %v42, 4294901760
    %v341 = vsub.f32 %v42, %v340
    %342 = vmatmul.mubr.f32.gmra.mxu0 %v341
    %v343 = vpop.f32.mrf.mxu0
    %v344 = vadd.f32 %v247, %v343
    %v345 = vpop.f32.mrf.mxu0
    %346 = vdwg.mxu0
    %347 = vmatprep.subr.mxu0 0.0
    %348 = vmatpush1.msra.mxu0 0.0
    %349 = vmatprep.subr.mxu0 0.0
    %350 = vmatpush1.msra.mxu0 0.0
    %351 = vmatprep.subr.mxu0 0.0
    %352 = vmatpush1.msra.mxu0 0.0
    %353 = vmatprep.subr.mxu0 0.0
    %354 = vmatpush1.msra.mxu0 0.0
    %355 = vmatprep.subr.mxu0 0.0
    %356 = vmatpush1.msra.mxu0 0.0
    %357 = vmatprep.subr.mxu0 0.0
    %358 = vmatpush1.msra.mxu0 0.0
    %359 = vmatprep.subr.mxu0 0.0
    %360 = vmatpush1.msra.mxu0 0.0
    %361 = vmatprep.subr.mxu0 0.0
    %362 = vmatpush1.msra.mxu0 0.0
    %363 = vmatprep.subr.mxu0 0.0
    %364 = vmatpush1.msra.mxu0 0.0
    %365 = vmatprep.subr.mxu0 0.0
    %366 = vmatpush1.msra.mxu0 0.0
    %367 = vmatprep.subr.mxu0 0.0
    %368 = vmatpush1.msra.mxu0 0.0
    %369 = vmatprep.subr.mxu0 0.0
    %370 = vmatpush1.msra.mxu0 0.0
    %371 = vmatprep.subr.mxu0 0.0
    %372 = vmatpush1.msra.mxu0 0.0
    %373 = vmatprep.subr.mxu0 0.0
    %374 = vmatpush1.msra.mxu0 0.0
    %375 = vmatprep.subr.mxu0 0.0
    %v376 = vand.u32 %v30, 4294901760
    %377 = vmatpush1.msra.mxu0 %v376
    %378 = vmatprep.subr.mxu0 0.0
    %v379 = vand.u32 %v29, 4294901760
    %380 = vmatpush1.msra.mxu0 %v379
    %381 = vmatprep.subr.mxu0 0.0
    %382 = vmatpush2.msra.mxu0 0.0
    %383 = vmatprep.subr.mxu0 0.0
    %384 = vmatpush2.msra.mxu0 0.0
    %385 = vmatprep.subr.mxu0 0.0
    %386 = vmatpush2.msra.mxu0 0.0
    %387 = vmatprep.subr.mxu0 0.0
    %388 = vmatpush2.msra.mxu0 0.0
    %389 = vmatprep.subr.mxu0 0.0
    %390 = vmatpush2.msra.mxu0 0.0
    %391 = vmatprep.subr.mxu0 0.0
    %392 = vmatpush2.msra.mxu0 0.0
    %393 = vmatprep.subr.mxu0 0.0
    %394 = vmatpush2.msra.mxu0 0.0
    %395 = vmatprep.subr.mxu0 0.0
    %396 = vmatpush2.msra.mxu0 0.0
    %397 = vmatprep.subr.mxu0 0.0
    %398 = vmatpush2.msra.mxu0 0.0
    %399 = vmatprep.subr.mxu0 0.0
    %400 = vmatpush2.msra.mxu0 0.0
    %401 = vmatprep.subr.mxu0 0.0
    %402 = vmatpush2.msra.mxu0 0.0
    %403 = vmatprep.subr.mxu0 0.0
    %404 = vmatpush2.msra.mxu0 0.0
    %405 = vmatprep.subr.mxu0 0.0
    %406 = vmatpush2.msra.mxu0 0.0
    %407 = vmatprep.subr.mxu0 0.0
    %408 = vmatpush2.msra.mxu0 0.0
    %409 = vmatprep.subr.mxu0 0.0
    %410 = vmatpush2.msra.mxu0 0.0
    %411 = vmatprep.subr.mxu0 0.0
    %412 = vmatpush2.msra.mxu0 0.0
    %413 = vmatprep.mubr.f32.mxu0 0.0
    %v414 = vand.u32 %v33, 4294901760
    %v415 = vsub.f32 %v33, %v414
    %v416 = vand.u32 %v415, 4294901760
    %417 = vmatmul.mubr.f32.gmra.mxu0 %v416
    %v418 = vpop.f32.mrf.mxu0
    %v419 = vadd.f32 %v323, %v418
    %v420 = vpop.f32.mrf.mxu0
    %421 = vmatprep.mubr.f32.mxu0 0.0
    %v422 = vand.u32 %v36, 4294901760
    %v423 = vsub.f32 %v36, %v422
    %v424 = vand.u32 %v423, 4294901760
    %425 = vmatmul.mubr.f32.gmra.mxu0 %v424
    %v426 = vpop.f32.mrf.mxu0
    %v427 = vadd.f32 %v330, %v426
    %v428 = vpop.f32.mrf.mxu0
    %429 = vmatprep.mubr.f32.mxu0 0.0
    %v430 = vand.u32 %v39, 4294901760
    %v431 = vsub.f32 %v39, %v430
    %v432 = vand.u32 %v431, 4294901760
    %433 = vmatmul.mubr.f32.gmra.mxu0 %v432
    %v434 = vpop.f32.mrf.mxu0
    %v435 = vadd.f32 %v337, %v434
    %v436 = vpop.f32.mrf.mxu0
    %437 = vmatprep.mubr.f32.mxu0 0.0
    %v438 = vand.u32 %v42, 4294901760
    %v439 = vsub.f32 %v42, %v438
    %v440 = vand.u32 %v439, 4294901760
    %441 = vmatmul.mubr.f32.gmra.mxu0 %v440
    %v442 = vpop.f32.mrf.mxu0
    %v443 = vadd.f32 %v344, %v442
    %v444 = vpop.f32.mrf.mxu0
    %445 = vdwg.mxu0
    %446 = vmatprep.subr.mxu0 0.0
    %447 = vmatpush1.msra.mxu0 0.0
    %448 = vmatprep.subr.mxu0 0.0
    %449 = vmatpush1.msra.mxu0 0.0
    %450 = vmatprep.subr.mxu0 0.0
    %451 = vmatpush1.msra.mxu0 0.0
    %452 = vmatprep.subr.mxu0 0.0
    %453 = vmatpush1.msra.mxu0 0.0
    %454 = vmatprep.subr.mxu0 0.0
    %455 = vmatpush1.msra.mxu0 0.0
    %456 = vmatprep.subr.mxu0 0.0
    %457 = vmatpush1.msra.mxu0 0.0
    %458 = vmatprep.subr.mxu0 0.0
    %459 = vmatpush1.msra.mxu0 0.0
    %460 = vmatprep.subr.mxu0 0.0
    %461 = vmatpush1.msra.mxu0 0.0
    %462 = vmatprep.subr.mxu0 0.0
    %463 = vmatpush1.msra.mxu0 0.0
    %464 = vmatprep.subr.mxu0 0.0
    %465 = vmatpush1.msra.mxu0 0.0
    %466 = vmatprep.subr.mxu0 0.0
    %467 = vmatpush1.msra.mxu0 0.0
    %468 = vmatprep.subr.mxu0 0.0
    %469 = vmatpush1.msra.mxu0 0.0
    %470 = vmatprep.subr.mxu0 0.0
    %471 = vmatpush1.msra.mxu0 0.0
    %472 = vmatprep.subr.mxu0 0.0
    %473 = vmatpush1.msra.mxu0 0.0
    %474 = vmatprep.subr.mxu0 0.0
    %v475 = vand.u32 %v30, 4294901760
    %v476 = vsub.f32 %v30, %v475
    %v477 = vand.u32 %v476, 4294901760
    %478 = vmatpush1.msra.mxu0 %v477
    %479 = vmatprep.subr.mxu0 0.0
    %v480 = vand.u32 %v29, 4294901760
    %v481 = vsub.f32 %v29, %v480
    %v482 = vand.u32 %v481, 4294901760
    %483 = vmatpush1.msra.mxu0 %v482
    %484 = vmatprep.subr.mxu0 0.0
    %485 = vmatpush2.msra.mxu0 0.0
    %486 = vmatprep.subr.mxu0 0.0
    %487 = vmatpush2.msra.mxu0 0.0
    %488 = vmatprep.subr.mxu0 0.0
    %489 = vmatpush2.msra.mxu0 0.0
    %490 = vmatprep.subr.mxu0 0.0
    %491 = vmatpush2.msra.mxu0 0.0
    %492 = vmatprep.subr.mxu0 0.0
    %493 = vmatpush2.msra.mxu0 0.0
    %494 = vmatprep.subr.mxu0 0.0
    %495 = vmatpush2.msra.mxu0 0.0
    %496 = vmatprep.subr.mxu0 0.0
    %497 = vmatpush2.msra.mxu0 0.0
    %498 = vmatprep.subr.mxu0 0.0
    %499 = vmatpush2.msra.mxu0 0.0
    %500 = vmatprep.subr.mxu0 0.0
    %501 = vmatpush2.msra.mxu0 0.0
    %502 = vmatprep.subr.mxu0 0.0
    %503 = vmatpush2.msra.mxu0 0.0
    %504 = vmatprep.subr.mxu0 0.0
    %505 = vmatpush2.msra.mxu0 0.0
    %506 = vmatprep.subr.mxu0 0.0
    %507 = vmatpush2.msra.mxu0 0.0
    %508 = vmatprep.subr.mxu0 0.0
    %509 = vmatpush2.msra.mxu0 0.0
    %510 = vmatprep.subr.mxu0 0.0
    %511 = vmatpush2.msra.mxu0 0.0
    %512 = vmatprep.subr.mxu0 0.0
    %513 = vmatpush2.msra.mxu0 0.0
    %514 = vmatprep.subr.mxu0 0.0
    %515 = vmatpush2.msra.mxu0 0.0
    %516 = vmatprep.mubr.f32.mxu0 0.0
    %v517 = vand.u32 %v33, 4294901760
    %518 = vmatmul.mubr.f32.gmra.mxu0 %v517
    %v519 = vpop.f32.mrf.mxu0
    %v520 = vadd.f32 %v419, %v519
    %v521 = vpop.f32.mrf.mxu0
    %522 = vmatprep.mubr.f32.mxu0 0.0
    %v523 = vand.u32 %v36, 4294901760
    %524 = vmatmul.mubr.f32.gmra.mxu0 %v523
    %v525 = vpop.f32.mrf.mxu0
    %v526 = vadd.f32 %v427, %v525
    %v527 = vpop.f32.mrf.mxu0
    %528 = vmatprep.mubr.f32.mxu0 0.0
    %v529 = vand.u32 %v39, 4294901760
    %530 = vmatmul.mubr.f32.gmra.mxu0 %v529
    %v531 = vpop.f32.mrf.mxu0
    %v532 = vadd.f32 %v435, %v531
    %v533 = vpop.f32.mrf.mxu0
    %534 = vmatprep.mubr.f32.mxu0 0.0
    %v535 = vand.u32 %v42, 4294901760
    %536 = vmatmul.mubr.f32.gmra.mxu0 %v535
    %v537 = vpop.f32.mrf.mxu0
    %v538 = vadd.f32 %v443, %v537
    %v539 = vpop.f32.mrf.mxu0
    %540 = vdwg.mxu0
    %541 = vmatprep.subr.mxu0 0.0
    %542 = vmatpush1.msra.mxu0 0.0
    %543 = vmatprep.subr.mxu0 0.0
    %544 = vmatpush1.msra.mxu0 0.0
    %545 = vmatprep.subr.mxu0 0.0
    %546 = vmatpush1.msra.mxu0 0.0
    %547 = vmatprep.subr.mxu0 0.0
    %548 = vmatpush1.msra.mxu0 0.0
    %549 = vmatprep.subr.mxu0 0.0
    %550 = vmatpush1.msra.mxu0 0.0
    %551 = vmatprep.subr.mxu0 0.0
    %552 = vmatpush1.msra.mxu0 0.0
    %553 = vmatprep.subr.mxu0 0.0
    %554 = vmatpush1.msra.mxu0 0.0
    %555 = vmatprep.subr.mxu0 0.0
    %556 = vmatpush1.msra.mxu0 0.0
    %557 = vmatprep.subr.mxu0 0.0
    %558 = vmatpush1.msra.mxu0 0.0
    %559 = vmatprep.subr.mxu0 0.0
    %560 = vmatpush1.msra.mxu0 0.0
    %561 = vmatprep.subr.mxu0 0.0
    %562 = vmatpush1.msra.mxu0 0.0
    %563 = vmatprep.subr.mxu0 0.0
    %564 = vmatpush1.msra.mxu0 0.0
    %565 = vmatprep.subr.mxu0 0.0
    %566 = vmatpush1.msra.mxu0 0.0
    %567 = vmatprep.subr.mxu0 0.0
    %568 = vmatpush1.msra.mxu0 0.0
    %569 = vmatprep.subr.mxu0 0.0
    %v570 = vand.u32 %v30, 4294901760
    %571 = vmatpush1.msra.mxu0 %v570
    %572 = vmatprep.subr.mxu0 0.0
    %v573 = vand.u32 %v29, 4294901760
    %574 = vmatpush1.msra.mxu0 %v573
    %575 = vmatprep.subr.mxu0 0.0
    %576 = vmatpush2.msra.mxu0 0.0
    %577 = vmatprep.subr.mxu0 0.0
    %578 = vmatpush2.msra.mxu0 0.0
    %579 = vmatprep.subr.mxu0 0.0
    %580 = vmatpush2.msra.mxu0 0.0
    %581 = vmatprep.subr.mxu0 0.0
    %582 = vmatpush2.msra.mxu0 0.0
    %583 = vmatprep.subr.mxu0 0.0
    %584 = vmatpush2.msra.mxu0 0.0
    %585 = vmatprep.subr.mxu0 0.0
    %586 = vmatpush2.msra.mxu0 0.0
    %587 = vmatprep.subr.mxu0 0.0
    %588 = vmatpush2.msra.mxu0 0.0
    %589 = vmatprep.subr.mxu0 0.0
    %590 = vmatpush2.msra.mxu0 0.0
    %591 = vmatprep.subr.mxu0 0.0
    %592 = vmatpush2.msra.mxu0 0.0
    %593 = vmatprep.subr.mxu0 0.0
    %594 = vmatpush2.msra.mxu0 0.0
    %595 = vmatprep.subr.mxu0 0.0
    %596 = vmatpush2.msra.mxu0 0.0
    %597 = vmatprep.subr.mxu0 0.0
    %598 = vmatpush2.msra.mxu0 0.0
    %599 = vmatprep.subr.mxu0 0.0
    %600 = vmatpush2.msra.mxu0 0.0
    %601 = vmatprep.subr.mxu0 0.0
    %602 = vmatpush2.msra.mxu0 0.0
    %603 = vmatprep.subr.mxu0 0.0
    %604 = vmatpush2.msra.mxu0 0.0
    %605 = vmatprep.subr.mxu0 0.0
    %606 = vmatpush2.msra.mxu0 0.0
    %607 = vmatprep.mubr.f32.mxu0 0.0
    %v608 = vand.u32 %v33, 4294901760
    %609 = vmatmul.mubr.f32.gmra.mxu0 %v608
    %v610 = vpop.f32.mrf.mxu0
    %v611 = vadd.f32 %v520, %v610
    %v612 = vpop.f32.mrf.mxu0
    %613 = vmatprep.mubr.f32.mxu0 0.0
    %v614 = vand.u32 %v36, 4294901760
    %615 = vmatmul.mubr.f32.gmra.mxu0 %v614
    %v616 = vpop.f32.mrf.mxu0
    %v617 = vadd.f32 %v526, %v616
    %v618 = vpop.f32.mrf.mxu0
    %619 = vmatprep.mubr.f32.mxu0 0.0
    %v620 = vand.u32 %v39, 4294901760
    %621 = vmatmul.mubr.f32.gmra.mxu0 %v620
    %v622 = vpop.f32.mrf.mxu0
    %v623 = vadd.f32 %v532, %v622
    %v624 = vpop.f32.mrf.mxu0
    %625 = vmatprep.mubr.f32.mxu0 0.0
    %v626 = vand.u32 %v42, 4294901760
    %627 = vmatmul.mubr.f32.gmra.mxu0 %v626
    %v628 = vpop.f32.mrf.mxu0
    %v629 = vadd.f32 %v538, %v628
    %v630 = vpop.f32.mrf.mxu0
    %631 = vdwg.mxu0
    %633 = vset.pattern.permute.xlu0 0
    %634 = vperm.xlu0 %633, %v25
    %v635 = vpop.permute.xlu0 %634
    %638 = vset.pattern.permute.xlu0 0
    %639 = vperm.xlu0 %638, %v26
    %v640 = vpop.permute.xlu0 %639
    %v642 = vadd.f32 %v611, %v635
    %v643 = vadd.f32 %v617, %v640
    %644 = vxpose.xlu0.b32.start [1/16] %v27, 128
    %645 = vxpose.xlu0.b32.cont [2/16] %v28, 128
    %646 = vxpose.xlu0.b32.cont [3/16] 0.0, 128
    %647 = vxpose.xlu0.b32.cont [4/16] 0.0, 128
    %648 = vxpose.xlu0.b32.cont [5/16] 0.0, 128
    %649 = vxpose.xlu0.b32.cont [6/16] 0.0, 128
    %650 = vxpose.xlu0.b32.cont [7/16] 0.0, 128
    %651 = vxpose.xlu0.b32.cont [8/16] 0.0, 128
    %652 = vxpose.xlu0.b32.cont [9/16] 0.0, 128
    %653 = vxpose.xlu0.b32.cont [10/16] 0.0, 128
    %654 = vxpose.xlu0.b32.cont [11/16] 0.0, 128
    %655 = vxpose.xlu0.b32.cont [12/16] 0.0, 128
    %656 = vxpose.xlu0.b32.cont [13/16] 0.0, 128
    %657 = vxpose.xlu0.b32.cont [14/16] 0.0, 128
    %658 = vxpose.xlu0.b32.cont [15/16] 0.0, 128
    %659 = vxpose.xlu0.b32.end [16/16] 0.0, 128
    %v660 = vpop.trf.xlu0
    %v661 = vpop.trf.xlu0
    %v662 = vpop.trf.xlu0
    %v663 = vpop.trf.xlu0
    %v664 = vpop.trf.xlu0
    %v665 = vpop.trf.xlu0
    %v666 = vpop.trf.xlu0
    %v667 = vpop.trf.xlu0
    %v668 = vpop.trf.xlu0
    %v669 = vpop.trf.xlu0
    %v670 = vpop.trf.xlu0
    %v671 = vpop.trf.xlu0
    %v672 = vpop.trf.xlu0
    %v673 = vpop.trf.xlu0
    %v674 = vpop.trf.xlu0
    %v675 = vpop.trf.xlu0
    %v677 = vsel %vm31, %v660, 0
    %v680 = vsel %vm31, %v661, 0
    %v683 = vsel %vm31, %v662, 0
    %v686 = vsel %vm31, %v663, 0
    %688 = vmatprep.subr.mxu0 0.0
    %689 = vmatpush1.msra.mxu0 0.0
    %690 = vmatprep.subr.mxu0 0.0
    %691 = vmatpush1.msra.mxu0 0.0
    %692 = vmatprep.subr.mxu0 0.0
    %693 = vmatpush1.msra.mxu0 0.0
    %694 = vmatprep.subr.mxu0 0.0
    %695 = vmatpush1.msra.mxu0 0.0
    %696 = vmatprep.subr.mxu0 0.0
    %697 = vmatpush1.msra.mxu0 0.0
    %698 = vmatprep.subr.mxu0 0.0
    %699 = vmatpush1.msra.mxu0 0.0
    %700 = vmatprep.subr.mxu0 0.0
    %701 = vmatpush1.msra.mxu0 0.0
    %702 = vmatprep.subr.mxu0 0.0
    %703 = vmatpush1.msra.mxu0 0.0
    %704 = vmatprep.subr.mxu0 0.0
    %705 = vmatpush1.msra.mxu0 0.0
    %706 = vmatprep.subr.mxu0 0.0
    %707 = vmatpush1.msra.mxu0 0.0
    %708 = vmatprep.subr.mxu0 0.0
    %709 = vmatpush1.msra.mxu0 0.0
    %710 = vmatprep.subr.mxu0 0.0
    %711 = vmatpush1.msra.mxu0 0.0
    %712 = vmatprep.subr.mxu0 0.0
    %713 = vmatpush1.msra.mxu0 0.0
    %714 = vmatprep.subr.mxu0 0.0
    %715 = vmatpush1.msra.mxu0 0.0
    %716 = vmatprep.subr.mxu0 0.0
    %v717 = vand.u32 %v629, 4294901760
    %718 = vmatpush1.msra.mxu0 %v717
    %719 = vmatprep.subr.mxu0 0.0
    %v720 = vand.u32 %v623, 4294901760
    %721 = vmatpush1.msra.mxu0 %v720
    %722 = vmatprep.subr.mxu0 0.0
    %723 = vmatpush2.msra.mxu0 0.0
    %724 = vmatprep.subr.mxu0 0.0
    %725 = vmatpush2.msra.mxu0 0.0
    %726 = vmatprep.subr.mxu0 0.0
    %727 = vmatpush2.msra.mxu0 0.0
    %728 = vmatprep.subr.mxu0 0.0
    %729 = vmatpush2.msra.mxu0 0.0
    %730 = vmatprep.subr.mxu0 0.0
    %731 = vmatpush2.msra.mxu0 0.0
    %732 = vmatprep.subr.mxu0 0.0
    %733 = vmatpush2.msra.mxu0 0.0
    %734 = vmatprep.subr.mxu0 0.0
    %735 = vmatpush2.msra.mxu0 0.0
    %736 = vmatprep.subr.mxu0 0.0
    %737 = vmatpush2.msra.mxu0 0.0
    %738 = vmatprep.subr.mxu0 0.0
    %739 = vmatpush2.msra.mxu0 0.0
    %740 = vmatprep.subr.mxu0 0.0
    %741 = vmatpush2.msra.mxu0 0.0
    %742 = vmatprep.subr.mxu0 0.0
    %743 = vmatpush2.msra.mxu0 0.0
    %744 = vmatprep.subr.mxu0 0.0
    %745 = vmatpush2.msra.mxu0 0.0
    %746 = vmatprep.subr.mxu0 0.0
    %747 = vmatpush2.msra.mxu0 0.0
    %748 = vmatprep.subr.mxu0 0.0
    %749 = vmatpush2.msra.mxu0 0.0
    %750 = vmatprep.subr.mxu0 0.0
    %751 = vmatpush2.msra.mxu0 0.0
    %752 = vmatprep.subr.mxu0 0.0
    %753 = vmatpush2.msra.mxu0 0.0
    %754 = vmatprep.mubr.f32.mxu0 0.0
    %v755 = vand.u32 %v677, 4294901760
    %v756 = vsub.f32 %v677, %v755
    %v757 = vand.u32 %v756, 4294901760
    %v758 = vsub.f32 %v756, %v757
    %v759 = vand.u32 %v758, 4294901760
    %760 = vmatmul.mubr.f32.gmra.mxu0 %v759
    %v761 = vpop.f32.mrf.mxu0
    %v762 = vadd.f32 0.0, %v761
    %v763 = vpop.f32.mrf.mxu0
    %764 = vmatprep.mubr.f32.mxu0 0.0
    %v765 = vand.u32 %v680, 4294901760
    %v766 = vsub.f32 %v680, %v765
    %v767 = vand.u32 %v766, 4294901760
    %v768 = vsub.f32 %v766, %v767
    %v769 = vand.u32 %v768, 4294901760
    %770 = vmatmul.mubr.f32.gmra.mxu0 %v769
    %v771 = vpop.f32.mrf.mxu0
    %v772 = vadd.f32 0.0, %v771
    %v773 = vpop.f32.mrf.mxu0
    %774 = vmatprep.mubr.f32.mxu0 0.0
    %v775 = vand.u32 %v683, 4294901760
    %v776 = vsub.f32 %v683, %v775
    %v777 = vand.u32 %v776, 4294901760
    %v778 = vsub.f32 %v776, %v777
    %v779 = vand.u32 %v778, 4294901760
    %780 = vmatmul.mubr.f32.gmra.mxu0 %v779
    %v781 = vpop.f32.mrf.mxu0
    %v782 = vadd.f32 0.0, %v781
    %v783 = vpop.f32.mrf.mxu0
    %784 = vmatprep.mubr.f32.mxu0 0.0
    %v785 = vand.u32 %v686, 4294901760
    %v786 = vsub.f32 %v686, %v785
    %v787 = vand.u32 %v786, 4294901760
    %v788 = vsub.f32 %v786, %v787
    %v789 = vand.u32 %v788, 4294901760
    %790 = vmatmul.mubr.f32.gmra.mxu0 %v789
    %v791 = vpop.f32.mrf.mxu0
    %v792 = vadd.f32 0.0, %v791
    %v793 = vpop.f32.mrf.mxu0
    %794 = vdwg.mxu0
    %795 = vmatprep.subr.mxu0 0.0
    %796 = vmatpush1.msra.mxu0 0.0
    %797 = vmatprep.subr.mxu0 0.0
    %798 = vmatpush1.msra.mxu0 0.0
    %799 = vmatprep.subr.mxu0 0.0
    %800 = vmatpush1.msra.mxu0 0.0
    %801 = vmatprep.subr.mxu0 0.0
    %802 = vmatpush1.msra.mxu0 0.0
    %803 = vmatprep.subr.mxu0 0.0
    %804 = vmatpush1.msra.mxu0 0.0
    %805 = vmatprep.subr.mxu0 0.0
    %806 = vmatpush1.msra.mxu0 0.0
    %807 = vmatprep.subr.mxu0 0.0
    %808 = vmatpush1.msra.mxu0 0.0
    %809 = vmatprep.subr.mxu0 0.0
    %810 = vmatpush1.msra.mxu0 0.0
    %811 = vmatprep.subr.mxu0 0.0
    %812 = vmatpush1.msra.mxu0 0.0
    %813 = vmatprep.subr.mxu0 0.0
    %814 = vmatpush1.msra.mxu0 0.0
    %815 = vmatprep.subr.mxu0 0.0
    %816 = vmatpush1.msra.mxu0 0.0
    %817 = vmatprep.subr.mxu0 0.0
    %818 = vmatpush1.msra.mxu0 0.0
    %819 = vmatprep.subr.mxu0 0.0
    %820 = vmatpush1.msra.mxu0 0.0
    %821 = vmatprep.subr.mxu0 0.0
    %822 = vmatpush1.msra.mxu0 0.0
    %823 = vmatprep.subr.mxu0 0.0
    %v824 = vand.u32 %v629, 4294901760
    %v825 = vsub.f32 %v629, %v824
    %v826 = vand.u32 %v825, 4294901760
    %v827 = vsub.f32 %v825, %v826
    %v828 = vand.u32 %v827, 4294901760
    %829 = vmatpush1.msra.mxu0 %v828
    %830 = vmatprep.subr.mxu0 0.0
    %v831 = vand.u32 %v623, 4294901760
    %v832 = vsub.f32 %v623, %v831
    %v833 = vand.u32 %v832, 4294901760
    %v834 = vsub.f32 %v832, %v833
    %v835 = vand.u32 %v834, 4294901760
    %836 = vmatpush1.msra.mxu0 %v835
    %837 = vmatprep.subr.mxu0 0.0
    %838 = vmatpush2.msra.mxu0 0.0
    %839 = vmatprep.subr.mxu0 0.0
    %840 = vmatpush2.msra.mxu0 0.0
    %841 = vmatprep.subr.mxu0 0.0
    %842 = vmatpush2.msra.mxu0 0.0
    %843 = vmatprep.subr.mxu0 0.0
    %844 = vmatpush2.msra.mxu0 0.0
    %845 = vmatprep.subr.mxu0 0.0
    %846 = vmatpush2.msra.mxu0 0.0
    %847 = vmatprep.subr.mxu0 0.0
    %848 = vmatpush2.msra.mxu0 0.0
    %849 = vmatprep.subr.mxu0 0.0
    %850 = vmatpush2.msra.mxu0 0.0
    %851 = vmatprep.subr.mxu0 0.0
    %852 = vmatpush2.msra.mxu0 0.0
    %853 = vmatprep.subr.mxu0 0.0
    %854 = vmatpush2.msra.mxu0 0.0
    %855 = vmatprep.subr.mxu0 0.0
    %856 = vmatpush2.msra.mxu0 0.0
    %857 = vmatprep.subr.mxu0 0.0
    %858 = vmatpush2.msra.mxu0 0.0
    %859 = vmatprep.subr.mxu0 0.0
    %860 = vmatpush2.msra.mxu0 0.0
    %861 = vmatprep.subr.mxu0 0.0
    %862 = vmatpush2.msra.mxu0 0.0
    %863 = vmatprep.subr.mxu0 0.0
    %864 = vmatpush2.msra.mxu0 0.0
    %865 = vmatprep.subr.mxu0 0.0
    %866 = vmatpush2.msra.mxu0 0.0
    %867 = vmatprep.subr.mxu0 0.0
    %868 = vmatpush2.msra.mxu0 0.0
    %869 = vmatprep.mubr.f32.mxu0 0.0
    %v870 = vand.u32 %v677, 4294901760
    %871 = vmatmul.mubr.f32.gmra.mxu0 %v870
    %v872 = vpop.f32.mrf.mxu0
    %v873 = vadd.f32 %v762, %v872
    %v874 = vpop.f32.mrf.mxu0
    %875 = vmatprep.mubr.f32.mxu0 0.0
    %v876 = vand.u32 %v680, 4294901760
    %877 = vmatmul.mubr.f32.gmra.mxu0 %v876
    %v878 = vpop.f32.mrf.mxu0
    %v879 = vadd.f32 %v772, %v878
    %v880 = vpop.f32.mrf.mxu0
    %881 = vmatprep.mubr.f32.mxu0 0.0
    %v882 = vand.u32 %v683, 4294901760
    %883 = vmatmul.mubr.f32.gmra.mxu0 %v882
    %v884 = vpop.f32.mrf.mxu0
    %v885 = vadd.f32 %v782, %v884
    %v886 = vpop.f32.mrf.mxu0
    %887 = vmatprep.mubr.f32.mxu0 0.0
    %v888 = vand.u32 %v686, 4294901760
    %889 = vmatmul.mubr.f32.gmra.mxu0 %v888
    %v890 = vpop.f32.mrf.mxu0
    %v891 = vadd.f32 %v792, %v890
    %v892 = vpop.f32.mrf.mxu0
    %893 = vdwg.mxu0
    %894 = vmatprep.subr.mxu0 0.0
    %895 = vmatpush1.msra.mxu0 0.0
    %896 = vmatprep.subr.mxu0 0.0
    %897 = vmatpush1.msra.mxu0 0.0
    %898 = vmatprep.subr.mxu0 0.0
    %899 = vmatpush1.msra.mxu0 0.0
    %900 = vmatprep.subr.mxu0 0.0
    %901 = vmatpush1.msra.mxu0 0.0
    %902 = vmatprep.subr.mxu0 0.0
    %903 = vmatpush1.msra.mxu0 0.0
    %904 = vmatprep.subr.mxu0 0.0
    %905 = vmatpush1.msra.mxu0 0.0
    %906 = vmatprep.subr.mxu0 0.0
    %907 = vmatpush1.msra.mxu0 0.0
    %908 = vmatprep.subr.mxu0 0.0
    %909 = vmatpush1.msra.mxu0 0.0
    %910 = vmatprep.subr.mxu0 0.0
    %911 = vmatpush1.msra.mxu0 0.0
    %912 = vmatprep.subr.mxu0 0.0
    %913 = vmatpush1.msra.mxu0 0.0
    %914 = vmatprep.subr.mxu0 0.0
    %915 = vmatpush1.msra.mxu0 0.0
    %916 = vmatprep.subr.mxu0 0.0
    %917 = vmatpush1.msra.mxu0 0.0
    %918 = vmatprep.subr.mxu0 0.0
    %919 = vmatpush1.msra.mxu0 0.0
    %920 = vmatprep.subr.mxu0 0.0
    %921 = vmatpush1.msra.mxu0 0.0
    %922 = vmatprep.subr.mxu0 0.0
    %v923 = vand.u32 %v629, 4294901760
    %v924 = vsub.f32 %v629, %v923
    %925 = vmatpush1.msra.mxu0 %v924
    %926 = vmatprep.subr.mxu0 0.0
    %v927 = vand.u32 %v623, 4294901760
    %v928 = vsub.f32 %v623, %v927
    %929 = vmatpush1.msra.mxu0 %v928
    %930 = vmatprep.subr.mxu0 0.0
    %931 = vmatpush2.msra.mxu0 0.0
    %932 = vmatprep.subr.mxu0 0.0
    %933 = vmatpush2.msra.mxu0 0.0
    %934 = vmatprep.subr.mxu0 0.0
    %935 = vmatpush2.msra.mxu0 0.0
    %936 = vmatprep.subr.mxu0 0.0
    %937 = vmatpush2.msra.mxu0 0.0
    %938 = vmatprep.subr.mxu0 0.0
    %939 = vmatpush2.msra.mxu0 0.0
    %940 = vmatprep.subr.mxu0 0.0
    %941 = vmatpush2.msra.mxu0 0.0
    %942 = vmatprep.subr.mxu0 0.0
    %943 = vmatpush2.msra.mxu0 0.0
    %944 = vmatprep.subr.mxu0 0.0
    %945 = vmatpush2.msra.mxu0 0.0
    %946 = vmatprep.subr.mxu0 0.0
    %947 = vmatpush2.msra.mxu0 0.0
    %948 = vmatprep.subr.mxu0 0.0
    %949 = vmatpush2.msra.mxu0 0.0
    %950 = vmatprep.subr.mxu0 0.0
    %951 = vmatpush2.msra.mxu0 0.0
    %952 = vmatprep.subr.mxu0 0.0
    %953 = vmatpush2.msra.mxu0 0.0
    %954 = vmatprep.subr.mxu0 0.0
    %955 = vmatpush2.msra.mxu0 0.0
    %956 = vmatprep.subr.mxu0 0.0
    %957 = vmatpush2.msra.mxu0 0.0
    %958 = vmatprep.subr.mxu0 0.0
    %959 = vmatpush2.msra.mxu0 0.0
    %960 = vmatprep.subr.mxu0 0.0
    %961 = vmatpush2.msra.mxu0 0.0
    %962 = vmatprep.mubr.f32.mxu0 0.0
    %v963 = vand.u32 %v677, 4294901760
    %v964 = vsub.f32 %v677, %v963
    %965 = vmatmul.mubr.f32.gmra.mxu0 %v964
    %v966 = vpop.f32.mrf.mxu0
    %v967 = vadd.f32 %v873, %v966
    %v968 = vpop.f32.mrf.mxu0
    %969 = vmatprep.mubr.f32.mxu0 0.0
    %v970 = vand.u32 %v680, 4294901760
    %v971 = vsub.f32 %v680, %v970
    %972 = vmatmul.mubr.f32.gmra.mxu0 %v971
    %v973 = vpop.f32.mrf.mxu0
    %v974 = vadd.f32 %v879, %v973
    %v975 = vpop.f32.mrf.mxu0
    %976 = vmatprep.mubr.f32.mxu0 0.0
    %v977 = vand.u32 %v683, 4294901760
    %v978 = vsub.f32 %v683, %v977
    %979 = vmatmul.mubr.f32.gmra.mxu0 %v978
    %v980 = vpop.f32.mrf.mxu0
    %v981 = vadd.f32 %v885, %v980
    %v982 = vpop.f32.mrf.mxu0
    %983 = vmatprep.mubr.f32.mxu0 0.0
    %v984 = vand.u32 %v686, 4294901760
    %v985 = vsub.f32 %v686, %v984
    %986 = vmatmul.mubr.f32.gmra.mxu0 %v985
    %v987 = vpop.f32.mrf.mxu0
    %v988 = vadd.f32 %v891, %v987
    %v989 = vpop.f32.mrf.mxu0
    %990 = vdwg.mxu0
    %991 = vmatprep.subr.mxu0 0.0
    %992 = vmatpush1.msra.mxu0 0.0
    %993 = vmatprep.subr.mxu0 0.0
    %994 = vmatpush1.msra.mxu0 0.0
    %995 = vmatprep.subr.mxu0 0.0
    %996 = vmatpush1.msra.mxu0 0.0
    %997 = vmatprep.subr.mxu0 0.0
    %998 = vmatpush1.msra.mxu0 0.0
    %999 = vmatprep.subr.mxu0 0.0
    %1000 = vmatpush1.msra.mxu0 0.0
    %1001 = vmatprep.subr.mxu0 0.0
    %1002 = vmatpush1.msra.mxu0 0.0
    %1003 = vmatprep.subr.mxu0 0.0
    %1004 = vmatpush1.msra.mxu0 0.0
    %1005 = vmatprep.subr.mxu0 0.0
    %1006 = vmatpush1.msra.mxu0 0.0
    %1007 = vmatprep.subr.mxu0 0.0
    %1008 = vmatpush1.msra.mxu0 0.0
    %1009 = vmatprep.subr.mxu0 0.0
    %1010 = vmatpush1.msra.mxu0 0.0
    %1011 = vmatprep.subr.mxu0 0.0
    %1012 = vmatpush1.msra.mxu0 0.0
    %1013 = vmatprep.subr.mxu0 0.0
    %1014 = vmatpush1.msra.mxu0 0.0
    %1015 = vmatprep.subr.mxu0 0.0
    %1016 = vmatpush1.msra.mxu0 0.0
    %1017 = vmatprep.subr.mxu0 0.0
    %1018 = vmatpush1.msra.mxu0 0.0
    %1019 = vmatprep.subr.mxu0 0.0
    %v1020 = vand.u32 %v629, 4294901760
    %1021 = vmatpush1.msra.mxu0 %v1020
    %1022 = vmatprep.subr.mxu0 0.0
    %v1023 = vand.u32 %v623, 4294901760
    %1024 = vmatpush1.msra.mxu0 %v1023
    %1025 = vmatprep.subr.mxu0 0.0
    %1026 = vmatpush2.msra.mxu0 0.0
    %1027 = vmatprep.subr.mxu0 0.0
    %1028 = vmatpush2.msra.mxu0 0.0
    %1029 = vmatprep.subr.mxu0 0.0
    %1030 = vmatpush2.msra.mxu0 0.0
    %1031 = vmatprep.subr.mxu0 0.0
    %1032 = vmatpush2.msra.mxu0 0.0
    %1033 = vmatprep.subr.mxu0 0.0
    %1034 = vmatpush2.msra.mxu0 0.0
    %1035 = vmatprep.subr.mxu0 0.0
    %1036 = vmatpush2.msra.mxu0 0.0
    %1037 = vmatprep.subr.mxu0 0.0
    %1038 = vmatpush2.msra.mxu0 0.0
    %1039 = vmatprep.subr.mxu0 0.0
    %1040 = vmatpush2.msra.mxu0 0.0
    %1041 = vmatprep.subr.mxu0 0.0
    %1042 = vmatpush2.msra.mxu0 0.0
    %1043 = vmatprep.subr.mxu0 0.0
    %1044 = vmatpush2.msra.mxu0 0.0
    %1045 = vmatprep.subr.mxu0 0.0
    %1046 = vmatpush2.msra.mxu0 0.0
    %1047 = vmatprep.subr.mxu0 0.0
    %1048 = vmatpush2.msra.mxu0 0.0
    %1049 = vmatprep.subr.mxu0 0.0
    %1050 = vmatpush2.msra.mxu0 0.0
    %1051 = vmatprep.subr.mxu0 0.0
    %1052 = vmatpush2.msra.mxu0 0.0
    %1053 = vmatprep.subr.mxu0 0.0
    %1054 = vmatpush2.msra.mxu0 0.0
    %1055 = vmatprep.subr.mxu0 0.0
    %1056 = vmatpush2.msra.mxu0 0.0
    %1057 = vmatprep.mubr.f32.mxu0 0.0
    %v1058 = vand.u32 %v677, 4294901760
    %v1059 = vsub.f32 %v677, %v1058
    %v1060 = vand.u32 %v1059, 4294901760
    %1061 = vmatmul.mubr.f32.gmra.mxu0 %v1060
    %v1062 = vpop.f32.mrf.mxu0
    %v1063 = vadd.f32 %v967, %v1062
    %v1064 = vpop.f32.mrf.mxu0
    %1065 = vmatprep.mubr.f32.mxu0 0.0
    %v1066 = vand.u32 %v680, 4294901760
    %v1067 = vsub.f32 %v680, %v1066
    %v1068 = vand.u32 %v1067, 4294901760
    %1069 = vmatmul.mubr.f32.gmra.mxu0 %v1068
    %v1070 = vpop.f32.mrf.mxu0
    %v1071 = vadd.f32 %v974, %v1070
    %v1072 = vpop.f32.mrf.mxu0
    %1073 = vmatprep.mubr.f32.mxu0 0.0
    %v1074 = vand.u32 %v683, 4294901760
    %v1075 = vsub.f32 %v683, %v1074
    %v1076 = vand.u32 %v1075, 4294901760
    %1077 = vmatmul.mubr.f32.gmra.mxu0 %v1076
    %v1078 = vpop.f32.mrf.mxu0
    %v1079 = vadd.f32 %v981, %v1078
    %v1080 = vpop.f32.mrf.mxu0
    %1081 = vmatprep.mubr.f32.mxu0 0.0
    %v1082 = vand.u32 %v686, 4294901760
    %v1083 = vsub.f32 %v686, %v1082
    %v1084 = vand.u32 %v1083, 4294901760
    %1085 = vmatmul.mubr.f32.gmra.mxu0 %v1084
    %v1086 = vpop.f32.mrf.mxu0
    %v1087 = vadd.f32 %v988, %v1086
    %v1088 = vpop.f32.mrf.mxu0
    %1089 = vdwg.mxu0
    %1090 = vmatprep.subr.mxu0 0.0
    %1091 = vmatpush1.msra.mxu0 0.0
    %1092 = vmatprep.subr.mxu0 0.0
    %1093 = vmatpush1.msra.mxu0 0.0
    %1094 = vmatprep.subr.mxu0 0.0
    %1095 = vmatpush1.msra.mxu0 0.0
    %1096 = vmatprep.subr.mxu0 0.0
    %1097 = vmatpush1.msra.mxu0 0.0
    %1098 = vmatprep.subr.mxu0 0.0
    %1099 = vmatpush1.msra.mxu0 0.0
    %1100 = vmatprep.subr.mxu0 0.0
    %1101 = vmatpush1.msra.mxu0 0.0
    %1102 = vmatprep.subr.mxu0 0.0
    %1103 = vmatpush1.msra.mxu0 0.0
    %1104 = vmatprep.subr.mxu0 0.0
    %1105 = vmatpush1.msra.mxu0 0.0
    %1106 = vmatprep.subr.mxu0 0.0
    %1107 = vmatpush1.msra.mxu0 0.0
    %1108 = vmatprep.subr.mxu0 0.0
    %1109 = vmatpush1.msra.mxu0 0.0
    %1110 = vmatprep.subr.mxu0 0.0
    %1111 = vmatpush1.msra.mxu0 0.0
    %1112 = vmatprep.subr.mxu0 0.0
    %1113 = vmatpush1.msra.mxu0 0.0
    %1114 = vmatprep.subr.mxu0 0.0
    %1115 = vmatpush1.msra.mxu0 0.0
    %1116 = vmatprep.subr.mxu0 0.0
    %1117 = vmatpush1.msra.mxu0 0.0
    %1118 = vmatprep.subr.mxu0 0.0
    %v1119 = vand.u32 %v629, 4294901760
    %v1120 = vsub.f32 %v629, %v1119
    %v1121 = vand.u32 %v1120, 4294901760
    %1122 = vmatpush1.msra.mxu0 %v1121
    %1123 = vmatprep.subr.mxu0 0.0
    %v1124 = vand.u32 %v623, 4294901760
    %v1125 = vsub.f32 %v623, %v1124
    %v1126 = vand.u32 %v1125, 4294901760
    %1127 = vmatpush1.msra.mxu0 %v1126
    %1128 = vmatprep.subr.mxu0 0.0
    %1129 = vmatpush2.msra.mxu0 0.0
    %1130 = vmatprep.subr.mxu0 0.0
    %1131 = vmatpush2.msra.mxu0 0.0
    %1132 = vmatprep.subr.mxu0 0.0
    %1133 = vmatpush2.msra.mxu0 0.0
    %1134 = vmatprep.subr.mxu0 0.0
    %1135 = vmatpush2.msra.mxu0 0.0
    %1136 = vmatprep.subr.mxu0 0.0
    %1137 = vmatpush2.msra.mxu0 0.0
    %1138 = vmatprep.subr.mxu0 0.0
    %1139 = vmatpush2.msra.mxu0 0.0
    %1140 = vmatprep.subr.mxu0 0.0
    %1141 = vmatpush2.msra.mxu0 0.0
    %1142 = vmatprep.subr.mxu0 0.0
    %1143 = vmatpush2.msra.mxu0 0.0
    %1144 = vmatprep.subr.mxu0 0.0
    %1145 = vmatpush2.msra.mxu0 0.0
    %1146 = vmatprep.subr.mxu0 0.0
    %1147 = vmatpush2.msra.mxu0 0.0
    %1148 = vmatprep.subr.mxu0 0.0
    %1149 = vmatpush2.msra.mxu0 0.0
    %1150 = vmatprep.subr.mxu0 0.0
    %1151 = vmatpush2.msra.mxu0 0.0
    %1152 = vmatprep.subr.mxu0 0.0
    %1153 = vmatpush2.msra.mxu0 0.0
    %1154 = vmatprep.subr.mxu0 0.0
    %1155 = vmatpush2.msra.mxu0 0.0
    %1156 = vmatprep.subr.mxu0 0.0
    %1157 = vmatpush2.msra.mxu0 0.0
    %1158 = vmatprep.subr.mxu0 0.0
    %1159 = vmatpush2.msra.mxu0 0.0
    %1160 = vmatprep.mubr.f32.mxu0 0.0
    %v1161 = vand.u32 %v677, 4294901760
    %1162 = vmatmul.mubr.f32.gmra.mxu0 %v1161
    %v1163 = vpop.f32.mrf.mxu0
    %v1164 = vadd.f32 %v1063, %v1163
    %v1165 = vpop.f32.mrf.mxu0
    %1166 = vmatprep.mubr.f32.mxu0 0.0
    %v1167 = vand.u32 %v680, 4294901760
    %1168 = vmatmul.mubr.f32.gmra.mxu0 %v1167
    %v1169 = vpop.f32.mrf.mxu0
    %v1170 = vadd.f32 %v1071, %v1169
    %v1171 = vpop.f32.mrf.mxu0
    %1172 = vmatprep.mubr.f32.mxu0 0.0
    %v1173 = vand.u32 %v683, 4294901760
    %1174 = vmatmul.mubr.f32.gmra.mxu0 %v1173
    %v1175 = vpop.f32.mrf.mxu0
    %v1176 = vadd.f32 %v1079, %v1175
    %v1177 = vpop.f32.mrf.mxu0
    %1178 = vmatprep.mubr.f32.mxu0 0.0
    %v1179 = vand.u32 %v686, 4294901760
    %1180 = vmatmul.mubr.f32.gmra.mxu0 %v1179
    %v1181 = vpop.f32.mrf.mxu0
    %v1182 = vadd.f32 %v1087, %v1181
    %v1183 = vpop.f32.mrf.mxu0
    %1184 = vdwg.mxu0
    %1185 = vmatprep.subr.mxu0 0.0
    %1186 = vmatpush1.msra.mxu0 0.0
    %1187 = vmatprep.subr.mxu0 0.0
    %1188 = vmatpush1.msra.mxu0 0.0
    %1189 = vmatprep.subr.mxu0 0.0
    %1190 = vmatpush1.msra.mxu0 0.0
    %1191 = vmatprep.subr.mxu0 0.0
    %1192 = vmatpush1.msra.mxu0 0.0
    %1193 = vmatprep.subr.mxu0 0.0
    %1194 = vmatpush1.msra.mxu0 0.0
    %1195 = vmatprep.subr.mxu0 0.0
    %1196 = vmatpush1.msra.mxu0 0.0
    %1197 = vmatprep.subr.mxu0 0.0
    %1198 = vmatpush1.msra.mxu0 0.0
    %1199 = vmatprep.subr.mxu0 0.0
    %1200 = vmatpush1.msra.mxu0 0.0
    %1201 = vmatprep.subr.mxu0 0.0
    %1202 = vmatpush1.msra.mxu0 0.0
    %1203 = vmatprep.subr.mxu0 0.0
    %1204 = vmatpush1.msra.mxu0 0.0
    %1205 = vmatprep.subr.mxu0 0.0
    %1206 = vmatpush1.msra.mxu0 0.0
    %1207 = vmatprep.subr.mxu0 0.0
    %1208 = vmatpush1.msra.mxu0 0.0
    %1209 = vmatprep.subr.mxu0 0.0
    %1210 = vmatpush1.msra.mxu0 0.0
    %1211 = vmatprep.subr.mxu0 0.0
    %1212 = vmatpush1.msra.mxu0 0.0
    %1213 = vmatprep.subr.mxu0 0.0
    %v1214 = vand.u32 %v629, 4294901760
    %1215 = vmatpush1.msra.mxu0 %v1214
    %1216 = vmatprep.subr.mxu0 0.0
    %v1217 = vand.u32 %v623, 4294901760
    %1218 = vmatpush1.msra.mxu0 %v1217
    %1219 = vmatprep.subr.mxu0 0.0
    %1220 = vmatpush2.msra.mxu0 0.0
    %1221 = vmatprep.subr.mxu0 0.0
    %1222 = vmatpush2.msra.mxu0 0.0
    %1223 = vmatprep.subr.mxu0 0.0
    %1224 = vmatpush2.msra.mxu0 0.0
    %1225 = vmatprep.subr.mxu0 0.0
    %1226 = vmatpush2.msra.mxu0 0.0
    %1227 = vmatprep.subr.mxu0 0.0
    %1228 = vmatpush2.msra.mxu0 0.0
    %1229 = vmatprep.subr.mxu0 0.0
    %1230 = vmatpush2.msra.mxu0 0.0
    %1231 = vmatprep.subr.mxu0 0.0
    %1232 = vmatpush2.msra.mxu0 0.0
    %1233 = vmatprep.subr.mxu0 0.0
    %1234 = vmatpush2.msra.mxu0 0.0
    %1235 = vmatprep.subr.mxu0 0.0
    %1236 = vmatpush2.msra.mxu0 0.0
    %1237 = vmatprep.subr.mxu0 0.0
    %1238 = vmatpush2.msra.mxu0 0.0
    %1239 = vmatprep.subr.mxu0 0.0
    %1240 = vmatpush2.msra.mxu0 0.0
    %1241 = vmatprep.subr.mxu0 0.0
    %1242 = vmatpush2.msra.mxu0 0.0
    %1243 = vmatprep.subr.mxu0 0.0
    %1244 = vmatpush2.msra.mxu0 0.0
    %1245 = vmatprep.subr.mxu0 0.0
    %1246 = vmatpush2.msra.mxu0 0.0
    %1247 = vmatprep.subr.mxu0 0.0
    %1248 = vmatpush2.msra.mxu0 0.0
    %1249 = vmatprep.subr.mxu0 0.0
    %1250 = vmatpush2.msra.mxu0 0.0
    %1251 = vmatprep.mubr.f32.mxu0 0.0
    %v1252 = vand.u32 %v677, 4294901760
    %1253 = vmatmul.mubr.f32.gmra.mxu0 %v1252
    %v1254 = vpop.f32.mrf.mxu0
    %v1255 = vadd.f32 %v1164, %v1254
    %v1256 = vpop.f32.mrf.mxu0
    %1257 = vmatprep.mubr.f32.mxu0 0.0
    %v1258 = vand.u32 %v680, 4294901760
    %1259 = vmatmul.mubr.f32.gmra.mxu0 %v1258
    %v1260 = vpop.f32.mrf.mxu0
    %v1261 = vadd.f32 %v1170, %v1260
    %v1262 = vpop.f32.mrf.mxu0
    %1263 = vmatprep.mubr.f32.mxu0 0.0
    %v1264 = vand.u32 %v683, 4294901760
    %1265 = vmatmul.mubr.f32.gmra.mxu0 %v1264
    %v1266 = vpop.f32.mrf.mxu0
    %v1267 = vadd.f32 %v1176, %v1266
    %v1268 = vpop.f32.mrf.mxu0
    %1269 = vmatprep.mubr.f32.mxu0 0.0
    %v1270 = vand.u32 %v686, 4294901760
    %1271 = vmatmul.mubr.f32.gmra.mxu0 %v1270
    %v1272 = vpop.f32.mrf.mxu0
    %v1273 = vadd.f32 %v1182, %v1272
    %v1274 = vpop.f32.mrf.mxu0
    %1275 = vdwg.mxu0
    %vm1276 = vcmask 261120
    %v1278 = vsel %vm1276, 1.0, 0
    %1280 = vmatprep.subr.mxu0 0.0
    %1281 = vmatpush1.msra.mxu0 0.0
    %1282 = vmatprep.subr.mxu0 0.0
    %1283 = vmatpush1.msra.mxu0 0.0
    %1284 = vmatprep.subr.mxu0 0.0
    %1285 = vmatpush1.msra.mxu0 0.0
    %1286 = vmatprep.subr.mxu0 0.0
    %1287 = vmatpush1.msra.mxu0 0.0
    %1288 = vmatprep.subr.mxu0 0.0
    %1289 = vmatpush1.msra.mxu0 0.0
    %1290 = vmatprep.subr.mxu0 0.0
    %1291 = vmatpush1.msra.mxu0 0.0
    %1292 = vmatprep.subr.mxu0 0.0
    %1293 = vmatpush1.msra.mxu0 0.0
    %1294 = vmatprep.subr.mxu0 0.0
    %1295 = vmatpush1.msra.mxu0 0.0
    %1296 = vmatprep.subr.mxu0 0.0
    %1297 = vmatpush1.msra.mxu0 0.0
    %1298 = vmatprep.subr.mxu0 0.0
    %1299 = vmatpush1.msra.mxu0 0.0
    %1300 = vmatprep.subr.mxu0 0.0
    %1301 = vmatpush1.msra.mxu0 0.0
    %1302 = vmatprep.subr.mxu0 0.0
    %1303 = vmatpush1.msra.mxu0 0.0
    %1304 = vmatprep.subr.mxu0 0.0
    %v1305 = vand.u32 %v1273, 4294901760
    %1306 = vmatpush1.msra.mxu0 %v1305
    %1307 = vmatprep.subr.mxu0 0.0
    %v1308 = vand.u32 %v1267, 4294901760
    %1309 = vmatpush1.msra.mxu0 %v1308
    %1310 = vmatprep.subr.mxu0 0.0
    %v1311 = vand.u32 %v1261, 4294901760
    %1312 = vmatpush1.msra.mxu0 %v1311
    %1313 = vmatprep.subr.mxu0 0.0
    %v1314 = vand.u32 %v1255, 4294901760
    %1315 = vmatpush1.msra.mxu0 %v1314
    %1316 = vmatprep.subr.mxu0 0.0
    %1317 = vmatpush2.msra.mxu0 0.0
    %1318 = vmatprep.subr.mxu0 0.0
    %1319 = vmatpush2.msra.mxu0 0.0
    %1320 = vmatprep.subr.mxu0 0.0
    %1321 = vmatpush2.msra.mxu0 0.0
    %1322 = vmatprep.subr.mxu0 0.0
    %1323 = vmatpush2.msra.mxu0 0.0
    %1324 = vmatprep.subr.mxu0 0.0
    %1325 = vmatpush2.msra.mxu0 0.0
    %1326 = vmatprep.subr.mxu0 0.0
    %1327 = vmatpush2.msra.mxu0 0.0
    %1328 = vmatprep.subr.mxu0 0.0
    %1329 = vmatpush2.msra.mxu0 0.0
    %1330 = vmatprep.subr.mxu0 0.0
    %1331 = vmatpush2.msra.mxu0 0.0
    %1332 = vmatprep.subr.mxu0 0.0
    %1333 = vmatpush2.msra.mxu0 0.0
    %1334 = vmatprep.subr.mxu0 0.0
    %1335 = vmatpush2.msra.mxu0 0.0
    %1336 = vmatprep.subr.mxu0 0.0
    %1337 = vmatpush2.msra.mxu0 0.0
    %1338 = vmatprep.subr.mxu0 0.0
    %1339 = vmatpush2.msra.mxu0 0.0
    %1340 = vmatprep.subr.mxu0 0.0
    %1341 = vmatpush2.msra.mxu0 0.0
    %1342 = vmatprep.subr.mxu0 0.0
    %1343 = vmatpush2.msra.mxu0 0.0
    %1344 = vmatprep.subr.mxu0 0.0
    %1345 = vmatpush2.msra.mxu0 0.0
    %1346 = vmatprep.subr.mxu0 0.0
    %1347 = vmatpush2.msra.mxu0 0.0
    %1348 = vmatprep.mubr.f32.mxu0 0.0
    %v1349 = vand.u32 %v1278, 4294901760
    %v1350 = vsub.f32 %v1278, %v1349
    %v1351 = vand.u32 %v1350, 4294901760
    %v1352 = vsub.f32 %v1350, %v1351
    %v1353 = vand.u32 %v1352, 4294901760
    %1354 = vmatmul.mubr.f32.gmra.mxu0 %v1353
    %v1355 = vpop.f32.mrf.mxu0
    %v1356 = vadd.f32 1e-09, %v1355
    %v1357 = vpop.f32.mrf.mxu0
    %1358 = vdwg.mxu0
    %1359 = vmatprep.subr.mxu0 0.0
    %1360 = vmatpush1.msra.mxu0 0.0
    %1361 = vmatprep.subr.mxu0 0.0
    %1362 = vmatpush1.msra.mxu0 0.0
    %1363 = vmatprep.subr.mxu0 0.0
    %1364 = vmatpush1.msra.mxu0 0.0
    %1365 = vmatprep.subr.mxu0 0.0
    %1366 = vmatpush1.msra.mxu0 0.0
    %1367 = vmatprep.subr.mxu0 0.0
    %1368 = vmatpush1.msra.mxu0 0.0
    %1369 = vmatprep.subr.mxu0 0.0
    %1370 = vmatpush1.msra.mxu0 0.0
    %1371 = vmatprep.subr.mxu0 0.0
    %1372 = vmatpush1.msra.mxu0 0.0
    %1373 = vmatprep.subr.mxu0 0.0
    %1374 = vmatpush1.msra.mxu0 0.0
    %1375 = vmatprep.subr.mxu0 0.0
    %1376 = vmatpush1.msra.mxu0 0.0
    %1377 = vmatprep.subr.mxu0 0.0
    %1378 = vmatpush1.msra.mxu0 0.0
    %1379 = vmatprep.subr.mxu0 0.0
    %1380 = vmatpush1.msra.mxu0 0.0
    %1381 = vmatprep.subr.mxu0 0.0
    %1382 = vmatpush1.msra.mxu0 0.0
    %1383 = vmatprep.subr.mxu0 0.0
    %v1384 = vand.u32 %v1273, 4294901760
    %v1385 = vsub.f32 %v1273, %v1384
    %v1386 = vand.u32 %v1385, 4294901760
    %v1387 = vsub.f32 %v1385, %v1386
    %v1388 = vand.u32 %v1387, 4294901760
    %1389 = vmatpush1.msra.mxu0 %v1388
    %1390 = vmatprep.subr.mxu0 0.0
    %v1391 = vand.u32 %v1267, 4294901760
    %v1392 = vsub.f32 %v1267, %v1391
    %v1393 = vand.u32 %v1392, 4294901760
    %v1394 = vsub.f32 %v1392, %v1393
    %v1395 = vand.u32 %v1394, 4294901760
    %1396 = vmatpush1.msra.mxu0 %v1395
    %1397 = vmatprep.subr.mxu0 0.0
    %v1398 = vand.u32 %v1261, 4294901760
    %v1399 = vsub.f32 %v1261, %v1398
    %v1400 = vand.u32 %v1399, 4294901760
    %v1401 = vsub.f32 %v1399, %v1400
    %v1402 = vand.u32 %v1401, 4294901760
    %1403 = vmatpush1.msra.mxu0 %v1402
    %1404 = vmatprep.subr.mxu0 0.0
    %v1405 = vand.u32 %v1255, 4294901760
    %v1406 = vsub.f32 %v1255, %v1405
    %v1407 = vand.u32 %v1406, 4294901760
    %v1408 = vsub.f32 %v1406, %v1407
    %v1409 = vand.u32 %v1408, 4294901760
    %1410 = vmatpush1.msra.mxu0 %v1409
    %1411 = vmatprep.subr.mxu0 0.0
    %1412 = vmatpush2.msra.mxu0 0.0
    %1413 = vmatprep.subr.mxu0 0.0
    %1414 = vmatpush2.msra.mxu0 0.0
    %1415 = vmatprep.subr.mxu0 0.0
    %1416 = vmatpush2.msra.mxu0 0.0
    %1417 = vmatprep.subr.mxu0 0.0
    %1418 = vmatpush2.msra.mxu0 0.0
    %1419 = vmatprep.subr.mxu0 0.0
    %1420 = vmatpush2.msra.mxu0 0.0
    %1421 = vmatprep.subr.mxu0 0.0
    %1422 = vmatpush2.msra.mxu0 0.0
    %1423 = vmatprep.subr.mxu0 0.0
    %1424 = vmatpush2.msra.mxu0 0.0
    %1425 = vmatprep.subr.mxu0 0.0
    %1426 = vmatpush2.msra.mxu0 0.0
    %1427 = vmatprep.subr.mxu0 0.0
    %1428 = vmatpush2.msra.mxu0 0.0
    %1429 = vmatprep.subr.mxu0 0.0
    %1430 = vmatpush2.msra.mxu0 0.0
    %1431 = vmatprep.subr.mxu0 0.0
    %1432 = vmatpush2.msra.mxu0 0.0
    %1433 = vmatprep.subr.mxu0 0.0
    %1434 = vmatpush2.msra.mxu0 0.0
    %1435 = vmatprep.subr.mxu0 0.0
    %1436 = vmatpush2.msra.mxu0 0.0
    %1437 = vmatprep.subr.mxu0 0.0
    %1438 = vmatpush2.msra.mxu0 0.0
    %1439 = vmatprep.subr.mxu0 0.0
    %1440 = vmatpush2.msra.mxu0 0.0
    %1441 = vmatprep.subr.mxu0 0.0
    %1442 = vmatpush2.msra.mxu0 0.0
    %1443 = vmatprep.mubr.f32.mxu0 0.0
    %v1444 = vand.u32 %v1278, 4294901760
    %1445 = vmatmul.mubr.f32.gmra.mxu0 %v1444
    %v1446 = vpop.f32.mrf.mxu0
    %v1447 = vadd.f32 %v1356, %v1446
    %v1448 = vpop.f32.mrf.mxu0
    %1449 = vdwg.mxu0
    %1450 = vmatprep.subr.mxu0 0.0
    %1451 = vmatpush1.msra.mxu0 0.0
    %1452 = vmatprep.subr.mxu0 0.0
    %1453 = vmatpush1.msra.mxu0 0.0
    %1454 = vmatprep.subr.mxu0 0.0
    %1455 = vmatpush1.msra.mxu0 0.0
    %1456 = vmatprep.subr.mxu0 0.0
    %1457 = vmatpush1.msra.mxu0 0.0
    %1458 = vmatprep.subr.mxu0 0.0
    %1459 = vmatpush1.msra.mxu0 0.0
    %1460 = vmatprep.subr.mxu0 0.0
    %1461 = vmatpush1.msra.mxu0 0.0
    %1462 = vmatprep.subr.mxu0 0.0
    %1463 = vmatpush1.msra.mxu0 0.0
    %1464 = vmatprep.subr.mxu0 0.0
    %1465 = vmatpush1.msra.mxu0 0.0
    %1466 = vmatprep.subr.mxu0 0.0
    %1467 = vmatpush1.msra.mxu0 0.0
    %1468 = vmatprep.subr.mxu0 0.0
    %1469 = vmatpush1.msra.mxu0 0.0
    %1470 = vmatprep.subr.mxu0 0.0
    %1471 = vmatpush1.msra.mxu0 0.0
    %1472 = vmatprep.subr.mxu0 0.0
    %1473 = vmatpush1.msra.mxu0 0.0
    %1474 = vmatprep.subr.mxu0 0.0
    %v1475 = vand.u32 %v1273, 4294901760
    %v1476 = vsub.f32 %v1273, %v1475
    %1477 = vmatpush1.msra.mxu0 %v1476
    %1478 = vmatprep.subr.mxu0 0.0
    %v1479 = vand.u32 %v1267, 4294901760
    %v1480 = vsub.f32 %v1267, %v1479
    %1481 = vmatpush1.msra.mxu0 %v1480
    %1482 = vmatprep.subr.mxu0 0.0
    %v1483 = vand.u32 %v1261, 4294901760
    %v1484 = vsub.f32 %v1261, %v1483
    %1485 = vmatpush1.msra.mxu0 %v1484
    %1486 = vmatprep.subr.mxu0 0.0
    %v1487 = vand.u32 %v1255, 4294901760
    %v1488 = vsub.f32 %v1255, %v1487
    %1489 = vmatpush1.msra.mxu0 %v1488
    %1490 = vmatprep.subr.mxu0 0.0
    %1491 = vmatpush2.msra.mxu0 0.0
    %1492 = vmatprep.subr.mxu0 0.0
    %1493 = vmatpush2.msra.mxu0 0.0
    %1494 = vmatprep.subr.mxu0 0.0
    %1495 = vmatpush2.msra.mxu0 0.0
    %1496 = vmatprep.subr.mxu0 0.0
    %1497 = vmatpush2.msra.mxu0 0.0
    %1498 = vmatprep.subr.mxu0 0.0
    %1499 = vmatpush2.msra.mxu0 0.0
    %1500 = vmatprep.subr.mxu0 0.0
    %1501 = vmatpush2.msra.mxu0 0.0
    %1502 = vmatprep.subr.mxu0 0.0
    %1503 = vmatpush2.msra.mxu0 0.0
    %1504 = vmatprep.subr.mxu0 0.0
    %1505 = vmatpush2.msra.mxu0 0.0
    %1506 = vmatprep.subr.mxu0 0.0
    %1507 = vmatpush2.msra.mxu0 0.0
    %1508 = vmatprep.subr.mxu0 0.0
    %1509 = vmatpush2.msra.mxu0 0.0
    %1510 = vmatprep.subr.mxu0 0.0
    %1511 = vmatpush2.msra.mxu0 0.0
    %1512 = vmatprep.subr.mxu0 0.0
    %1513 = vmatpush2.msra.mxu0 0.0
    %1514 = vmatprep.subr.mxu0 0.0
    %1515 = vmatpush2.msra.mxu0 0.0
    %1516 = vmatprep.subr.mxu0 0.0
    %1517 = vmatpush2.msra.mxu0 0.0
    %1518 = vmatprep.subr.mxu0 0.0
    %1519 = vmatpush2.msra.mxu0 0.0
    %1520 = vmatprep.subr.mxu0 0.0
    %1521 = vmatpush2.msra.mxu0 0.0
    %1522 = vmatprep.mubr.f32.mxu0 0.0
    %v1523 = vand.u32 %v1278, 4294901760
    %v1524 = vsub.f32 %v1278, %v1523
    %1525 = vmatmul.mubr.f32.gmra.mxu0 %v1524
    %v1526 = vpop.f32.mrf.mxu0
    %v1527 = vadd.f32 %v1447, %v1526
    %v1528 = vpop.f32.mrf.mxu0
    %1529 = vdwg.mxu0
    %1530 = vmatprep.subr.mxu0 0.0
    %1531 = vmatpush1.msra.mxu0 0.0
    %1532 = vmatprep.subr.mxu0 0.0
    %1533 = vmatpush1.msra.mxu0 0.0
    %1534 = vmatprep.subr.mxu0 0.0
    %1535 = vmatpush1.msra.mxu0 0.0
    %1536 = vmatprep.subr.mxu0 0.0
    %1537 = vmatpush1.msra.mxu0 0.0
    %1538 = vmatprep.subr.mxu0 0.0
    %1539 = vmatpush1.msra.mxu0 0.0
    %1540 = vmatprep.subr.mxu0 0.0
    %1541 = vmatpush1.msra.mxu0 0.0
    %1542 = vmatprep.subr.mxu0 0.0
    %1543 = vmatpush1.msra.mxu0 0.0
    %1544 = vmatprep.subr.mxu0 0.0
    %1545 = vmatpush1.msra.mxu0 0.0
    %1546 = vmatprep.subr.mxu0 0.0
    %1547 = vmatpush1.msra.mxu0 0.0
    %1548 = vmatprep.subr.mxu0 0.0
    %1549 = vmatpush1.msra.mxu0 0.0
    %1550 = vmatprep.subr.mxu0 0.0
    %1551 = vmatpush1.msra.mxu0 0.0
    %1552 = vmatprep.subr.mxu0 0.0
    %1553 = vmatpush1.msra.mxu0 0.0
    %1554 = vmatprep.subr.mxu0 0.0
    %v1555 = vand.u32 %v1273, 4294901760
    %1556 = vmatpush1.msra.mxu0 %v1555
    %1557 = vmatprep.subr.mxu0 0.0
    %v1558 = vand.u32 %v1267, 4294901760
    %1559 = vmatpush1.msra.mxu0 %v1558
    %1560 = vmatprep.subr.mxu0 0.0
    %v1561 = vand.u32 %v1261, 4294901760
    %1562 = vmatpush1.msra.mxu0 %v1561
    %1563 = vmatprep.subr.mxu0 0.0
    %v1564 = vand.u32 %v1255, 4294901760
    %1565 = vmatpush1.msra.mxu0 %v1564
    %1566 = vmatprep.subr.mxu0 0.0
    %1567 = vmatpush2.msra.mxu0 0.0
    %1568 = vmatprep.subr.mxu0 0.0
    %1569 = vmatpush2.msra.mxu0 0.0
    %1570 = vmatprep.subr.mxu0 0.0
    %1571 = vmatpush2.msra.mxu0 0.0
    %1572 = vmatprep.subr.mxu0 0.0
    %1573 = vmatpush2.msra.mxu0 0.0
    %1574 = vmatprep.subr.mxu0 0.0
    %1575 = vmatpush2.msra.mxu0 0.0
    %1576 = vmatprep.subr.mxu0 0.0
    %1577 = vmatpush2.msra.mxu0 0.0
    %1578 = vmatprep.subr.mxu0 0.0
    %1579 = vmatpush2.msra.mxu0 0.0
    %1580 = vmatprep.subr.mxu0 0.0
    %1581 = vmatpush2.msra.mxu0 0.0
    %1582 = vmatprep.subr.mxu0 0.0
    %1583 = vmatpush2.msra.mxu0 0.0
    %1584 = vmatprep.subr.mxu0 0.0
    %1585 = vmatpush2.msra.mxu0 0.0
    %1586 = vmatprep.subr.mxu0 0.0
    %1587 = vmatpush2.msra.mxu0 0.0
    %1588 = vmatprep.subr.mxu0 0.0
    %1589 = vmatpush2.msra.mxu0 0.0
    %1590 = vmatprep.subr.mxu0 0.0
    %1591 = vmatpush2.msra.mxu0 0.0
    %1592 = vmatprep.subr.mxu0 0.0
    %1593 = vmatpush2.msra.mxu0 0.0
    %1594 = vmatprep.subr.mxu0 0.0
    %1595 = vmatpush2.msra.mxu0 0.0
    %1596 = vmatprep.subr.mxu0 0.0
    %1597 = vmatpush2.msra.mxu0 0.0
    %1598 = vmatprep.mubr.f32.mxu0 0.0
    %v1599 = vand.u32 %v1278, 4294901760
    %v1600 = vsub.f32 %v1278, %v1599
    %v1601 = vand.u32 %v1600, 4294901760
    %1602 = vmatmul.mubr.f32.gmra.mxu0 %v1601
    %v1603 = vpop.f32.mrf.mxu0
    %v1604 = vadd.f32 %v1527, %v1603
    %v1605 = vpop.f32.mrf.mxu0
    %1606 = vdwg.mxu0
    %1607 = vmatprep.subr.mxu0 0.0
    %1608 = vmatpush1.msra.mxu0 0.0
    %1609 = vmatprep.subr.mxu0 0.0
    %1610 = vmatpush1.msra.mxu0 0.0
    %1611 = vmatprep.subr.mxu0 0.0
    %1612 = vmatpush1.msra.mxu0 0.0
    %1613 = vmatprep.subr.mxu0 0.0
    %1614 = vmatpush1.msra.mxu0 0.0
    %1615 = vmatprep.subr.mxu0 0.0
    %1616 = vmatpush1.msra.mxu0 0.0
    %1617 = vmatprep.subr.mxu0 0.0
    %1618 = vmatpush1.msra.mxu0 0.0
    %1619 = vmatprep.subr.mxu0 0.0
    %1620 = vmatpush1.msra.mxu0 0.0
    %1621 = vmatprep.subr.mxu0 0.0
    %1622 = vmatpush1.msra.mxu0 0.0
    %1623 = vmatprep.subr.mxu0 0.0
    %1624 = vmatpush1.msra.mxu0 0.0
    %1625 = vmatprep.subr.mxu0 0.0
    %1626 = vmatpush1.msra.mxu0 0.0
    %1627 = vmatprep.subr.mxu0 0.0
    %1628 = vmatpush1.msra.mxu0 0.0
    %1629 = vmatprep.subr.mxu0 0.0
    %1630 = vmatpush1.msra.mxu0 0.0
    %1631 = vmatprep.subr.mxu0 0.0
    %v1632 = vand.u32 %v1273, 4294901760
    %v1633 = vsub.f32 %v1273, %v1632
    %v1634 = vand.u32 %v1633, 4294901760
    %1635 = vmatpush1.msra.mxu0 %v1634
    %1636 = vmatprep.subr.mxu0 0.0
    %v1637 = vand.u32 %v1267, 4294901760
    %v1638 = vsub.f32 %v1267, %v1637
    %v1639 = vand.u32 %v1638, 4294901760
    %1640 = vmatpush1.msra.mxu0 %v1639
    %1641 = vmatprep.subr.mxu0 0.0
    %v1642 = vand.u32 %v1261, 4294901760
    %v1643 = vsub.f32 %v1261, %v1642
    %v1644 = vand.u32 %v1643, 4294901760
    %1645 = vmatpush1.msra.mxu0 %v1644
    %1646 = vmatprep.subr.mxu0 0.0
    %v1647 = vand.u32 %v1255, 4294901760
    %v1648 = vsub.f32 %v1255, %v1647
    %v1649 = vand.u32 %v1648, 4294901760
    %1650 = vmatpush1.msra.mxu0 %v1649
    %1651 = vmatprep.subr.mxu0 0.0
    %1652 = vmatpush2.msra.mxu0 0.0
    %1653 = vmatprep.subr.mxu0 0.0
    %1654 = vmatpush2.msra.mxu0 0.0
    %1655 = vmatprep.subr.mxu0 0.0
    %1656 = vmatpush2.msra.mxu0 0.0
    %1657 = vmatprep.subr.mxu0 0.0
    %1658 = vmatpush2.msra.mxu0 0.0
    %1659 = vmatprep.subr.mxu0 0.0
    %1660 = vmatpush2.msra.mxu0 0.0
    %1661 = vmatprep.subr.mxu0 0.0
    %1662 = vmatpush2.msra.mxu0 0.0
    %1663 = vmatprep.subr.mxu0 0.0
    %1664 = vmatpush2.msra.mxu0 0.0
    %1665 = vmatprep.subr.mxu0 0.0
    %1666 = vmatpush2.msra.mxu0 0.0
    %1667 = vmatprep.subr.mxu0 0.0
    %1668 = vmatpush2.msra.mxu0 0.0
    %1669 = vmatprep.subr.mxu0 0.0
    %1670 = vmatpush2.msra.mxu0 0.0
    %1671 = vmatprep.subr.mxu0 0.0
    %1672 = vmatpush2.msra.mxu0 0.0
    %1673 = vmatprep.subr.mxu0 0.0
    %1674 = vmatpush2.msra.mxu0 0.0
    %1675 = vmatprep.subr.mxu0 0.0
    %1676 = vmatpush2.msra.mxu0 0.0
    %1677 = vmatprep.subr.mxu0 0.0
    %1678 = vmatpush2.msra.mxu0 0.0
    %1679 = vmatprep.subr.mxu0 0.0
    %1680 = vmatpush2.msra.mxu0 0.0
    %1681 = vmatprep.subr.mxu0 0.0
    %1682 = vmatpush2.msra.mxu0 0.0
    %1683 = vmatprep.mubr.f32.mxu0 0.0
    %v1684 = vand.u32 %v1278, 4294901760
    %1685 = vmatmul.mubr.f32.gmra.mxu0 %v1684
    %v1686 = vpop.f32.mrf.mxu0
    %v1687 = vadd.f32 %v1604, %v1686
    %v1688 = vpop.f32.mrf.mxu0
    %1689 = vdwg.mxu0
    %1690 = vmatprep.subr.mxu0 0.0
    %1691 = vmatpush1.msra.mxu0 0.0
    %1692 = vmatprep.subr.mxu0 0.0
    %1693 = vmatpush1.msra.mxu0 0.0
    %1694 = vmatprep.subr.mxu0 0.0
    %1695 = vmatpush1.msra.mxu0 0.0
    %1696 = vmatprep.subr.mxu0 0.0
    %1697 = vmatpush1.msra.mxu0 0.0
    %1698 = vmatprep.subr.mxu0 0.0
    %1699 = vmatpush1.msra.mxu0 0.0
    %1700 = vmatprep.subr.mxu0 0.0
    %1701 = vmatpush1.msra.mxu0 0.0
    %1702 = vmatprep.subr.mxu0 0.0
    %1703 = vmatpush1.msra.mxu0 0.0
    %1704 = vmatprep.subr.mxu0 0.0
    %1705 = vmatpush1.msra.mxu0 0.0
    %1706 = vmatprep.subr.mxu0 0.0
    %1707 = vmatpush1.msra.mxu0 0.0
    %1708 = vmatprep.subr.mxu0 0.0
    %1709 = vmatpush1.msra.mxu0 0.0
    %1710 = vmatprep.subr.mxu0 0.0
    %1711 = vmatpush1.msra.mxu0 0.0
    %1712 = vmatprep.subr.mxu0 0.0
    %1713 = vmatpush1.msra.mxu0 0.0
    %1714 = vmatprep.subr.mxu0 0.0
    %v1715 = vand.u32 %v1273, 4294901760
    %1716 = vmatpush1.msra.mxu0 %v1715
    %1717 = vmatprep.subr.mxu0 0.0
    %v1718 = vand.u32 %v1267, 4294901760
    %1719 = vmatpush1.msra.mxu0 %v1718
    %1720 = vmatprep.subr.mxu0 0.0
    %v1721 = vand.u32 %v1261, 4294901760
    %1722 = vmatpush1.msra.mxu0 %v1721
    %1723 = vmatprep.subr.mxu0 0.0
    %v1724 = vand.u32 %v1255, 4294901760
    %1725 = vmatpush1.msra.mxu0 %v1724
    %1726 = vmatprep.subr.mxu0 0.0
    %1727 = vmatpush2.msra.mxu0 0.0
    %1728 = vmatprep.subr.mxu0 0.0
    %1729 = vmatpush2.msra.mxu0 0.0
    %1730 = vmatprep.subr.mxu0 0.0
    %1731 = vmatpush2.msra.mxu0 0.0
    %1732 = vmatprep.subr.mxu0 0.0
    %1733 = vmatpush2.msra.mxu0 0.0
    %1734 = vmatprep.subr.mxu0 0.0
    %1735 = vmatpush2.msra.mxu0 0.0
    %1736 = vmatprep.subr.mxu0 0.0
    %1737 = vmatpush2.msra.mxu0 0.0
    %1738 = vmatprep.subr.mxu0 0.0
    %1739 = vmatpush2.msra.mxu0 0.0
    %1740 = vmatprep.subr.mxu0 0.0
    %1741 = vmatpush2.msra.mxu0 0.0
    %1742 = vmatprep.subr.mxu0 0.0
    %1743 = vmatpush2.msra.mxu0 0.0
    %1744 = vmatprep.subr.mxu0 0.0
    %1745 = vmatpush2.msra.mxu0 0.0
    %1746 = vmatprep.subr.mxu0 0.0
    %1747 = vmatpush2.msra.mxu0 0.0
    %1748 = vmatprep.subr.mxu0 0.0
    %1749 = vmatpush2.msra.mxu0 0.0
    %1750 = vmatprep.subr.mxu0 0.0
    %1751 = vmatpush2.msra.mxu0 0.0
    %1752 = vmatprep.subr.mxu0 0.0
    %1753 = vmatpush2.msra.mxu0 0.0
    %1754 = vmatprep.subr.mxu0 0.0
    %1755 = vmatpush2.msra.mxu0 0.0
    %1756 = vmatprep.subr.mxu0 0.0
    %1757 = vmatpush2.msra.mxu0 0.0
    %1758 = vmatprep.mubr.f32.mxu0 0.0
    %v1759 = vand.u32 %v1278, 4294901760
    %1760 = vmatmul.mubr.f32.gmra.mxu0 %v1759
    %v1761 = vpop.f32.mrf.mxu0
    %v1762 = vadd.f32 %v1687, %v1761
    %v1763 = vpop.f32.mrf.mxu0
    %1764 = vdwg.mxu0
    %v1765 = vrcp.pop %v1762
    %v1766 = vlaneseq
    %v1767 = vshrl.u32 %v1766, 7
    %v1768 = vsub.s32 0, %v1767
    %v1769 = vrot.slane %v1765, %v1768
    %v1770 = vmul.f32 %v1255, %v1769
    %v1771 = vmul.f32 %v1261, %v1769
    %v1772 = vmul.f32 %v1267, %v1769
    %v1773 = vmul.f32 %v1273, %v1769
    %vm1774 = vcmask 523264
    %v1776 = vsel %vm1774, %v642, 0
    %v1779 = vsel %vm1774, %v643, 0
    %v1782 = vsel %vm1774, %v1770, 0
    %v1785 = vsel %vm1774, %v1771, 0
    %v1788 = vsel %vm1774, %v1772, 0
    %v1791 = vsel %vm1774, %v1773, 0
    %1793 = vmatprep.subr.mxu0 0.0
    %1794 = vmatpush1.xpose.msra.mxu0 0.0
    %1795 = vmatprep.subr.mxu0 0.0
    %1796 = vmatpush1.xpose.msra.mxu0 0.0
    %1797 = vmatprep.subr.mxu0 0.0
    %1798 = vmatpush1.xpose.msra.mxu0 0.0
    %1799 = vmatprep.subr.mxu0 0.0
    %1800 = vmatpush1.xpose.msra.mxu0 0.0
    %1801 = vmatprep.subr.mxu0 0.0
    %1802 = vmatpush1.xpose.msra.mxu0 0.0
    %1803 = vmatprep.subr.mxu0 0.0
    %1804 = vmatpush1.xpose.msra.mxu0 0.0
    %1805 = vmatprep.subr.mxu0 0.0
    %1806 = vmatpush1.xpose.msra.mxu0 0.0
    %1807 = vmatprep.subr.mxu0 0.0
    %1808 = vmatpush1.xpose.msra.mxu0 0.0
    %1809 = vmatprep.subr.mxu0 0.0
    %1810 = vmatpush1.xpose.msra.mxu0 0.0
    %1811 = vmatprep.subr.mxu0 0.0
    %1812 = vmatpush1.xpose.msra.mxu0 0.0
    %1813 = vmatprep.subr.mxu0 0.0
    %1814 = vmatpush1.xpose.msra.mxu0 0.0
    %1815 = vmatprep.subr.mxu0 0.0
    %1816 = vmatpush1.xpose.msra.mxu0 0.0
    %1817 = vmatprep.subr.mxu0 0.0
    %v1818 = vand.u32 %v1791, 4294901760
    %1819 = vmatpush1.xpose.msra.mxu0 %v1818
    %1820 = vmatprep.subr.mxu0 0.0
    %v1821 = vand.u32 %v1788, 4294901760
    %1822 = vmatpush1.xpose.msra.mxu0 %v1821
    %1823 = vmatprep.subr.mxu0 0.0
    %v1824 = vand.u32 %v1785, 4294901760
    %1825 = vmatpush1.xpose.msra.mxu0 %v1824
    %1826 = vmatprep.subr.mxu0 0.0
    %v1827 = vand.u32 %v1782, 4294901760
    %1828 = vmatpush1.xpose.msra.mxu0 %v1827
    %1829 = vmatprep.subr.mxu0 0.0
    %1830 = vmatpush2.xpose.msra.mxu0 0.0
    %1831 = vmatprep.subr.mxu0 0.0
    %1832 = vmatpush2.xpose.msra.mxu0 0.0
    %1833 = vmatprep.subr.mxu0 0.0
    %1834 = vmatpush2.xpose.msra.mxu0 0.0
    %1835 = vmatprep.subr.mxu0 0.0
    %1836 = vmatpush2.xpose.msra.mxu0 0.0
    %1837 = vmatprep.subr.mxu0 0.0
    %1838 = vmatpush2.xpose.msra.mxu0 0.0
    %1839 = vmatprep.subr.mxu0 0.0
    %1840 = vmatpush2.xpose.msra.mxu0 0.0
    %1841 = vmatprep.subr.mxu0 0.0
    %1842 = vmatpush2.xpose.msra.mxu0 0.0
    %1843 = vmatprep.subr.mxu0 0.0
    %1844 = vmatpush2.xpose.msra.mxu0 0.0
    %1845 = vmatprep.subr.mxu0 0.0
    %1846 = vmatpush2.xpose.msra.mxu0 0.0
    %1847 = vmatprep.subr.mxu0 0.0
    %1848 = vmatpush2.xpose.msra.mxu0 0.0
    %1849 = vmatprep.subr.mxu0 0.0
    %1850 = vmatpush2.xpose.msra.mxu0 0.0
    %1851 = vmatprep.subr.mxu0 0.0
    %1852 = vmatpush2.xpose.msra.mxu0 0.0
    %1853 = vmatprep.subr.mxu0 0.0
    %1854 = vmatpush2.xpose.msra.mxu0 0.0
    %1855 = vmatprep.subr.mxu0 0.0
    %1856 = vmatpush2.xpose.msra.mxu0 0.0
    %1857 = vmatprep.subr.mxu0 0.0
    %1858 = vmatpush2.xpose.msra.mxu0 0.0
    %1859 = vmatprep.subr.mxu0 0.0
    %1860 = vmatpush2.xpose.msra.mxu0 0.0
    %1861 = vmatprep.mubr.f32.mxu0 0.0
    %v1862 = vand.u32 %v1776, 4294901760
    %v1863 = vsub.f32 %v1776, %v1862
    %v1864 = vand.u32 %v1863, 4294901760
    %v1865 = vsub.f32 %v1863, %v1864
    %v1866 = vand.u32 %v1865, 4294901760
    %1867 = vmatmul.mubr.f32.gmra.mxu0 %v1866
    %v1868 = vpop.f32.mrf.mxu0
    %v1869 = vadd.f32 0.0, %v1868
    %v1870 = vpop.f32.mrf.mxu0
    %1871 = vmatprep.mubr.f32.mxu0 0.0
    %v1872 = vand.u32 %v1779, 4294901760
    %v1873 = vsub.f32 %v1779, %v1872
    %v1874 = vand.u32 %v1873, 4294901760
    %v1875 = vsub.f32 %v1873, %v1874
    %v1876 = vand.u32 %v1875, 4294901760
    %1877 = vmatmul.mubr.f32.gmra.mxu0 %v1876
    %v1878 = vpop.f32.mrf.mxu0
    %v1879 = vadd.f32 0.0, %v1878
    %v1880 = vpop.f32.mrf.mxu0
    %1881 = vdwg.mxu0
    %1882 = vmatprep.subr.mxu0 0.0
    %1883 = vmatpush1.xpose.msra.mxu0 0.0
    %1884 = vmatprep.subr.mxu0 0.0
    %1885 = vmatpush1.xpose.msra.mxu0 0.0
    %1886 = vmatprep.subr.mxu0 0.0
    %1887 = vmatpush1.xpose.msra.mxu0 0.0
    %1888 = vmatprep.subr.mxu0 0.0
    %1889 = vmatpush1.xpose.msra.mxu0 0.0
    %1890 = vmatprep.subr.mxu0 0.0
    %1891 = vmatpush1.xpose.msra.mxu0 0.0
    %1892 = vmatprep.subr.mxu0 0.0
    %1893 = vmatpush1.xpose.msra.mxu0 0.0
    %1894 = vmatprep.subr.mxu0 0.0
    %1895 = vmatpush1.xpose.msra.mxu0 0.0
    %1896 = vmatprep.subr.mxu0 0.0
    %1897 = vmatpush1.xpose.msra.mxu0 0.0
    %1898 = vmatprep.subr.mxu0 0.0
    %1899 = vmatpush1.xpose.msra.mxu0 0.0
    %1900 = vmatprep.subr.mxu0 0.0
    %1901 = vmatpush1.xpose.msra.mxu0 0.0
    %1902 = vmatprep.subr.mxu0 0.0
    %1903 = vmatpush1.xpose.msra.mxu0 0.0
    %1904 = vmatprep.subr.mxu0 0.0
    %1905 = vmatpush1.xpose.msra.mxu0 0.0
    %1906 = vmatprep.subr.mxu0 0.0
    %v1907 = vand.u32 %v1791, 4294901760
    %v1908 = vsub.f32 %v1791, %v1907
    %v1909 = vand.u32 %v1908, 4294901760
    %v1910 = vsub.f32 %v1908, %v1909
    %v1911 = vand.u32 %v1910, 4294901760
    %1912 = vmatpush1.xpose.msra.mxu0 %v1911
    %1913 = vmatprep.subr.mxu0 0.0
    %v1914 = vand.u32 %v1788, 4294901760
    %v1915 = vsub.f32 %v1788, %v1914
    %v1916 = vand.u32 %v1915, 4294901760
    %v1917 = vsub.f32 %v1915, %v1916
    %v1918 = vand.u32 %v1917, 4294901760
    %1919 = vmatpush1.xpose.msra.mxu0 %v1918
    %1920 = vmatprep.subr.mxu0 0.0
    %v1921 = vand.u32 %v1785, 4294901760
    %v1922 = vsub.f32 %v1785, %v1921
    %v1923 = vand.u32 %v1922, 4294901760
    %v1924 = vsub.f32 %v1922, %v1923
    %v1925 = vand.u32 %v1924, 4294901760
    %1926 = vmatpush1.xpose.msra.mxu0 %v1925
    %1927 = vmatprep.subr.mxu0 0.0
    %v1928 = vand.u32 %v1782, 4294901760
    %v1929 = vsub.f32 %v1782, %v1928
    %v1930 = vand.u32 %v1929, 4294901760
    %v1931 = vsub.f32 %v1929, %v1930
    %v1932 = vand.u32 %v1931, 4294901760
    %1933 = vmatpush1.xpose.msra.mxu0 %v1932
    %1934 = vmatprep.subr.mxu0 0.0
    %1935 = vmatpush2.xpose.msra.mxu0 0.0
    %1936 = vmatprep.subr.mxu0 0.0
    %1937 = vmatpush2.xpose.msra.mxu0 0.0
    %1938 = vmatprep.subr.mxu0 0.0
    %1939 = vmatpush2.xpose.msra.mxu0 0.0
    %1940 = vmatprep.subr.mxu0 0.0
    %1941 = vmatpush2.xpose.msra.mxu0 0.0
    %1942 = vmatprep.subr.mxu0 0.0
    %1943 = vmatpush2.xpose.msra.mxu0 0.0
    %1944 = vmatprep.subr.mxu0 0.0
    %1945 = vmatpush2.xpose.msra.mxu0 0.0
    %1946 = vmatprep.subr.mxu0 0.0
    %1947 = vmatpush2.xpose.msra.mxu0 0.0
    %1948 = vmatprep.subr.mxu0 0.0
    %1949 = vmatpush2.xpose.msra.mxu0 0.0
    %1950 = vmatprep.subr.mxu0 0.0
    %1951 = vmatpush2.xpose.msra.mxu0 0.0
    %1952 = vmatprep.subr.mxu0 0.0
    %1953 = vmatpush2.xpose.msra.mxu0 0.0
    %1954 = vmatprep.subr.mxu0 0.0
    %1955 = vmatpush2.xpose.msra.mxu0 0.0
    %1956 = vmatprep.subr.mxu0 0.0
    %1957 = vmatpush2.xpose.msra.mxu0 0.0
    %1958 = vmatprep.subr.mxu0 0.0
    %1959 = vmatpush2.xpose.msra.mxu0 0.0
    %1960 = vmatprep.subr.mxu0 0.0
    %1961 = vmatpush2.xpose.msra.mxu0 0.0
    %1962 = vmatprep.subr.mxu0 0.0
    %1963 = vmatpush2.xpose.msra.mxu0 0.0
    %1964 = vmatprep.subr.mxu0 0.0
    %1965 = vmatpush2.xpose.msra.mxu0 0.0
    %1966 = vmatprep.mubr.f32.mxu0 0.0
    %v1967 = vand.u32 %v1776, 4294901760
    %1968 = vmatmul.mubr.f32.gmra.mxu0 %v1967
    %v1969 = vpop.f32.mrf.mxu0
    %v1970 = vadd.f32 %v1869, %v1969
    %v1971 = vpop.f32.mrf.mxu0
    %1972 = vmatprep.mubr.f32.mxu0 0.0
    %v1973 = vand.u32 %v1779, 4294901760
    %1974 = vmatmul.mubr.f32.gmra.mxu0 %v1973
    %v1975 = vpop.f32.mrf.mxu0
    %v1976 = vadd.f32 %v1879, %v1975
    %v1977 = vpop.f32.mrf.mxu0
    %1978 = vdwg.mxu0
    %1979 = vmatprep.subr.mxu0 0.0
    %1980 = vmatpush1.xpose.msra.mxu0 0.0
    %1981 = vmatprep.subr.mxu0 0.0
    %1982 = vmatpush1.xpose.msra.mxu0 0.0
    %1983 = vmatprep.subr.mxu0 0.0
    %1984 = vmatpush1.xpose.msra.mxu0 0.0
    %1985 = vmatprep.subr.mxu0 0.0
    %1986 = vmatpush1.xpose.msra.mxu0 0.0
    %1987 = vmatprep.subr.mxu0 0.0
    %1988 = vmatpush1.xpose.msra.mxu0 0.0
    %1989 = vmatprep.subr.mxu0 0.0
    %1990 = vmatpush1.xpose.msra.mxu0 0.0
    %1991 = vmatprep.subr.mxu0 0.0
    %1992 = vmatpush1.xpose.msra.mxu0 0.0
    %1993 = vmatprep.subr.mxu0 0.0
    %1994 = vmatpush1.xpose.msra.mxu0 0.0
    %1995 = vmatprep.subr.mxu0 0.0
    %1996 = vmatpush1.xpose.msra.mxu0 0.0
    %1997 = vmatprep.subr.mxu0 0.0
    %1998 = vmatpush1.xpose.msra.mxu0 0.0
    %1999 = vmatprep.subr.mxu0 0.0
    %2000 = vmatpush1.xpose.msra.mxu0 0.0
    %2001 = vmatprep.subr.mxu0 0.0
    %2002 = vmatpush1.xpose.msra.mxu0 0.0
    %2003 = vmatprep.subr.mxu0 0.0
    %v2004 = vand.u32 %v1791, 4294901760
    %v2005 = vsub.f32 %v1791, %v2004
    %2006 = vmatpush1.xpose.msra.mxu0 %v2005
    %2007 = vmatprep.subr.mxu0 0.0
    %v2008 = vand.u32 %v1788, 4294901760
    %v2009 = vsub.f32 %v1788, %v2008
    %2010 = vmatpush1.xpose.msra.mxu0 %v2009
    %2011 = vmatprep.subr.mxu0 0.0
    %v2012 = vand.u32 %v1785, 4294901760
    %v2013 = vsub.f32 %v1785, %v2012
    %2014 = vmatpush1.xpose.msra.mxu0 %v2013
    %2015 = vmatprep.subr.mxu0 0.0
    %v2016 = vand.u32 %v1782, 4294901760
    %v2017 = vsub.f32 %v1782, %v2016
    %2018 = vmatpush1.xpose.msra.mxu0 %v2017
    %2019 = vmatprep.subr.mxu0 0.0
    %2020 = vmatpush2.xpose.msra.mxu0 0.0
    %2021 = vmatprep.subr.mxu0 0.0
    %2022 = vmatpush2.xpose.msra.mxu0 0.0
    %2023 = vmatprep.subr.mxu0 0.0
    %2024 = vmatpush2.xpose.msra.mxu0 0.0
    %2025 = vmatprep.subr.mxu0 0.0
    %2026 = vmatpush2.xpose.msra.mxu0 0.0
    %2027 = vmatprep.subr.mxu0 0.0
    %2028 = vmatpush2.xpose.msra.mxu0 0.0
    %2029 = vmatprep.subr.mxu0 0.0
    %2030 = vmatpush2.xpose.msra.mxu0 0.0
    %2031 = vmatprep.subr.mxu0 0.0
    %2032 = vmatpush2.xpose.msra.mxu0 0.0
    %2033 = vmatprep.subr.mxu0 0.0
    %2034 = vmatpush2.xpose.msra.mxu0 0.0
    %2035 = vmatprep.subr.mxu0 0.0
    %2036 = vmatpush2.xpose.msra.mxu0 0.0
    %2037 = vmatprep.subr.mxu0 0.0
    %2038 = vmatpush2.xpose.msra.mxu0 0.0
    %2039 = vmatprep.subr.mxu0 0.0
    %2040 = vmatpush2.xpose.msra.mxu0 0.0
    %2041 = vmatprep.subr.mxu0 0.0
    %2042 = vmatpush2.xpose.msra.mxu0 0.0
    %2043 = vmatprep.subr.mxu0 0.0
    %2044 = vmatpush2.xpose.msra.mxu0 0.0
    %2045 = vmatprep.subr.mxu0 0.0
    %2046 = vmatpush2.xpose.msra.mxu0 0.0
    %2047 = vmatprep.subr.mxu0 0.0
    %2048 = vmatpush2.xpose.msra.mxu0 0.0
    %2049 = vmatprep.subr.mxu0 0.0
    %2050 = vmatpush2.xpose.msra.mxu0 0.0
    %2051 = vmatprep.mubr.f32.mxu0 0.0
    %v2052 = vand.u32 %v1776, 4294901760
    %v2053 = vsub.f32 %v1776, %v2052
    %2054 = vmatmul.mubr.f32.gmra.mxu0 %v2053
    %v2055 = vpop.f32.mrf.mxu0
    %v2056 = vadd.f32 %v1970, %v2055
    %v2057 = vpop.f32.mrf.mxu0
    %2058 = vmatprep.mubr.f32.mxu0 0.0
    %v2059 = vand.u32 %v1779, 4294901760
    %v2060 = vsub.f32 %v1779, %v2059
    %2061 = vmatmul.mubr.f32.gmra.mxu0 %v2060
    %v2062 = vpop.f32.mrf.mxu0
    %v2063 = vadd.f32 %v1976, %v2062
    %v2064 = vpop.f32.mrf.mxu0
    %2065 = vdwg.mxu0
    %2066 = vmatprep.subr.mxu0 0.0
    %2067 = vmatpush1.xpose.msra.mxu0 0.0
    %2068 = vmatprep.subr.mxu0 0.0
    %2069 = vmatpush1.xpose.msra.mxu0 0.0
    %2070 = vmatprep.subr.mxu0 0.0
    %2071 = vmatpush1.xpose.msra.mxu0 0.0
    %2072 = vmatprep.subr.mxu0 0.0
    %2073 = vmatpush1.xpose.msra.mxu0 0.0
    %2074 = vmatprep.subr.mxu0 0.0
    %2075 = vmatpush1.xpose.msra.mxu0 0.0
    %2076 = vmatprep.subr.mxu0 0.0
    %2077 = vmatpush1.xpose.msra.mxu0 0.0
    %2078 = vmatprep.subr.mxu0 0.0
    %2079 = vmatpush1.xpose.msra.mxu0 0.0
    %2080 = vmatprep.subr.mxu0 0.0
    %2081 = vmatpush1.xpose.msra.mxu0 0.0
    %2082 = vmatprep.subr.mxu0 0.0
    %2083 = vmatpush1.xpose.msra.mxu0 0.0
    %2084 = vmatprep.subr.mxu0 0.0
    %2085 = vmatpush1.xpose.msra.mxu0 0.0
    %2086 = vmatprep.subr.mxu0 0.0
    %2087 = vmatpush1.xpose.msra.mxu0 0.0
    %2088 = vmatprep.subr.mxu0 0.0
    %2089 = vmatpush1.xpose.msra.mxu0 0.0
    %2090 = vmatprep.subr.mxu0 0.0
    %v2091 = vand.u32 %v1791, 4294901760
    %2092 = vmatpush1.xpose.msra.mxu0 %v2091
    %2093 = vmatprep.subr.mxu0 0.0
    %v2094 = vand.u32 %v1788, 4294901760
    %2095 = vmatpush1.xpose.msra.mxu0 %v2094
    %2096 = vmatprep.subr.mxu0 0.0
    %v2097 = vand.u32 %v1785, 4294901760
    %2098 = vmatpush1.xpose.msra.mxu0 %v2097
    %2099 = vmatprep.subr.mxu0 0.0
    %v2100 = vand.u32 %v1782, 4294901760
    %2101 = vmatpush1.xpose.msra.mxu0 %v2100
    %2102 = vmatprep.subr.mxu0 0.0
    %2103 = vmatpush2.xpose.msra.mxu0 0.0
    %2104 = vmatprep.subr.mxu0 0.0
    %2105 = vmatpush2.xpose.msra.mxu0 0.0
    %2106 = vmatprep.subr.mxu0 0.0
    %2107 = vmatpush2.xpose.msra.mxu0 0.0
    %2108 = vmatprep.subr.mxu0 0.0
    %2109 = vmatpush2.xpose.msra.mxu0 0.0
    %2110 = vmatprep.subr.mxu0 0.0
    %2111 = vmatpush2.xpose.msra.mxu0 0.0
    %2112 = vmatprep.subr.mxu0 0.0
    %2113 = vmatpush2.xpose.msra.mxu0 0.0
    %2114 = vmatprep.subr.mxu0 0.0
    %2115 = vmatpush2.xpose.msra.mxu0 0.0
    %2116 = vmatprep.subr.mxu0 0.0
    %2117 = vmatpush2.xpose.msra.mxu0 0.0
    %2118 = vmatprep.subr.mxu0 0.0
    %2119 = vmatpush2.xpose.msra.mxu0 0.0
    %2120 = vmatprep.subr.mxu0 0.0
    %2121 = vmatpush2.xpose.msra.mxu0 0.0
    %2122 = vmatprep.subr.mxu0 0.0
    %2123 = vmatpush2.xpose.msra.mxu0 0.0
    %2124 = vmatprep.subr.mxu0 0.0
    %2125 = vmatpush2.xpose.msra.mxu0 0.0
    %2126 = vmatprep.subr.mxu0 0.0
    %2127 = vmatpush2.xpose.msra.mxu0 0.0
    %2128 = vmatprep.subr.mxu0 0.0
    %2129 = vmatpush2.xpose.msra.mxu0 0.0
    %2130 = vmatprep.subr.mxu0 0.0
    %2131 = vmatpush2.xpose.msra.mxu0 0.0
    %2132 = vmatprep.subr.mxu0 0.0
    %2133 = vmatpush2.xpose.msra.mxu0 0.0
    %2134 = vmatprep.mubr.f32.mxu0 0.0
    %v2135 = vand.u32 %v1776, 4294901760
    %v2136 = vsub.f32 %v1776, %v2135
    %v2137 = vand.u32 %v2136, 4294901760
    %2138 = vmatmul.mubr.f32.gmra.mxu0 %v2137
    %v2139 = vpop.f32.mrf.mxu0
    %v2140 = vadd.f32 %v2056, %v2139
    %v2141 = vpop.f32.mrf.mxu0
    %2142 = vmatprep.mubr.f32.mxu0 0.0
    %v2143 = vand.u32 %v1779, 4294901760
    %v2144 = vsub.f32 %v1779, %v2143
    %v2145 = vand.u32 %v2144, 4294901760
    %2146 = vmatmul.mubr.f32.gmra.mxu0 %v2145
    %v2147 = vpop.f32.mrf.mxu0
    %v2148 = vadd.f32 %v2063, %v2147
    %v2149 = vpop.f32.mrf.mxu0
    %2150 = vdwg.mxu0
    %2151 = vmatprep.subr.mxu0 0.0
    %2152 = vmatpush1.xpose.msra.mxu0 0.0
    %2153 = vmatprep.subr.mxu0 0.0
    %2154 = vmatpush1.xpose.msra.mxu0 0.0
    %2155 = vmatprep.subr.mxu0 0.0
    %2156 = vmatpush1.xpose.msra.mxu0 0.0
    %2157 = vmatprep.subr.mxu0 0.0
    %2158 = vmatpush1.xpose.msra.mxu0 0.0
    %2159 = vmatprep.subr.mxu0 0.0
    %2160 = vmatpush1.xpose.msra.mxu0 0.0
    %2161 = vmatprep.subr.mxu0 0.0
    %2162 = vmatpush1.xpose.msra.mxu0 0.0
    %2163 = vmatprep.subr.mxu0 0.0
    %2164 = vmatpush1.xpose.msra.mxu0 0.0
    %2165 = vmatprep.subr.mxu0 0.0
    %2166 = vmatpush1.xpose.msra.mxu0 0.0
    %2167 = vmatprep.subr.mxu0 0.0
    %2168 = vmatpush1.xpose.msra.mxu0 0.0
    %2169 = vmatprep.subr.mxu0 0.0
    %2170 = vmatpush1.xpose.msra.mxu0 0.0
    %2171 = vmatprep.subr.mxu0 0.0
    %2172 = vmatpush1.xpose.msra.mxu0 0.0
    %2173 = vmatprep.subr.mxu0 0.0
    %2174 = vmatpush1.xpose.msra.mxu0 0.0
    %2175 = vmatprep.subr.mxu0 0.0
    %v2176 = vand.u32 %v1791, 4294901760
    %v2177 = vsub.f32 %v1791, %v2176
    %v2178 = vand.u32 %v2177, 4294901760
    %2179 = vmatpush1.xpose.msra.mxu0 %v2178
    %2180 = vmatprep.subr.mxu0 0.0
    %v2181 = vand.u32 %v1788, 4294901760
    %v2182 = vsub.f32 %v1788, %v2181
    %v2183 = vand.u32 %v2182, 4294901760
    %2184 = vmatpush1.xpose.msra.mxu0 %v2183
    %2185 = vmatprep.subr.mxu0 0.0
    %v2186 = vand.u32 %v1785, 4294901760
    %v2187 = vsub.f32 %v1785, %v2186
    %v2188 = vand.u32 %v2187, 4294901760
    %2189 = vmatpush1.xpose.msra.mxu0 %v2188
    %2190 = vmatprep.subr.mxu0 0.0
    %v2191 = vand.u32 %v1782, 4294901760
    %v2192 = vsub.f32 %v1782, %v2191
    %v2193 = vand.u32 %v2192, 4294901760
    %2194 = vmatpush1.xpose.msra.mxu0 %v2193
    %2195 = vmatprep.subr.mxu0 0.0
    %2196 = vmatpush2.xpose.msra.mxu0 0.0
    %2197 = vmatprep.subr.mxu0 0.0
    %2198 = vmatpush2.xpose.msra.mxu0 0.0
    %2199 = vmatprep.subr.mxu0 0.0
    %2200 = vmatpush2.xpose.msra.mxu0 0.0
    %2201 = vmatprep.subr.mxu0 0.0
    %2202 = vmatpush2.xpose.msra.mxu0 0.0
    %2203 = vmatprep.subr.mxu0 0.0
    %2204 = vmatpush2.xpose.msra.mxu0 0.0
    %2205 = vmatprep.subr.mxu0 0.0
    %2206 = vmatpush2.xpose.msra.mxu0 0.0
    %2207 = vmatprep.subr.mxu0 0.0
    %2208 = vmatpush2.xpose.msra.mxu0 0.0
    %2209 = vmatprep.subr.mxu0 0.0
    %2210 = vmatpush2.xpose.msra.mxu0 0.0
    %2211 = vmatprep.subr.mxu0 0.0
    %2212 = vmatpush2.xpose.msra.mxu0 0.0
    %2213 = vmatprep.subr.mxu0 0.0
    %2214 = vmatpush2.xpose.msra.mxu0 0.0
    %2215 = vmatprep.subr.mxu0 0.0
    %2216 = vmatpush2.xpose.msra.mxu0 0.0
    %2217 = vmatprep.subr.mxu0 0.0
    %2218 = vmatpush2.xpose.msra.mxu0 0.0
    %2219 = vmatprep.subr.mxu0 0.0
    %2220 = vmatpush2.xpose.msra.mxu0 0.0
    %2221 = vmatprep.subr.mxu0 0.0
    %2222 = vmatpush2.xpose.msra.mxu0 0.0
    %2223 = vmatprep.subr.mxu0 0.0
    %2224 = vmatpush2.xpose.msra.mxu0 0.0
    %2225 = vmatprep.subr.mxu0 0.0
    %2226 = vmatpush2.xpose.msra.mxu0 0.0
    %2227 = vmatprep.mubr.f32.mxu0 0.0
    %v2228 = vand.u32 %v1776, 4294901760
    %2229 = vmatmul.mubr.f32.gmra.mxu0 %v2228
    %v2230 = vpop.f32.mrf.mxu0
    %v2231 = vadd.f32 %v2140, %v2230
    %v2232 = vpop.f32.mrf.mxu0
    %2233 = vmatprep.mubr.f32.mxu0 0.0
    %v2234 = vand.u32 %v1779, 4294901760
    %2235 = vmatmul.mubr.f32.gmra.mxu0 %v2234
    %v2236 = vpop.f32.mrf.mxu0
    %v2237 = vadd.f32 %v2148, %v2236
    %v2238 = vpop.f32.mrf.mxu0
    %2239 = vdwg.mxu0
    %2240 = vmatprep.subr.mxu0 0.0
    %2241 = vmatpush1.xpose.msra.mxu0 0.0
    %2242 = vmatprep.subr.mxu0 0.0
    %2243 = vmatpush1.xpose.msra.mxu0 0.0
    %2244 = vmatprep.subr.mxu0 0.0
    %2245 = vmatpush1.xpose.msra.mxu0 0.0
    %2246 = vmatprep.subr.mxu0 0.0
    %2247 = vmatpush1.xpose.msra.mxu0 0.0
    %2248 = vmatprep.subr.mxu0 0.0
    %2249 = vmatpush1.xpose.msra.mxu0 0.0
    %2250 = vmatprep.subr.mxu0 0.0
    %2251 = vmatpush1.xpose.msra.mxu0 0.0
    %2252 = vmatprep.subr.mxu0 0.0
    %2253 = vmatpush1.xpose.msra.mxu0 0.0
    %2254 = vmatprep.subr.mxu0 0.0
    %2255 = vmatpush1.xpose.msra.mxu0 0.0
    %2256 = vmatprep.subr.mxu0 0.0
    %2257 = vmatpush1.xpose.msra.mxu0 0.0
    %2258 = vmatprep.subr.mxu0 0.0
    %2259 = vmatpush1.xpose.msra.mxu0 0.0
    %2260 = vmatprep.subr.mxu0 0.0
    %2261 = vmatpush1.xpose.msra.mxu0 0.0
    %2262 = vmatprep.subr.mxu0 0.0
    %2263 = vmatpush1.xpose.msra.mxu0 0.0
    %2264 = vmatprep.subr.mxu0 0.0
    %v2265 = vand.u32 %v1791, 4294901760
    %2266 = vmatpush1.xpose.msra.mxu0 %v2265
    %2267 = vmatprep.subr.mxu0 0.0
    %v2268 = vand.u32 %v1788, 4294901760
    %2269 = vmatpush1.xpose.msra.mxu0 %v2268
    %2270 = vmatprep.subr.mxu0 0.0
    %v2271 = vand.u32 %v1785, 4294901760
    %2272 = vmatpush1.xpose.msra.mxu0 %v2271
    %2273 = vmatprep.subr.mxu0 0.0
    %v2274 = vand.u32 %v1782, 4294901760
    %2275 = vmatpush1.xpose.msra.mxu0 %v2274
    %2276 = vmatprep.subr.mxu0 0.0
    %2277 = vmatpush2.xpose.msra.mxu0 0.0
    %2278 = vmatprep.subr.mxu0 0.0
    %2279 = vmatpush2.xpose.msra.mxu0 0.0
    %2280 = vmatprep.subr.mxu0 0.0
    %2281 = vmatpush2.xpose.msra.mxu0 0.0
    %2282 = vmatprep.subr.mxu0 0.0
    %2283 = vmatpush2.xpose.msra.mxu0 0.0
    %2284 = vmatprep.subr.mxu0 0.0
    %2285 = vmatpush2.xpose.msra.mxu0 0.0
    %2286 = vmatprep.subr.mxu0 0.0
    %2287 = vmatpush2.xpose.msra.mxu0 0.0
    %2288 = vmatprep.subr.mxu0 0.0
    %2289 = vmatpush2.xpose.msra.mxu0 0.0
    %2290 = vmatprep.subr.mxu0 0.0
    %2291 = vmatpush2.xpose.msra.mxu0 0.0
    %2292 = vmatprep.subr.mxu0 0.0
    %2293 = vmatpush2.xpose.msra.mxu0 0.0
    %2294 = vmatprep.subr.mxu0 0.0
    %2295 = vmatpush2.xpose.msra.mxu0 0.0
    %2296 = vmatprep.subr.mxu0 0.0
    %2297 = vmatpush2.xpose.msra.mxu0 0.0
    %2298 = vmatprep.subr.mxu0 0.0
    %2299 = vmatpush2.xpose.msra.mxu0 0.0
    %2300 = vmatprep.subr.mxu0 0.0
    %2301 = vmatpush2.xpose.msra.mxu0 0.0
    %2302 = vmatprep.subr.mxu0 0.0
    %2303 = vmatpush2.xpose.msra.mxu0 0.0
    %2304 = vmatprep.subr.mxu0 0.0
    %2305 = vmatpush2.xpose.msra.mxu0 0.0
    %2306 = vmatprep.subr.mxu0 0.0
    %2307 = vmatpush2.xpose.msra.mxu0 0.0
    %2308 = vmatprep.mubr.f32.mxu0 0.0
    %v2309 = vand.u32 %v1776, 4294901760
    %2310 = vmatmul.mubr.f32.gmra.mxu0 %v2309
    %v2311 = vpop.f32.mrf.mxu0
    %v2312 = vadd.f32 %v2231, %v2311
    %v2313 = vpop.f32.mrf.mxu0
    %2314 = vmatprep.mubr.f32.mxu0 0.0
    %v2315 = vand.u32 %v1779, 4294901760
    %2316 = vmatmul.mubr.f32.gmra.mxu0 %v2315
    %v2317 = vpop.f32.mrf.mxu0
    %v2318 = vadd.f32 %v2237, %v2317
    %v2319 = vpop.f32.mrf.mxu0
    %2320 = vdwg.mxu0
    %2321 = vst.msk [vmem:[#allocation2] sm:$0xff] %vm1276, %v2312
    %2322 = vst.msk [vmem:[#allocation2 + $0x8] sm:$0xff] %vm1276, %v2318
    %2323 = vst.msk [vmem:[#allocation4] sm:$0xff] %vm1774, %v1770
    %2324 = vst.msk [vmem:[#allocation4 + $0x8] sm:$0xff] %vm1774, %v1771
    %2325 = vst.msk [vmem:[#allocation4 + $0x10] sm:$0xff] %vm1774, %v1772
    %2326 = vst.msk [vmem:[#allocation4 + $0x18] sm:$0xff] %vm1774, %v1773
    %s2327 = scalar_lea.vmem %s0, 16
    %v2328 = vld [vmem:[%s2327] sm:$0xff]
    %v2329 = vld [vmem:[%s2327 + $0x8] sm:$0xff]
    %s2330 = scalar_lea.vmem %s1, 16
    %v2331 = vld [vmem:[%s2330] sm:$0xff]
    %v2332 = vld [vmem:[%s2330 + $0x8] sm:$0xff]
    %2333 = vmatprep.subr.mxu0 0.0
    %2334 = vmatpush1.msra.mxu0 0.0
    %2335 = vmatprep.subr.mxu0 0.0
    %2336 = vmatpush1.msra.mxu0 0.0
    %2337 = vmatprep.subr.mxu0 0.0
    %2338 = vmatpush1.msra.mxu0 0.0
    %2339 = vmatprep.subr.mxu0 0.0
    %2340 = vmatpush1.msra.mxu0 0.0
    %2341 = vmatprep.subr.mxu0 0.0
    %2342 = vmatpush1.msra.mxu0 0.0
    %2343 = vmatprep.subr.mxu0 0.0
    %2344 = vmatpush1.msra.mxu0 0.0
    %2345 = vmatprep.subr.mxu0 0.0
    %2346 = vmatpush1.msra.mxu0 0.0
    %2347 = vmatprep.subr.mxu0 0.0
    %2348 = vmatpush1.msra.mxu0 0.0
    %2349 = vmatprep.subr.mxu0 0.0
    %2350 = vmatpush1.msra.mxu0 0.0
    %2351 = vmatprep.subr.mxu0 0.0
    %2352 = vmatpush1.msra.mxu0 0.0
    %2353 = vmatprep.subr.mxu0 0.0
    %2354 = vmatpush1.msra.mxu0 0.0
    %2355 = vmatprep.subr.mxu0 0.0
    %2356 = vmatpush1.msra.mxu0 0.0
    %2357 = vmatprep.subr.mxu0 0.0
    %2358 = vmatpush1.msra.mxu0 0.0
    %2359 = vmatprep.subr.mxu0 0.0
    %2360 = vmatpush1.msra.mxu0 0.0
    %2361 = vmatprep.subr.mxu0 0.0
    %v2362 = vand.u32 %v2332, 4294901760
    %2363 = vmatpush1.msra.mxu0 %v2362
    %2364 = vmatprep.subr.mxu0 0.0
    %v2365 = vand.u32 %v2331, 4294901760
    %2366 = vmatpush1.msra.mxu0 %v2365
    %2367 = vmatprep.subr.mxu0 0.0
    %2368 = vmatpush2.msra.mxu0 0.0
    %2369 = vmatprep.subr.mxu0 0.0
    %2370 = vmatpush2.msra.mxu0 0.0
    %2371 = vmatprep.subr.mxu0 0.0
    %2372 = vmatpush2.msra.mxu0 0.0
    %2373 = vmatprep.subr.mxu0 0.0
    %2374 = vmatpush2.msra.mxu0 0.0
    %2375 = vmatprep.subr.mxu0 0.0
    %2376 = vmatpush2.msra.mxu0 0.0
    %2377 = vmatprep.subr.mxu0 0.0
    %2378 = vmatpush2.msra.mxu0 0.0
    %2379 = vmatprep.subr.mxu0 0.0
    %2380 = vmatpush2.msra.mxu0 0.0
    %2381 = vmatprep.subr.mxu0 0.0
    %2382 = vmatpush2.msra.mxu0 0.0
    %2383 = vmatprep.subr.mxu0 0.0
    %2384 = vmatpush2.msra.mxu0 0.0
    %2385 = vmatprep.subr.mxu0 0.0
    %2386 = vmatpush2.msra.mxu0 0.0
    %2387 = vmatprep.subr.mxu0 0.0
    %2388 = vmatpush2.msra.mxu0 0.0
    %2389 = vmatprep.subr.mxu0 0.0
    %2390 = vmatpush2.msra.mxu0 0.0
    %2391 = vmatprep.subr.mxu0 0.0
    %2392 = vmatpush2.msra.mxu0 0.0
    %2393 = vmatprep.subr.mxu0 0.0
    %2394 = vmatpush2.msra.mxu0 0.0
    %2395 = vmatprep.subr.mxu0 0.0
    %2396 = vmatpush2.msra.mxu0 0.0
    %2397 = vmatprep.subr.mxu0 0.0
    %2398 = vmatpush2.msra.mxu0 0.0
    %2399 = vmatprep.mubr.f32.mxu0 0.0
    %v2400 = vand.u32 %v33, 4294901760
    %v2401 = vsub.f32 %v33, %v2400
    %v2402 = vand.u32 %v2401, 4294901760
    %v2403 = vsub.f32 %v2401, %v2402
    %v2404 = vand.u32 %v2403, 4294901760
    %2405 = vmatmul.mubr.f32.gmra.mxu0 %v2404
    %v2406 = vpop.f32.mrf.mxu0
    %v2407 = vadd.f32 0.0, %v2406
    %v2408 = vpop.f32.mrf.mxu0
    %2409 = vmatprep.mubr.f32.mxu0 0.0
    %v2410 = vand.u32 %v36, 4294901760
    %v2411 = vsub.f32 %v36, %v2410
    %v2412 = vand.u32 %v2411, 4294901760
    %v2413 = vsub.f32 %v2411, %v2412
    %v2414 = vand.u32 %v2413, 4294901760
    %2415 = vmatmul.mubr.f32.gmra.mxu0 %v2414
    %v2416 = vpop.f32.mrf.mxu0
    %v2417 = vadd.f32 0.0, %v2416
    %v2418 = vpop.f32.mrf.mxu0
    %2419 = vmatprep.mubr.f32.mxu0 0.0
    %v2420 = vand.u32 %v39, 4294901760
    %v2421 = vsub.f32 %v39, %v2420
    %v2422 = vand.u32 %v2421, 4294901760
    %v2423 = vsub.f32 %v2421, %v2422
    %v2424 = vand.u32 %v2423, 4294901760
    %2425 = vmatmul.mubr.f32.gmra.mxu0 %v2424
    %v2426 = vpop.f32.mrf.mxu0
    %v2427 = vadd.f32 0.0, %v2426
    %v2428 = vpop.f32.mrf.mxu0
    %2429 = vmatprep.mubr.f32.mxu0 0.0
    %v2430 = vand.u32 %v42, 4294901760
    %v2431 = vsub.f32 %v42, %v2430
    %v2432 = vand.u32 %v2431, 4294901760
    %v2433 = vsub.f32 %v2431, %v2432
    %v2434 = vand.u32 %v2433, 4294901760
    %2435 = vmatmul.mubr.f32.gmra.mxu0 %v2434
    %v2436 = vpop.f32.mrf.mxu0
    %v2437 = vadd.f32 0.0, %v2436
    %v2438 = vpop.f32.mrf.mxu0
    %2439 = vdwg.mxu0
    %2440 = vmatprep.subr.mxu0 0.0
    %2441 = vmatpush1.msra.mxu0 0.0
    %2442 = vmatprep.subr.mxu0 0.0
    %2443 = vmatpush1.msra.mxu0 0.0
    %2444 = vmatprep.subr.mxu0 0.0
    %2445 = vmatpush1.msra.mxu0 0.0
    %2446 = vmatprep.subr.mxu0 0.0
    %2447 = vmatpush1.msra.mxu0 0.0
    %2448 = vmatprep.subr.mxu0 0.0
    %2449 = vmatpush1.msra.mxu0 0.0
    %2450 = vmatprep.subr.mxu0 0.0
    %2451 = vmatpush1.msra.mxu0 0.0
    %2452 = vmatprep.subr.mxu0 0.0
    %2453 = vmatpush1.msra.mxu0 0.0
    %2454 = vmatprep.subr.mxu0 0.0
    %2455 = vmatpush1.msra.mxu0 0.0
    %2456 = vmatprep.subr.mxu0 0.0
    %2457 = vmatpush1.msra.mxu0 0.0
    %2458 = vmatprep.subr.mxu0 0.0
    %2459 = vmatpush1.msra.mxu0 0.0
    %2460 = vmatprep.subr.mxu0 0.0
    %2461 = vmatpush1.msra.mxu0 0.0
    %2462 = vmatprep.subr.mxu0 0.0
    %2463 = vmatpush1.msra.mxu0 0.0
    %2464 = vmatprep.subr.mxu0 0.0
    %2465 = vmatpush1.msra.mxu0 0.0
    %2466 = vmatprep.subr.mxu0 0.0
    %2467 = vmatpush1.msra.mxu0 0.0
    %2468 = vmatprep.subr.mxu0 0.0
    %v2469 = vand.u32 %v2332, 4294901760
    %v2470 = vsub.f32 %v2332, %v2469
    %v2471 = vand.u32 %v2470, 4294901760
    %v2472 = vsub.f32 %v2470, %v2471
    %v2473 = vand.u32 %v2472, 4294901760
    %2474 = vmatpush1.msra.mxu0 %v2473
    %2475 = vmatprep.subr.mxu0 0.0
    %v2476 = vand.u32 %v2331, 4294901760
    %v2477 = vsub.f32 %v2331, %v2476
    %v2478 = vand.u32 %v2477, 4294901760
    %v2479 = vsub.f32 %v2477, %v2478
    %v2480 = vand.u32 %v2479, 4294901760
    %2481 = vmatpush1.msra.mxu0 %v2480
    %2482 = vmatprep.subr.mxu0 0.0
    %2483 = vmatpush2.msra.mxu0 0.0
    %2484 = vmatprep.subr.mxu0 0.0
    %2485 = vmatpush2.msra.mxu0 0.0
    %2486 = vmatprep.subr.mxu0 0.0
    %2487 = vmatpush2.msra.mxu0 0.0
    %2488 = vmatprep.subr.mxu0 0.0
    %2489 = vmatpush2.msra.mxu0 0.0
    %2490 = vmatprep.subr.mxu0 0.0
    %2491 = vmatpush2.msra.mxu0 0.0
    %2492 = vmatprep.subr.mxu0 0.0
    %2493 = vmatpush2.msra.mxu0 0.0
    %2494 = vmatprep.subr.mxu0 0.0
    %2495 = vmatpush2.msra.mxu0 0.0
    %2496 = vmatprep.subr.mxu0 0.0
    %2497 = vmatpush2.msra.mxu0 0.0
    %2498 = vmatprep.subr.mxu0 0.0
    %2499 = vmatpush2.msra.mxu0 0.0
    %2500 = vmatprep.subr.mxu0 0.0
    %2501 = vmatpush2.msra.mxu0 0.0
    %2502 = vmatprep.subr.mxu0 0.0
    %2503 = vmatpush2.msra.mxu0 0.0
    %2504 = vmatprep.subr.mxu0 0.0
    %2505 = vmatpush2.msra.mxu0 0.0
    %2506 = vmatprep.subr.mxu0 0.0
    %2507 = vmatpush2.msra.mxu0 0.0
    %2508 = vmatprep.subr.mxu0 0.0
    %2509 = vmatpush2.msra.mxu0 0.0
    %2510 = vmatprep.subr.mxu0 0.0
    %2511 = vmatpush2.msra.mxu0 0.0
    %2512 = vmatprep.subr.mxu0 0.0
    %2513 = vmatpush2.msra.mxu0 0.0
    %2514 = vmatprep.mubr.f32.mxu0 0.0
    %v2515 = vand.u32 %v33, 4294901760
    %2516 = vmatmul.mubr.f32.gmra.mxu0 %v2515
    %v2517 = vpop.f32.mrf.mxu0
    %v2518 = vadd.f32 %v2407, %v2517
    %v2519 = vpop.f32.mrf.mxu0
    %2520 = vmatprep.mubr.f32.mxu0 0.0
    %v2521 = vand.u32 %v36, 4294901760
    %2522 = vmatmul.mubr.f32.gmra.mxu0 %v2521
    %v2523 = vpop.f32.mrf.mxu0
    %v2524 = vadd.f32 %v2417, %v2523
    %v2525 = vpop.f32.mrf.mxu0
    %2526 = vmatprep.mubr.f32.mxu0 0.0
    %v2527 = vand.u32 %v39, 4294901760
    %2528 = vmatmul.mubr.f32.gmra.mxu0 %v2527
    %v2529 = vpop.f32.mrf.mxu0
    %v2530 = vadd.f32 %v2427, %v2529
    %v2531 = vpop.f32.mrf.mxu0
    %2532 = vmatprep.mubr.f32.mxu0 0.0
    %v2533 = vand.u32 %v42, 4294901760
    %2534 = vmatmul.mubr.f32.gmra.mxu0 %v2533
    %v2535 = vpop.f32.mrf.mxu0
    %v2536 = vadd.f32 %v2437, %v2535
    %v2537 = vpop.f32.mrf.mxu0
    %2538 = vdwg.mxu0
    %2539 = vmatprep.subr.mxu0 0.0
    %2540 = vmatpush1.msra.mxu0 0.0
    %2541 = vmatprep.subr.mxu0 0.0
    %2542 = vmatpush1.msra.mxu0 0.0
    %2543 = vmatprep.subr.mxu0 0.0
    %2544 = vmatpush1.msra.mxu0 0.0
    %2545 = vmatprep.subr.mxu0 0.0
    %2546 = vmatpush1.msra.mxu0 0.0
    %2547 = vmatprep.subr.mxu0 0.0
    %2548 = vmatpush1.msra.mxu0 0.0
    %2549 = vmatprep.subr.mxu0 0.0
    %2550 = vmatpush1.msra.mxu0 0.0
    %2551 = vmatprep.subr.mxu0 0.0
    %2552 = vmatpush1.msra.mxu0 0.0
    %2553 = vmatprep.subr.mxu0 0.0
    %2554 = vmatpush1.msra.mxu0 0.0
    %2555 = vmatprep.subr.mxu0 0.0
    %2556 = vmatpush1.msra.mxu0 0.0
    %2557 = vmatprep.subr.mxu0 0.0
    %2558 = vmatpush1.msra.mxu0 0.0
    %2559 = vmatprep.subr.mxu0 0.0
    %2560 = vmatpush1.msra.mxu0 0.0
    %2561 = vmatprep.subr.mxu0 0.0
    %2562 = vmatpush1.msra.mxu0 0.0
    %2563 = vmatprep.subr.mxu0 0.0
    %2564 = vmatpush1.msra.mxu0 0.0
    %2565 = vmatprep.subr.mxu0 0.0
    %2566 = vmatpush1.msra.mxu0 0.0
    %2567 = vmatprep.subr.mxu0 0.0
    %v2568 = vand.u32 %v2332, 4294901760
    %v2569 = vsub.f32 %v2332, %v2568
    %2570 = vmatpush1.msra.mxu0 %v2569
    %2571 = vmatprep.subr.mxu0 0.0
    %v2572 = vand.u32 %v2331, 4294901760
    %v2573 = vsub.f32 %v2331, %v2572
    %2574 = vmatpush1.msra.mxu0 %v2573
    %2575 = vmatprep.subr.mxu0 0.0
    %2576 = vmatpush2.msra.mxu0 0.0
    %2577 = vmatprep.subr.mxu0 0.0
    %2578 = vmatpush2.msra.mxu0 0.0
    %2579 = vmatprep.subr.mxu0 0.0
    %2580 = vmatpush2.msra.mxu0 0.0
    %2581 = vmatprep.subr.mxu0 0.0
    %2582 = vmatpush2.msra.mxu0 0.0
    %2583 = vmatprep.subr.mxu0 0.0
    %2584 = vmatpush2.msra.mxu0 0.0
    %2585 = vmatprep.subr.mxu0 0.0
    %2586 = vmatpush2.msra.mxu0 0.0
    %2587 = vmatprep.subr.mxu0 0.0
    %2588 = vmatpush2.msra.mxu0 0.0
    %2589 = vmatprep.subr.mxu0 0.0
    %2590 = vmatpush2.msra.mxu0 0.0
    %2591 = vmatprep.subr.mxu0 0.0
    %2592 = vmatpush2.msra.mxu0 0.0
    %2593 = vmatprep.subr.mxu0 0.0
    %2594 = vmatpush2.msra.mxu0 0.0
    %2595 = vmatprep.subr.mxu0 0.0
    %2596 = vmatpush2.msra.mxu0 0.0
    %2597 = vmatprep.subr.mxu0 0.0
    %2598 = vmatpush2.msra.mxu0 0.0
    %2599 = vmatprep.subr.mxu0 0.0
    %2600 = vmatpush2.msra.mxu0 0.0
    %2601 = vmatprep.subr.mxu0 0.0
    %2602 = vmatpush2.msra.mxu0 0.0
    %2603 = vmatprep.subr.mxu0 0.0
    %2604 = vmatpush2.msra.mxu0 0.0
    %2605 = vmatprep.subr.mxu0 0.0
    %2606 = vmatpush2.msra.mxu0 0.0
    %2607 = vmatprep.mubr.f32.mxu0 0.0
    %v2608 = vand.u32 %v33, 4294901760
    %v2609 = vsub.f32 %v33, %v2608
    %2610 = vmatmul.mubr.f32.gmra.mxu0 %v2609
    %v2611 = vpop.f32.mrf.mxu0
    %v2612 = vadd.f32 %v2518, %v2611
    %v2613 = vpop.f32.mrf.mxu0
    %2614 = vmatprep.mubr.f32.mxu0 0.0
    %v2615 = vand.u32 %v36, 4294901760
    %v2616 = vsub.f32 %v36, %v2615
    %2617 = vmatmul.mubr.f32.gmra.mxu0 %v2616
    %v2618 = vpop.f32.mrf.mxu0
    %v2619 = vadd.f32 %v2524, %v2618
    %v2620 = vpop.f32.mrf.mxu0
    %2621 = vmatprep.mubr.f32.mxu0 0.0
    %v2622 = vand.u32 %v39, 4294901760
    %v2623 = vsub.f32 %v39, %v2622
    %2624 = vmatmul.mubr.f32.gmra.mxu0 %v2623
    %v2625 = vpop.f32.mrf.mxu0
    %v2626 = vadd.f32 %v2530, %v2625
    %v2627 = vpop.f32.mrf.mxu0
    %2628 = vmatprep.mubr.f32.mxu0 0.0
    %v2629 = vand.u32 %v42, 4294901760
    %v2630 = vsub.f32 %v42, %v2629
    %2631 = vmatmul.mubr.f32.gmra.mxu0 %v2630
    %v2632 = vpop.f32.mrf.mxu0
    %v2633 = vadd.f32 %v2536, %v2632
    %v2634 = vpop.f32.mrf.mxu0
    %2635 = vdwg.mxu0
    %2636 = vmatprep.subr.mxu0 0.0
    %2637 = vmatpush1.msra.mxu0 0.0
    %2638 = vmatprep.subr.mxu0 0.0
    %2639 = vmatpush1.msra.mxu0 0.0
    %2640 = vmatprep.subr.mxu0 0.0
    %2641 = vmatpush1.msra.mxu0 0.0
    %2642 = vmatprep.subr.mxu0 0.0
    %2643 = vmatpush1.msra.mxu0 0.0
    %2644 = vmatprep.subr.mxu0 0.0
    %2645 = vmatpush1.msra.mxu0 0.0
    %2646 = vmatprep.subr.mxu0 0.0
    %2647 = vmatpush1.msra.mxu0 0.0
    %2648 = vmatprep.subr.mxu0 0.0
    %2649 = vmatpush1.msra.mxu0 0.0
    %2650 = vmatprep.subr.mxu0 0.0
    %2651 = vmatpush1.msra.mxu0 0.0
    %2652 = vmatprep.subr.mxu0 0.0
    %2653 = vmatpush1.msra.mxu0 0.0
    %2654 = vmatprep.subr.mxu0 0.0
    %2655 = vmatpush1.msra.mxu0 0.0
    %2656 = vmatprep.subr.mxu0 0.0
    %2657 = vmatpush1.msra.mxu0 0.0
    %2658 = vmatprep.subr.mxu0 0.0
    %2659 = vmatpush1.msra.mxu0 0.0
    %2660 = vmatprep.subr.mxu0 0.0
    %2661 = vmatpush1.msra.mxu0 0.0
    %2662 = vmatprep.subr.mxu0 0.0
    %2663 = vmatpush1.msra.mxu0 0.0
    %2664 = vmatprep.subr.mxu0 0.0
    %v2665 = vand.u32 %v2332, 4294901760
    %2666 = vmatpush1.msra.mxu0 %v2665
    %2667 = vmatprep.subr.mxu0 0.0
    %v2668 = vand.u32 %v2331, 4294901760
    %2669 = vmatpush1.msra.mxu0 %v2668
    %2670 = vmatprep.subr.mxu0 0.0
    %2671 = vmatpush2.msra.mxu0 0.0
    %2672 = vmatprep.subr.mxu0 0.0
    %2673 = vmatpush2.msra.mxu0 0.0
    %2674 = vmatprep.subr.mxu0 0.0
    %2675 = vmatpush2.msra.mxu0 0.0
    %2676 = vmatprep.subr.mxu0 0.0
    %2677 = vmatpush2.msra.mxu0 0.0
    %2678 = vmatprep.subr.mxu0 0.0
    %2679 = vmatpush2.msra.mxu0 0.0
    %2680 = vmatprep.subr.mxu0 0.0
    %2681 = vmatpush2.msra.mxu0 0.0
    %2682 = vmatprep.subr.mxu0 0.0
    %2683 = vmatpush2.msra.mxu0 0.0
    %2684 = vmatprep.subr.mxu0 0.0
    %2685 = vmatpush2.msra.mxu0 0.0
    %2686 = vmatprep.subr.mxu0 0.0
    %2687 = vmatpush2.msra.mxu0 0.0
    %2688 = vmatprep.subr.mxu0 0.0
    %2689 = vmatpush2.msra.mxu0 0.0
    %2690 = vmatprep.subr.mxu0 0.0
    %2691 = vmatpush2.msra.mxu0 0.0
    %2692 = vmatprep.subr.mxu0 0.0
    %2693 = vmatpush2.msra.mxu0 0.0
    %2694 = vmatprep.subr.mxu0 0.0
    %2695 = vmatpush2.msra.mxu0 0.0
    %2696 = vmatprep.subr.mxu0 0.0
    %2697 = vmatpush2.msra.mxu0 0.0
    %2698 = vmatprep.subr.mxu0 0.0
    %2699 = vmatpush2.msra.mxu0 0.0
    %2700 = vmatprep.subr.mxu0 0.0
    %2701 = vmatpush2.msra.mxu0 0.0
    %2702 = vmatprep.mubr.f32.mxu0 0.0
    %v2703 = vand.u32 %v33, 4294901760
    %v2704 = vsub.f32 %v33, %v2703
    %v2705 = vand.u32 %v2704, 4294901760
    %2706 = vmatmul.mubr.f32.gmra.mxu0 %v2705
    %v2707 = vpop.f32.mrf.mxu0
    %v2708 = vadd.f32 %v2612, %v2707
    %v2709 = vpop.f32.mrf.mxu0
    %2710 = vmatprep.mubr.f32.mxu0 0.0
    %v2711 = vand.u32 %v36, 4294901760
    %v2712 = vsub.f32 %v36, %v2711
    %v2713 = vand.u32 %v2712, 4294901760
    %2714 = vmatmul.mubr.f32.gmra.mxu0 %v2713
    %v2715 = vpop.f32.mrf.mxu0
    %v2716 = vadd.f32 %v2619, %v2715
    %v2717 = vpop.f32.mrf.mxu0
    %2718 = vmatprep.mubr.f32.mxu0 0.0
    %v2719 = vand.u32 %v39, 4294901760
    %v2720 = vsub.f32 %v39, %v2719
    %v2721 = vand.u32 %v2720, 4294901760
    %2722 = vmatmul.mubr.f32.gmra.mxu0 %v2721
    %v2723 = vpop.f32.mrf.mxu0
    %v2724 = vadd.f32 %v2626, %v2723
    %v2725 = vpop.f32.mrf.mxu0
    %2726 = vmatprep.mubr.f32.mxu0 0.0
    %v2727 = vand.u32 %v42, 4294901760
    %v2728 = vsub.f32 %v42, %v2727
    %v2729 = vand.u32 %v2728, 4294901760
    %2730 = vmatmul.mubr.f32.gmra.mxu0 %v2729
    %v2731 = vpop.f32.mrf.mxu0
    %v2732 = vadd.f32 %v2633, %v2731
    %v2733 = vpop.f32.mrf.mxu0
    %2734 = vdwg.mxu0
    %2735 = vmatprep.subr.mxu0 0.0
    %2736 = vmatpush1.msra.mxu0 0.0
    %2737 = vmatprep.subr.mxu0 0.0
    %2738 = vmatpush1.msra.mxu0 0.0
    %2739 = vmatprep.subr.mxu0 0.0
    %2740 = vmatpush1.msra.mxu0 0.0
    %2741 = vmatprep.subr.mxu0 0.0
    %2742 = vmatpush1.msra.mxu0 0.0
    %2743 = vmatprep.subr.mxu0 0.0
    %2744 = vmatpush1.msra.mxu0 0.0
    %2745 = vmatprep.subr.mxu0 0.0
    %2746 = vmatpush1.msra.mxu0 0.0
    %2747 = vmatprep.subr.mxu0 0.0
    %2748 = vmatpush1.msra.mxu0 0.0
    %2749 = vmatprep.subr.mxu0 0.0
    %2750 = vmatpush1.msra.mxu0 0.0
    %2751 = vmatprep.subr.mxu0 0.0
    %2752 = vmatpush1.msra.mxu0 0.0
    %2753 = vmatprep.subr.mxu0 0.0
    %2754 = vmatpush1.msra.mxu0 0.0
    %2755 = vmatprep.subr.mxu0 0.0
    %2756 = vmatpush1.msra.mxu0 0.0
    %2757 = vmatprep.subr.mxu0 0.0
    %2758 = vmatpush1.msra.mxu0 0.0
    %2759 = vmatprep.subr.mxu0 0.0
    %2760 = vmatpush1.msra.mxu0 0.0
    %2761 = vmatprep.subr.mxu0 0.0
    %2762 = vmatpush1.msra.mxu0 0.0
    %2763 = vmatprep.subr.mxu0 0.0
    %v2764 = vand.u32 %v2332, 4294901760
    %v2765 = vsub.f32 %v2332, %v2764
    %v2766 = vand.u32 %v2765, 4294901760
    %2767 = vmatpush1.msra.mxu0 %v2766
    %2768 = vmatprep.subr.mxu0 0.0
    %v2769 = vand.u32 %v2331, 4294901760
    %v2770 = vsub.f32 %v2331, %v2769
    %v2771 = vand.u32 %v2770, 4294901760
    %2772 = vmatpush1.msra.mxu0 %v2771
    %2773 = vmatprep.subr.mxu0 0.0
    %2774 = vmatpush2.msra.mxu0 0.0
    %2775 = vmatprep.subr.mxu0 0.0
    %2776 = vmatpush2.msra.mxu0 0.0
    %2777 = vmatprep.subr.mxu0 0.0
    %2778 = vmatpush2.msra.mxu0 0.0
    %2779 = vmatprep.subr.mxu0 0.0
    %2780 = vmatpush2.msra.mxu0 0.0
    %2781 = vmatprep.subr.mxu0 0.0
    %2782 = vmatpush2.msra.mxu0 0.0
    %2783 = vmatprep.subr.mxu0 0.0
    %2784 = vmatpush2.msra.mxu0 0.0
    %2785 = vmatprep.subr.mxu0 0.0
    %2786 = vmatpush2.msra.mxu0 0.0
    %2787 = vmatprep.subr.mxu0 0.0
    %2788 = vmatpush2.msra.mxu0 0.0
    %2789 = vmatprep.subr.mxu0 0.0
    %2790 = vmatpush2.msra.mxu0 0.0
    %2791 = vmatprep.subr.mxu0 0.0
    %2792 = vmatpush2.msra.mxu0 0.0
    %2793 = vmatprep.subr.mxu0 0.0
    %2794 = vmatpush2.msra.mxu0 0.0
    %2795 = vmatprep.subr.mxu0 0.0
    %2796 = vmatpush2.msra.mxu0 0.0
    %2797 = vmatprep.subr.mxu0 0.0
    %2798 = vmatpush2.msra.mxu0 0.0
    %2799 = vmatprep.subr.mxu0 0.0
    %2800 = vmatpush2.msra.mxu0 0.0
    %2801 = vmatprep.subr.mxu0 0.0
    %2802 = vmatpush2.msra.mxu0 0.0
    %2803 = vmatprep.subr.mxu0 0.0
    %2804 = vmatpush2.msra.mxu0 0.0
    %2805 = vmatprep.mubr.f32.mxu0 0.0
    %v2806 = vand.u32 %v33, 4294901760
    %2807 = vmatmul.mubr.f32.gmra.mxu0 %v2806
    %v2808 = vpop.f32.mrf.mxu0
    %v2809 = vadd.f32 %v2708, %v2808
    %v2810 = vpop.f32.mrf.mxu0
    %2811 = vmatprep.mubr.f32.mxu0 0.0
    %v2812 = vand.u32 %v36, 4294901760
    %2813 = vmatmul.mubr.f32.gmra.mxu0 %v2812
    %v2814 = vpop.f32.mrf.mxu0
    %v2815 = vadd.f32 %v2716, %v2814
    %v2816 = vpop.f32.mrf.mxu0
    %2817 = vmatprep.mubr.f32.mxu0 0.0
    %v2818 = vand.u32 %v39, 4294901760
    %2819 = vmatmul.mubr.f32.gmra.mxu0 %v2818
    %v2820 = vpop.f32.mrf.mxu0
    %v2821 = vadd.f32 %v2724, %v2820
    %v2822 = vpop.f32.mrf.mxu0
    %2823 = vmatprep.mubr.f32.mxu0 0.0
    %v2824 = vand.u32 %v42, 4294901760
    %2825 = vmatmul.mubr.f32.gmra.mxu0 %v2824
    %v2826 = vpop.f32.mrf.mxu0
    %v2827 = vadd.f32 %v2732, %v2826
    %v2828 = vpop.f32.mrf.mxu0
    %2829 = vdwg.mxu0
    %2830 = vmatprep.subr.mxu0 0.0
    %2831 = vmatpush1.msra.mxu0 0.0
    %2832 = vmatprep.subr.mxu0 0.0
    %2833 = vmatpush1.msra.mxu0 0.0
    %2834 = vmatprep.subr.mxu0 0.0
    %2835 = vmatpush1.msra.mxu0 0.0
    %2836 = vmatprep.subr.mxu0 0.0
    %2837 = vmatpush1.msra.mxu0 0.0
    %2838 = vmatprep.subr.mxu0 0.0
    %2839 = vmatpush1.msra.mxu0 0.0
    %2840 = vmatprep.subr.mxu0 0.0
    %2841 = vmatpush1.msra.mxu0 0.0
    %2842 = vmatprep.subr.mxu0 0.0
    %2843 = vmatpush1.msra.mxu0 0.0
    %2844 = vmatprep.subr.mxu0 0.0
    %2845 = vmatpush1.msra.mxu0 0.0
    %2846 = vmatprep.subr.mxu0 0.0
    %2847 = vmatpush1.msra.mxu0 0.0
    %2848 = vmatprep.subr.mxu0 0.0
    %2849 = vmatpush1.msra.mxu0 0.0
    %2850 = vmatprep.subr.mxu0 0.0
    %2851 = vmatpush1.msra.mxu0 0.0
    %2852 = vmatprep.subr.mxu0 0.0
    %2853 = vmatpush1.msra.mxu0 0.0
    %2854 = vmatprep.subr.mxu0 0.0
    %2855 = vmatpush1.msra.mxu0 0.0
    %2856 = vmatprep.subr.mxu0 0.0
    %2857 = vmatpush1.msra.mxu0 0.0
    %2858 = vmatprep.subr.mxu0 0.0
    %v2859 = vand.u32 %v2332, 4294901760
    %2860 = vmatpush1.msra.mxu0 %v2859
    %2861 = vmatprep.subr.mxu0 0.0
    %v2862 = vand.u32 %v2331, 4294901760
    %2863 = vmatpush1.msra.mxu0 %v2862
    %2864 = vmatprep.subr.mxu0 0.0
    %2865 = vmatpush2.msra.mxu0 0.0
    %2866 = vmatprep.subr.mxu0 0.0
    %2867 = vmatpush2.msra.mxu0 0.0
    %2868 = vmatprep.subr.mxu0 0.0
    %2869 = vmatpush2.msra.mxu0 0.0
    %2870 = vmatprep.subr.mxu0 0.0
    %2871 = vmatpush2.msra.mxu0 0.0
    %2872 = vmatprep.subr.mxu0 0.0
    %2873 = vmatpush2.msra.mxu0 0.0
    %2874 = vmatprep.subr.mxu0 0.0
    %2875 = vmatpush2.msra.mxu0 0.0
    %2876 = vmatprep.subr.mxu0 0.0
    %2877 = vmatpush2.msra.mxu0 0.0
    %2878 = vmatprep.subr.mxu0 0.0
    %2879 = vmatpush2.msra.mxu0 0.0
    %2880 = vmatprep.subr.mxu0 0.0
    %2881 = vmatpush2.msra.mxu0 0.0
    %2882 = vmatprep.subr.mxu0 0.0
    %2883 = vmatpush2.msra.mxu0 0.0
    %2884 = vmatprep.subr.mxu0 0.0
    %2885 = vmatpush2.msra.mxu0 0.0
    %2886 = vmatprep.subr.mxu0 0.0
    %2887 = vmatpush2.msra.mxu0 0.0
    %2888 = vmatprep.subr.mxu0 0.0
    %2889 = vmatpush2.msra.mxu0 0.0
    %2890 = vmatprep.subr.mxu0 0.0
    %2891 = vmatpush2.msra.mxu0 0.0
    %2892 = vmatprep.subr.mxu0 0.0
    %2893 = vmatpush2.msra.mxu0 0.0
    %2894 = vmatprep.subr.mxu0 0.0
    %2895 = vmatpush2.msra.mxu0 0.0
    %2896 = vmatprep.mubr.f32.mxu0 0.0
    %v2897 = vand.u32 %v33, 4294901760
    %2898 = vmatmul.mubr.f32.gmra.mxu0 %v2897
    %v2899 = vpop.f32.mrf.mxu0
    %v2900 = vadd.f32 %v2809, %v2899
    %v2901 = vpop.f32.mrf.mxu0
    %2902 = vmatprep.mubr.f32.mxu0 0.0
    %v2903 = vand.u32 %v36, 4294901760
    %2904 = vmatmul.mubr.f32.gmra.mxu0 %v2903
    %v2905 = vpop.f32.mrf.mxu0
    %v2906 = vadd.f32 %v2815, %v2905
    %v2907 = vpop.f32.mrf.mxu0
    %2908 = vmatprep.mubr.f32.mxu0 0.0
    %v2909 = vand.u32 %v39, 4294901760
    %2910 = vmatmul.mubr.f32.gmra.mxu0 %v2909
    %v2911 = vpop.f32.mrf.mxu0
    %v2912 = vadd.f32 %v2821, %v2911
    %v2913 = vpop.f32.mrf.mxu0
    %2914 = vmatprep.mubr.f32.mxu0 0.0
    %v2915 = vand.u32 %v42, 4294901760
    %2916 = vmatmul.mubr.f32.gmra.mxu0 %v2915
    %v2917 = vpop.f32.mrf.mxu0
    %v2918 = vadd.f32 %v2827, %v2917
    %v2919 = vpop.f32.mrf.mxu0
    %2920 = vdwg.mxu0
    %v2921 = vadd.f32 %v2900, %v635
    %v2922 = vadd.f32 %v2906, %v640
    %2923 = vxpose.xlu0.b32.start [1/16] %v2328, 128
    %2924 = vxpose.xlu0.b32.cont [2/16] %v2329, 128
    %2925 = vxpose.xlu0.b32.cont [3/16] 0.0, 128
    %2926 = vxpose.xlu0.b32.cont [4/16] 0.0, 128
    %2927 = vxpose.xlu0.b32.cont [5/16] 0.0, 128
    %2928 = vxpose.xlu0.b32.cont [6/16] 0.0, 128
    %2929 = vxpose.xlu0.b32.cont [7/16] 0.0, 128
    %2930 = vxpose.xlu0.b32.cont [8/16] 0.0, 128
    %2931 = vxpose.xlu0.b32.cont [9/16] 0.0, 128
    %2932 = vxpose.xlu0.b32.cont [10/16] 0.0, 128
    %2933 = vxpose.xlu0.b32.cont [11/16] 0.0, 128
    %2934 = vxpose.xlu0.b32.cont [12/16] 0.0, 128
    %2935 = vxpose.xlu0.b32.cont [13/16] 0.0, 128
    %2936 = vxpose.xlu0.b32.cont [14/16] 0.0, 128
    %2937 = vxpose.xlu0.b32.cont [15/16] 0.0, 128
    %2938 = vxpose.xlu0.b32.end [16/16] 0.0, 128
    %v2939 = vpop.trf.xlu0
    %v2940 = vpop.trf.xlu0
    %v2941 = vpop.trf.xlu0
    %v2942 = vpop.trf.xlu0
    %v2943 = vpop.trf.xlu0
    %v2944 = vpop.trf.xlu0
    %v2945 = vpop.trf.xlu0
    %v2946 = vpop.trf.xlu0
    %v2947 = vpop.trf.xlu0
    %v2948 = vpop.trf.xlu0
    %v2949 = vpop.trf.xlu0
    %v2950 = vpop.trf.xlu0
    %v2951 = vpop.trf.xlu0
    %v2952 = vpop.trf.xlu0
    %v2953 = vpop.trf.xlu0
    %v2954 = vpop.trf.xlu0
    %v2956 = vsel %vm31, %v2939, 0
    %v2959 = vsel %vm31, %v2940, 0
    %v2962 = vsel %vm31, %v2941, 0
    %v2965 = vsel %vm31, %v2942, 0
    %2967 = vmatprep.subr.mxu0 0.0
    %2968 = vmatpush1.msra.mxu0 0.0
    %2969 = vmatprep.subr.mxu0 0.0
    %2970 = vmatpush1.msra.mxu0 0.0
    %2971 = vmatprep.subr.mxu0 0.0
    %2972 = vmatpush1.msra.mxu0 0.0
    %2973 = vmatprep.subr.mxu0 0.0
    %2974 = vmatpush1.msra.mxu0 0.0
    %2975 = vmatprep.subr.mxu0 0.0
    %2976 = vmatpush1.msra.mxu0 0.0
    %2977 = vmatprep.subr.mxu0 0.0
    %2978 = vmatpush1.msra.mxu0 0.0
    %2979 = vmatprep.subr.mxu0 0.0
    %2980 = vmatpush1.msra.mxu0 0.0
    %2981 = vmatprep.subr.mxu0 0.0
    %2982 = vmatpush1.msra.mxu0 0.0
    %2983 = vmatprep.subr.mxu0 0.0
    %2984 = vmatpush1.msra.mxu0 0.0
    %2985 = vmatprep.subr.mxu0 0.0
    %2986 = vmatpush1.msra.mxu0 0.0
    %2987 = vmatprep.subr.mxu0 0.0
    %2988 = vmatpush1.msra.mxu0 0.0
    %2989 = vmatprep.subr.mxu0 0.0
    %2990 = vmatpush1.msra.mxu0 0.0
    %2991 = vmatprep.subr.mxu0 0.0
    %2992 = vmatpush1.msra.mxu0 0.0
    %2993 = vmatprep.subr.mxu0 0.0
    %2994 = vmatpush1.msra.mxu0 0.0
    %2995 = vmatprep.subr.mxu0 0.0
    %v2996 = vand.u32 %v2918, 4294901760
    %2997 = vmatpush1.msra.mxu0 %v2996
    %2998 = vmatprep.subr.mxu0 0.0
    %v2999 = vand.u32 %v2912, 4294901760
    %3000 = vmatpush1.msra.mxu0 %v2999
    %3001 = vmatprep.subr.mxu0 0.0
    %3002 = vmatpush2.msra.mxu0 0.0
    %3003 = vmatprep.subr.mxu0 0.0
    %3004 = vmatpush2.msra.mxu0 0.0
    %3005 = vmatprep.subr.mxu0 0.0
    %3006 = vmatpush2.msra.mxu0 0.0
    %3007 = vmatprep.subr.mxu0 0.0
    %3008 = vmatpush2.msra.mxu0 0.0
    %3009 = vmatprep.subr.mxu0 0.0
    %3010 = vmatpush2.msra.mxu0 0.0
    %3011 = vmatprep.subr.mxu0 0.0
    %3012 = vmatpush2.msra.mxu0 0.0
    %3013 = vmatprep.subr.mxu0 0.0
    %3014 = vmatpush2.msra.mxu0 0.0
    %3015 = vmatprep.subr.mxu0 0.0
    %3016 = vmatpush2.msra.mxu0 0.0
    %3017 = vmatprep.subr.mxu0 0.0
    %3018 = vmatpush2.msra.mxu0 0.0
    %3019 = vmatprep.subr.mxu0 0.0
    %3020 = vmatpush2.msra.mxu0 0.0
    %3021 = vmatprep.subr.mxu0 0.0
    %3022 = vmatpush2.msra.mxu0 0.0
    %3023 = vmatprep.subr.mxu0 0.0
    %3024 = vmatpush2.msra.mxu0 0.0
    %3025 = vmatprep.subr.mxu0 0.0
    %3026 = vmatpush2.msra.mxu0 0.0
    %3027 = vmatprep.subr.mxu0 0.0
    %3028 = vmatpush2.msra.mxu0 0.0
    %3029 = vmatprep.subr.mxu0 0.0
    %3030 = vmatpush2.msra.mxu0 0.0
    %3031 = vmatprep.subr.mxu0 0.0
    %3032 = vmatpush2.msra.mxu0 0.0
    %3033 = vmatprep.mubr.f32.mxu0 0.0
    %v3034 = vand.u32 %v2956, 4294901760
    %v3035 = vsub.f32 %v2956, %v3034
    %v3036 = vand.u32 %v3035, 4294901760
    %v3037 = vsub.f32 %v3035, %v3036
    %v3038 = vand.u32 %v3037, 4294901760
    %3039 = vmatmul.mubr.f32.gmra.mxu0 %v3038
    %v3040 = vpop.f32.mrf.mxu0
    %v3041 = vadd.f32 0.0, %v3040
    %v3042 = vpop.f32.mrf.mxu0
    %3043 = vmatprep.mubr.f32.mxu0 0.0
    %v3044 = vand.u32 %v2959, 4294901760
    %v3045 = vsub.f32 %v2959, %v3044
    %v3046 = vand.u32 %v3045, 4294901760
    %v3047 = vsub.f32 %v3045, %v3046
    %v3048 = vand.u32 %v3047, 4294901760
    %3049 = vmatmul.mubr.f32.gmra.mxu0 %v3048
    %v3050 = vpop.f32.mrf.mxu0
    %v3051 = vadd.f32 0.0, %v3050
    %v3052 = vpop.f32.mrf.mxu0
    %3053 = vmatprep.mubr.f32.mxu0 0.0
    %v3054 = vand.u32 %v2962, 4294901760
    %v3055 = vsub.f32 %v2962, %v3054
    %v3056 = vand.u32 %v3055, 4294901760
    %v3057 = vsub.f32 %v3055, %v3056
    %v3058 = vand.u32 %v3057, 4294901760
    %3059 = vmatmul.mubr.f32.gmra.mxu0 %v3058
    %v3060 = vpop.f32.mrf.mxu0
    %v3061 = vadd.f32 0.0, %v3060
    %v3062 = vpop.f32.mrf.mxu0
    %3063 = vmatprep.mubr.f32.mxu0 0.0
    %v3064 = vand.u32 %v2965, 4294901760
    %v3065 = vsub.f32 %v2965, %v3064
    %v3066 = vand.u32 %v3065, 4294901760
    %v3067 = vsub.f32 %v3065, %v3066
    %v3068 = vand.u32 %v3067, 4294901760
    %3069 = vmatmul.mubr.f32.gmra.mxu0 %v3068
    %v3070 = vpop.f32.mrf.mxu0
    %v3071 = vadd.f32 0.0, %v3070
    %v3072 = vpop.f32.mrf.mxu0
    %3073 = vdwg.mxu0
    %3074 = vmatprep.subr.mxu0 0.0
    %3075 = vmatpush1.msra.mxu0 0.0
    %3076 = vmatprep.subr.mxu0 0.0
    %3077 = vmatpush1.msra.mxu0 0.0
    %3078 = vmatprep.subr.mxu0 0.0
    %3079 = vmatpush1.msra.mxu0 0.0
    %3080 = vmatprep.subr.mxu0 0.0
    %3081 = vmatpush1.msra.mxu0 0.0
    %3082 = vmatprep.subr.mxu0 0.0
    %3083 = vmatpush1.msra.mxu0 0.0
    %3084 = vmatprep.subr.mxu0 0.0
    %3085 = vmatpush1.msra.mxu0 0.0
    %3086 = vmatprep.subr.mxu0 0.0
    %3087 = vmatpush1.msra.mxu0 0.0
    %3088 = vmatprep.subr.mxu0 0.0
    %3089 = vmatpush1.msra.mxu0 0.0
    %3090 = vmatprep.subr.mxu0 0.0
    %3091 = vmatpush1.msra.mxu0 0.0
    %3092 = vmatprep.subr.mxu0 0.0
    %3093 = vmatpush1.msra.mxu0 0.0
    %3094 = vmatprep.subr.mxu0 0.0
    %3095 = vmatpush1.msra.mxu0 0.0
    %3096 = vmatprep.subr.mxu0 0.0
    %3097 = vmatpush1.msra.mxu0 0.0
    %3098 = vmatprep.subr.mxu0 0.0
    %3099 = vmatpush1.msra.mxu0 0.0
    %3100 = vmatprep.subr.mxu0 0.0
    %3101 = vmatpush1.msra.mxu0 0.0
    %3102 = vmatprep.subr.mxu0 0.0
    %v3103 = vand.u32 %v2918, 4294901760
    %v3104 = vsub.f32 %v2918, %v3103
    %v3105 = vand.u32 %v3104, 4294901760
    %v3106 = vsub.f32 %v3104, %v3105
    %v3107 = vand.u32 %v3106, 4294901760
    %3108 = vmatpush1.msra.mxu0 %v3107
    %3109 = vmatprep.subr.mxu0 0.0
    %v3110 = vand.u32 %v2912, 4294901760
    %v3111 = vsub.f32 %v2912, %v3110
    %v3112 = vand.u32 %v3111, 4294901760
    %v3113 = vsub.f32 %v3111, %v3112
    %v3114 = vand.u32 %v3113, 4294901760
    %3115 = vmatpush1.msra.mxu0 %v3114
    %3116 = vmatprep.subr.mxu0 0.0
    %3117 = vmatpush2.msra.mxu0 0.0
    %3118 = vmatprep.subr.mxu0 0.0
    %3119 = vmatpush2.msra.mxu0 0.0
    %3120 = vmatprep.subr.mxu0 0.0
    %3121 = vmatpush2.msra.mxu0 0.0
    %3122 = vmatprep.subr.mxu0 0.0
    %3123 = vmatpush2.msra.mxu0 0.0
    %3124 = vmatprep.subr.mxu0 0.0
    %3125 = vmatpush2.msra.mxu0 0.0
    %3126 = vmatprep.subr.mxu0 0.0
    %3127 = vmatpush2.msra.mxu0 0.0
    %3128 = vmatprep.subr.mxu0 0.0
    %3129 = vmatpush2.msra.mxu0 0.0
    %3130 = vmatprep.subr.mxu0 0.0
    %3131 = vmatpush2.msra.mxu0 0.0
    %3132 = vmatprep.subr.mxu0 0.0
    %3133 = vmatpush2.msra.mxu0 0.0
    %3134 = vmatprep.subr.mxu0 0.0
    %3135 = vmatpush2.msra.mxu0 0.0
    %3136 = vmatprep.subr.mxu0 0.0
    %3137 = vmatpush2.msra.mxu0 0.0
    %3138 = vmatprep.subr.mxu0 0.0
    %3139 = vmatpush2.msra.mxu0 0.0
    %3140 = vmatprep.subr.mxu0 0.0
    %3141 = vmatpush2.msra.mxu0 0.0
    %3142 = vmatprep.subr.mxu0 0.0
    %3143 = vmatpush2.msra.mxu0 0.0
    %3144 = vmatprep.subr.mxu0 0.0
    %3145 = vmatpush2.msra.mxu0 0.0
    %3146 = vmatprep.subr.mxu0 0.0
    %3147 = vmatpush2.msra.mxu0 0.0
    %3148 = vmatprep.mubr.f32.mxu0 0.0
    %v3149 = vand.u32 %v2956, 4294901760
    %3150 = vmatmul.mubr.f32.gmra.mxu0 %v3149
    %v3151 = vpop.f32.mrf.mxu0
    %v3152 = vadd.f32 %v3041, %v3151
    %v3153 = vpop.f32.mrf.mxu0
    %3154 = vmatprep.mubr.f32.mxu0 0.0
    %v3155 = vand.u32 %v2959, 4294901760
    %3156 = vmatmul.mubr.f32.gmra.mxu0 %v3155
    %v3157 = vpop.f32.mrf.mxu0
    %v3158 = vadd.f32 %v3051, %v3157
    %v3159 = vpop.f32.mrf.mxu0
    %3160 = vmatprep.mubr.f32.mxu0 0.0
    %v3161 = vand.u32 %v2962, 4294901760
    %3162 = vmatmul.mubr.f32.gmra.mxu0 %v3161
    %v3163 = vpop.f32.mrf.mxu0
    %v3164 = vadd.f32 %v3061, %v3163
    %v3165 = vpop.f32.mrf.mxu0
    %3166 = vmatprep.mubr.f32.mxu0 0.0
    %v3167 = vand.u32 %v2965, 4294901760
    %3168 = vmatmul.mubr.f32.gmra.mxu0 %v3167
    %v3169 = vpop.f32.mrf.mxu0
    %v3170 = vadd.f32 %v3071, %v3169
    %v3171 = vpop.f32.mrf.mxu0
    %3172 = vdwg.mxu0
    %3173 = vmatprep.subr.mxu0 0.0
    %3174 = vmatpush1.msra.mxu0 0.0
    %3175 = vmatprep.subr.mxu0 0.0
    %3176 = vmatpush1.msra.mxu0 0.0
    %3177 = vmatprep.subr.mxu0 0.0
    %3178 = vmatpush1.msra.mxu0 0.0
    %3179 = vmatprep.subr.mxu0 0.0
    %3180 = vmatpush1.msra.mxu0 0.0
    %3181 = vmatprep.subr.mxu0 0.0
    %3182 = vmatpush1.msra.mxu0 0.0
    %3183 = vmatprep.subr.mxu0 0.0
    %3184 = vmatpush1.msra.mxu0 0.0
    %3185 = vmatprep.subr.mxu0 0.0
    %3186 = vmatpush1.msra.mxu0 0.0
    %3187 = vmatprep.subr.mxu0 0.0
    %3188 = vmatpush1.msra.mxu0 0.0
    %3189 = vmatprep.subr.mxu0 0.0
    %3190 = vmatpush1.msra.mxu0 0.0
    %3191 = vmatprep.subr.mxu0 0.0
    %3192 = vmatpush1.msra.mxu0 0.0
    %3193 = vmatprep.subr.mxu0 0.0
    %3194 = vmatpush1.msra.mxu0 0.0
    %3195 = vmatprep.subr.mxu0 0.0
    %3196 = vmatpush1.msra.mxu0 0.0
    %3197 = vmatprep.subr.mxu0 0.0
    %3198 = vmatpush1.msra.mxu0 0.0
    %3199 = vmatprep.subr.mxu0 0.0
    %3200 = vmatpush1.msra.mxu0 0.0
    %3201 = vmatprep.subr.mxu0 0.0
    %v3202 = vand.u32 %v2918, 4294901760
    %v3203 = vsub.f32 %v2918, %v3202
    %3204 = vmatpush1.msra.mxu0 %v3203
    %3205 = vmatprep.subr.mxu0 0.0
    %v3206 = vand.u32 %v2912, 4294901760
    %v3207 = vsub.f32 %v2912, %v3206
    %3208 = vmatpush1.msra.mxu0 %v3207
    %3209 = vmatprep.subr.mxu0 0.0
    %3210 = vmatpush2.msra.mxu0 0.0
    %3211 = vmatprep.subr.mxu0 0.0
    %3212 = vmatpush2.msra.mxu0 0.0
    %3213 = vmatprep.subr.mxu0 0.0
    %3214 = vmatpush2.msra.mxu0 0.0
    %3215 = vmatprep.subr.mxu0 0.0
    %3216 = vmatpush2.msra.mxu0 0.0
    %3217 = vmatprep.subr.mxu0 0.0
    %3218 = vmatpush2.msra.mxu0 0.0
    %3219 = vmatprep.subr.mxu0 0.0
    %3220 = vmatpush2.msra.mxu0 0.0
    %3221 = vmatprep.subr.mxu0 0.0
    %3222 = vmatpush2.msra.mxu0 0.0
    %3223 = vmatprep.subr.mxu0 0.0
    %3224 = vmatpush2.msra.mxu0 0.0
    %3225 = vmatprep.subr.mxu0 0.0
    %3226 = vmatpush2.msra.mxu0 0.0
    %3227 = vmatprep.subr.mxu0 0.0
    %3228 = vmatpush2.msra.mxu0 0.0
    %3229 = vmatprep.subr.mxu0 0.0
    %3230 = vmatpush2.msra.mxu0 0.0
    %3231 = vmatprep.subr.mxu0 0.0
    %3232 = vmatpush2.msra.mxu0 0.0
    %3233 = vmatprep.subr.mxu0 0.0
    %3234 = vmatpush2.msra.mxu0 0.0
    %3235 = vmatprep.subr.mxu0 0.0
    %3236 = vmatpush2.msra.mxu0 0.0
    %3237 = vmatprep.subr.mxu0 0.0
    %3238 = vmatpush2.msra.mxu0 0.0
    %3239 = vmatprep.subr.mxu0 0.0
    %3240 = vmatpush2.msra.mxu0 0.0
    %3241 = vmatprep.mubr.f32.mxu0 0.0
    %v3242 = vand.u32 %v2956, 4294901760
    %v3243 = vsub.f32 %v2956, %v3242
    %3244 = vmatmul.mubr.f32.gmra.mxu0 %v3243
    %v3245 = vpop.f32.mrf.mxu0
    %v3246 = vadd.f32 %v3152, %v3245
    %v3247 = vpop.f32.mrf.mxu0
    %3248 = vmatprep.mubr.f32.mxu0 0.0
    %v3249 = vand.u32 %v2959, 4294901760
    %v3250 = vsub.f32 %v2959, %v3249
    %3251 = vmatmul.mubr.f32.gmra.mxu0 %v3250
    %v3252 = vpop.f32.mrf.mxu0
    %v3253 = vadd.f32 %v3158, %v3252
    %v3254 = vpop.f32.mrf.mxu0
    %3255 = vmatprep.mubr.f32.mxu0 0.0
    %v3256 = vand.u32 %v2962, 4294901760
    %v3257 = vsub.f32 %v2962, %v3256
    %3258 = vmatmul.mubr.f32.gmra.mxu0 %v3257
    %v3259 = vpop.f32.mrf.mxu0
    %v3260 = vadd.f32 %v3164, %v3259
    %v3261 = vpop.f32.mrf.mxu0
    %3262 = vmatprep.mubr.f32.mxu0 0.0
    %v3263 = vand.u32 %v2965, 4294901760
    %v3264 = vsub.f32 %v2965, %v3263
    %3265 = vmatmul.mubr.f32.gmra.mxu0 %v3264
    %v3266 = vpop.f32.mrf.mxu0
    %v3267 = vadd.f32 %v3170, %v3266
    %v3268 = vpop.f32.mrf.mxu0
    %3269 = vdwg.mxu0
    %3270 = vmatprep.subr.mxu0 0.0
    %3271 = vmatpush1.msra.mxu0 0.0
    %3272 = vmatprep.subr.mxu0 0.0
    %3273 = vmatpush1.msra.mxu0 0.0
    %3274 = vmatprep.subr.mxu0 0.0
    %3275 = vmatpush1.msra.mxu0 0.0
    %3276 = vmatprep.subr.mxu0 0.0
    %3277 = vmatpush1.msra.mxu0 0.0
    %3278 = vmatprep.subr.mxu0 0.0
    %3279 = vmatpush1.msra.mxu0 0.0
    %3280 = vmatprep.subr.mxu0 0.0
    %3281 = vmatpush1.msra.mxu0 0.0
    %3282 = vmatprep.subr.mxu0 0.0
    %3283 = vmatpush1.msra.mxu0 0.0
    %3284 = vmatprep.subr.mxu0 0.0
    %3285 = vmatpush1.msra.mxu0 0.0
    %3286 = vmatprep.subr.mxu0 0.0
    %3287 = vmatpush1.msra.mxu0 0.0
    %3288 = vmatprep.subr.mxu0 0.0
    %3289 = vmatpush1.msra.mxu0 0.0
    %3290 = vmatprep.subr.mxu0 0.0
    %3291 = vmatpush1.msra.mxu0 0.0
    %3292 = vmatprep.subr.mxu0 0.0
    %3293 = vmatpush1.msra.mxu0 0.0
    %3294 = vmatprep.subr.mxu0 0.0
    %3295 = vmatpush1.msra.mxu0 0.0
    %3296 = vmatprep.subr.mxu0 0.0
    %3297 = vmatpush1.msra.mxu0 0.0
    %3298 = vmatprep.subr.mxu0 0.0
    %v3299 = vand.u32 %v2918, 4294901760
    %3300 = vmatpush1.msra.mxu0 %v3299
    %3301 = vmatprep.subr.mxu0 0.0
    %v3302 = vand.u32 %v2912, 4294901760
    %3303 = vmatpush1.msra.mxu0 %v3302
    %3304 = vmatprep.subr.mxu0 0.0
    %3305 = vmatpush2.msra.mxu0 0.0
    %3306 = vmatprep.subr.mxu0 0.0
    %3307 = vmatpush2.msra.mxu0 0.0
    %3308 = vmatprep.subr.mxu0 0.0
    %3309 = vmatpush2.msra.mxu0 0.0
    %3310 = vmatprep.subr.mxu0 0.0
    %3311 = vmatpush2.msra.mxu0 0.0
    %3312 = vmatprep.subr.mxu0 0.0
    %3313 = vmatpush2.msra.mxu0 0.0
    %3314 = vmatprep.subr.mxu0 0.0
    %3315 = vmatpush2.msra.mxu0 0.0
    %3316 = vmatprep.subr.mxu0 0.0
    %3317 = vmatpush2.msra.mxu0 0.0
    %3318 = vmatprep.subr.mxu0 0.0
    %3319 = vmatpush2.msra.mxu0 0.0
    %3320 = vmatprep.subr.mxu0 0.0
    %3321 = vmatpush2.msra.mxu0 0.0
    %3322 = vmatprep.subr.mxu0 0.0
    %3323 = vmatpush2.msra.mxu0 0.0
    %3324 = vmatprep.subr.mxu0 0.0
    %3325 = vmatpush2.msra.mxu0 0.0
    %3326 = vmatprep.subr.mxu0 0.0
    %3327 = vmatpush2.msra.mxu0 0.0
    %3328 = vmatprep.subr.mxu0 0.0
    %3329 = vmatpush2.msra.mxu0 0.0
    %3330 = vmatprep.subr.mxu0 0.0
    %3331 = vmatpush2.msra.mxu0 0.0
    %3332 = vmatprep.subr.mxu0 0.0
    %3333 = vmatpush2.msra.mxu0 0.0
    %3334 = vmatprep.subr.mxu0 0.0
    %3335 = vmatpush2.msra.mxu0 0.0
    %3336 = vmatprep.mubr.f32.mxu0 0.0
    %v3337 = vand.u32 %v2956, 4294901760
    %v3338 = vsub.f32 %v2956, %v3337
    %v3339 = vand.u32 %v3338, 4294901760
    %3340 = vmatmul.mubr.f32.gmra.mxu0 %v3339
    %v3341 = vpop.f32.mrf.mxu0
    %v3342 = vadd.f32 %v3246, %v3341
    %v3343 = vpop.f32.mrf.mxu0
    %3344 = vmatprep.mubr.f32.mxu0 0.0
    %v3345 = vand.u32 %v2959, 4294901760
    %v3346 = vsub.f32 %v2959, %v3345
    %v3347 = vand.u32 %v3346, 4294901760
    %3348 = vmatmul.mubr.f32.gmra.mxu0 %v3347
    %v3349 = vpop.f32.mrf.mxu0
    %v3350 = vadd.f32 %v3253, %v3349
    %v3351 = vpop.f32.mrf.mxu0
    %3352 = vmatprep.mubr.f32.mxu0 0.0
    %v3353 = vand.u32 %v2962, 4294901760
    %v3354 = vsub.f32 %v2962, %v3353
    %v3355 = vand.u32 %v3354, 4294901760
    %3356 = vmatmul.mubr.f32.gmra.mxu0 %v3355
    %v3357 = vpop.f32.mrf.mxu0
    %v3358 = vadd.f32 %v3260, %v3357
    %v3359 = vpop.f32.mrf.mxu0
    %3360 = vmatprep.mubr.f32.mxu0 0.0
    %v3361 = vand.u32 %v2965, 4294901760
    %v3362 = vsub.f32 %v2965, %v3361
    %v3363 = vand.u32 %v3362, 4294901760
    %3364 = vmatmul.mubr.f32.gmra.mxu0 %v3363
    %v3365 = vpop.f32.mrf.mxu0
    %v3366 = vadd.f32 %v3267, %v3365
    %v3367 = vpop.f32.mrf.mxu0
    %3368 = vdwg.mxu0
    %3369 = vmatprep.subr.mxu0 0.0
    %3370 = vmatpush1.msra.mxu0 0.0
    %3371 = vmatprep.subr.mxu0 0.0
    %3372 = vmatpush1.msra.mxu0 0.0
    %3373 = vmatprep.subr.mxu0 0.0
    %3374 = vmatpush1.msra.mxu0 0.0
    %3375 = vmatprep.subr.mxu0 0.0
    %3376 = vmatpush1.msra.mxu0 0.0
    %3377 = vmatprep.subr.mxu0 0.0
    %3378 = vmatpush1.msra.mxu0 0.0
    %3379 = vmatprep.subr.mxu0 0.0
    %3380 = vmatpush1.msra.mxu0 0.0
    %3381 = vmatprep.subr.mxu0 0.0
    %3382 = vmatpush1.msra.mxu0 0.0
    %3383 = vmatprep.subr.mxu0 0.0
    %3384 = vmatpush1.msra.mxu0 0.0
    %3385 = vmatprep.subr.mxu0 0.0
    %3386 = vmatpush1.msra.mxu0 0.0
    %3387 = vmatprep.subr.mxu0 0.0
    %3388 = vmatpush1.msra.mxu0 0.0
    %3389 = vmatprep.subr.mxu0 0.0
    %3390 = vmatpush1.msra.mxu0 0.0
    %3391 = vmatprep.subr.mxu0 0.0
    %3392 = vmatpush1.msra.mxu0 0.0
    %3393 = vmatprep.subr.mxu0 0.0
    %3394 = vmatpush1.msra.mxu0 0.0
    %3395 = vmatprep.subr.mxu0 0.0
    %3396 = vmatpush1.msra.mxu0 0.0
    %3397 = vmatprep.subr.mxu0 0.0
    %v3398 = vand.u32 %v2918, 4294901760
    %v3399 = vsub.f32 %v2918, %v3398
    %v3400 = vand.u32 %v3399, 4294901760
    %3401 = vmatpush1.msra.mxu0 %v3400
    %3402 = vmatprep.subr.mxu0 0.0
    %v3403 = vand.u32 %v2912, 4294901760
    %v3404 = vsub.f32 %v2912, %v3403
    %v3405 = vand.u32 %v3404, 4294901760
    %3406 = vmatpush1.msra.mxu0 %v3405
    %3407 = vmatprep.subr.mxu0 0.0
    %3408 = vmatpush2.msra.mxu0 0.0
    %3409 = vmatprep.subr.mxu0 0.0
    %3410 = vmatpush2.msra.mxu0 0.0
    %3411 = vmatprep.subr.mxu0 0.0
    %3412 = vmatpush2.msra.mxu0 0.0
    %3413 = vmatprep.subr.mxu0 0.0
    %3414 = vmatpush2.msra.mxu0 0.0
    %3415 = vmatprep.subr.mxu0 0.0
    %3416 = vmatpush2.msra.mxu0 0.0
    %3417 = vmatprep.subr.mxu0 0.0
    %3418 = vmatpush2.msra.mxu0 0.0
    %3419 = vmatprep.subr.mxu0 0.0
    %3420 = vmatpush2.msra.mxu0 0.0
    %3421 = vmatprep.subr.mxu0 0.0
    %3422 = vmatpush2.msra.mxu0 0.0
    %3423 = vmatprep.subr.mxu0 0.0
    %3424 = vmatpush2.msra.mxu0 0.0
    %3425 = vmatprep.subr.mxu0 0.0
    %3426 = vmatpush2.msra.mxu0 0.0
    %3427 = vmatprep.subr.mxu0 0.0
    %3428 = vmatpush2.msra.mxu0 0.0
    %3429 = vmatprep.subr.mxu0 0.0
    %3430 = vmatpush2.msra.mxu0 0.0
    %3431 = vmatprep.subr.mxu0 0.0
    %3432 = vmatpush2.msra.mxu0 0.0
    %3433 = vmatprep.subr.mxu0 0.0
    %3434 = vmatpush2.msra.mxu0 0.0
    %3435 = vmatprep.subr.mxu0 0.0
    %3436 = vmatpush2.msra.mxu0 0.0
    %3437 = vmatprep.subr.mxu0 0.0
    %3438 = vmatpush2.msra.mxu0 0.0
    %3439 = vmatprep.mubr.f32.mxu0 0.0
    %v3440 = vand.u32 %v2956, 4294901760
    %3441 = vmatmul.mubr.f32.gmra.mxu0 %v3440
    %v3442 = vpop.f32.mrf.mxu0
    %v3443 = vadd.f32 %v3342, %v3442
    %v3444 = vpop.f32.mrf.mxu0
    %3445 = vmatprep.mubr.f32.mxu0 0.0
    %v3446 = vand.u32 %v2959, 4294901760
    %3447 = vmatmul.mubr.f32.gmra.mxu0 %v3446
    %v3448 = vpop.f32.mrf.mxu0
    %v3449 = vadd.f32 %v3350, %v3448
    %v3450 = vpop.f32.mrf.mxu0
    %3451 = vmatprep.mubr.f32.mxu0 0.0
    %v3452 = vand.u32 %v2962, 4294901760
    %3453 = vmatmul.mubr.f32.gmra.mxu0 %v3452
    %v3454 = vpop.f32.mrf.mxu0
    %v3455 = vadd.f32 %v3358, %v3454
    %v3456 = vpop.f32.mrf.mxu0
    %3457 = vmatprep.mubr.f32.mxu0 0.0
    %v3458 = vand.u32 %v2965, 4294901760
    %3459 = vmatmul.mubr.f32.gmra.mxu0 %v3458
    %v3460 = vpop.f32.mrf.mxu0
    %v3461 = vadd.f32 %v3366, %v3460
    %v3462 = vpop.f32.mrf.mxu0
    %3463 = vdwg.mxu0
    %3464 = vmatprep.subr.mxu0 0.0
    %3465 = vmatpush1.msra.mxu0 0.0
    %3466 = vmatprep.subr.mxu0 0.0
    %3467 = vmatpush1.msra.mxu0 0.0
    %3468 = vmatprep.subr.mxu0 0.0
    %3469 = vmatpush1.msra.mxu0 0.0
    %3470 = vmatprep.subr.mxu0 0.0
    %3471 = vmatpush1.msra.mxu0 0.0
    %3472 = vmatprep.subr.mxu0 0.0
    %3473 = vmatpush1.msra.mxu0 0.0
    %3474 = vmatprep.subr.mxu0 0.0
    %3475 = vmatpush1.msra.mxu0 0.0
    %3476 = vmatprep.subr.mxu0 0.0
    %3477 = vmatpush1.msra.mxu0 0.0
    %3478 = vmatprep.subr.mxu0 0.0
    %3479 = vmatpush1.msra.mxu0 0.0
    %3480 = vmatprep.subr.mxu0 0.0
    %3481 = vmatpush1.msra.mxu0 0.0
    %3482 = vmatprep.subr.mxu0 0.0
    %3483 = vmatpush1.msra.mxu0 0.0
    %3484 = vmatprep.subr.mxu0 0.0
    %3485 = vmatpush1.msra.mxu0 0.0
    %3486 = vmatprep.subr.mxu0 0.0
    %3487 = vmatpush1.msra.mxu0 0.0
    %3488 = vmatprep.subr.mxu0 0.0
    %3489 = vmatpush1.msra.mxu0 0.0
    %3490 = vmatprep.subr.mxu0 0.0
    %3491 = vmatpush1.msra.mxu0 0.0
    %3492 = vmatprep.subr.mxu0 0.0
    %v3493 = vand.u32 %v2918, 4294901760
    %3494 = vmatpush1.msra.mxu0 %v3493
    %3495 = vmatprep.subr.mxu0 0.0
    %v3496 = vand.u32 %v2912, 4294901760
    %3497 = vmatpush1.msra.mxu0 %v3496
    %3498 = vmatprep.subr.mxu0 0.0
    %3499 = vmatpush2.msra.mxu0 0.0
    %3500 = vmatprep.subr.mxu0 0.0
    %3501 = vmatpush2.msra.mxu0 0.0
    %3502 = vmatprep.subr.mxu0 0.0
    %3503 = vmatpush2.msra.mxu0 0.0
    %3504 = vmatprep.subr.mxu0 0.0
    %3505 = vmatpush2.msra.mxu0 0.0
    %3506 = vmatprep.subr.mxu0 0.0
    %3507 = vmatpush2.msra.mxu0 0.0
    %3508 = vmatprep.subr.mxu0 0.0
    %3509 = vmatpush2.msra.mxu0 0.0
    %3510 = vmatprep.subr.mxu0 0.0
    %3511 = vmatpush2.msra.mxu0 0.0
    %3512 = vmatprep.subr.mxu0 0.0
    %3513 = vmatpush2.msra.mxu0 0.0
    %3514 = vmatprep.subr.mxu0 0.0
    %3515 = vmatpush2.msra.mxu0 0.0
    %3516 = vmatprep.subr.mxu0 0.0
    %3517 = vmatpush2.msra.mxu0 0.0
    %3518 = vmatprep.subr.mxu0 0.0
    %3519 = vmatpush2.msra.mxu0 0.0
    %3520 = vmatprep.subr.mxu0 0.0
    %3521 = vmatpush2.msra.mxu0 0.0
    %3522 = vmatprep.subr.mxu0 0.0
    %3523 = vmatpush2.msra.mxu0 0.0
    %3524 = vmatprep.subr.mxu0 0.0
    %3525 = vmatpush2.msra.mxu0 0.0
    %3526 = vmatprep.subr.mxu0 0.0
    %3527 = vmatpush2.msra.mxu0 0.0
    %3528 = vmatprep.subr.mxu0 0.0
    %3529 = vmatpush2.msra.mxu0 0.0
    %3530 = vmatprep.mubr.f32.mxu0 0.0
    %v3531 = vand.u32 %v2956, 4294901760
    %3532 = vmatmul.mubr.f32.gmra.mxu0 %v3531
    %v3533 = vpop.f32.mrf.mxu0
    %v3534 = vadd.f32 %v3443, %v3533
    %v3535 = vpop.f32.mrf.mxu0
    %3536 = vmatprep.mubr.f32.mxu0 0.0
    %v3537 = vand.u32 %v2959, 4294901760
    %3538 = vmatmul.mubr.f32.gmra.mxu0 %v3537
    %v3539 = vpop.f32.mrf.mxu0
    %v3540 = vadd.f32 %v3449, %v3539
    %v3541 = vpop.f32.mrf.mxu0
    %3542 = vmatprep.mubr.f32.mxu0 0.0
    %v3543 = vand.u32 %v2962, 4294901760
    %3544 = vmatmul.mubr.f32.gmra.mxu0 %v3543
    %v3545 = vpop.f32.mrf.mxu0
    %v3546 = vadd.f32 %v3455, %v3545
    %v3547 = vpop.f32.mrf.mxu0
    %3548 = vmatprep.mubr.f32.mxu0 0.0
    %v3549 = vand.u32 %v2965, 4294901760
    %3550 = vmatmul.mubr.f32.gmra.mxu0 %v3549
    %v3551 = vpop.f32.mrf.mxu0
    %v3552 = vadd.f32 %v3461, %v3551
    %v3553 = vpop.f32.mrf.mxu0
    %3554 = vdwg.mxu0
    %3555 = vmatprep.subr.mxu0 0.0
    %3556 = vmatpush1.msra.mxu0 0.0
    %3557 = vmatprep.subr.mxu0 0.0
    %3558 = vmatpush1.msra.mxu0 0.0
    %3559 = vmatprep.subr.mxu0 0.0
    %3560 = vmatpush1.msra.mxu0 0.0
    %3561 = vmatprep.subr.mxu0 0.0
    %3562 = vmatpush1.msra.mxu0 0.0
    %3563 = vmatprep.subr.mxu0 0.0
    %3564 = vmatpush1.msra.mxu0 0.0
    %3565 = vmatprep.subr.mxu0 0.0
    %3566 = vmatpush1.msra.mxu0 0.0
    %3567 = vmatprep.subr.mxu0 0.0
    %3568 = vmatpush1.msra.mxu0 0.0
    %3569 = vmatprep.subr.mxu0 0.0
    %3570 = vmatpush1.msra.mxu0 0.0
    %3571 = vmatprep.subr.mxu0 0.0
    %3572 = vmatpush1.msra.mxu0 0.0
    %3573 = vmatprep.subr.mxu0 0.0
    %3574 = vmatpush1.msra.mxu0 0.0
    %3575 = vmatprep.subr.mxu0 0.0
    %3576 = vmatpush1.msra.mxu0 0.0
    %3577 = vmatprep.subr.mxu0 0.0
    %3578 = vmatpush1.msra.mxu0 0.0
    %3579 = vmatprep.subr.mxu0 0.0
    %v3580 = vand.u32 %v3552, 4294901760
    %3581 = vmatpush1.msra.mxu0 %v3580
    %3582 = vmatprep.subr.mxu0 0.0
    %v3583 = vand.u32 %v3546, 4294901760
    %3584 = vmatpush1.msra.mxu0 %v3583
    %3585 = vmatprep.subr.mxu0 0.0
    %v3586 = vand.u32 %v3540, 4294901760
    %3587 = vmatpush1.msra.mxu0 %v3586
    %3588 = vmatprep.subr.mxu0 0.0
    %v3589 = vand.u32 %v3534, 4294901760
    %3590 = vmatpush1.msra.mxu0 %v3589
    %3591 = vmatprep.subr.mxu0 0.0
    %3592 = vmatpush2.msra.mxu0 0.0
    %3593 = vmatprep.subr.mxu0 0.0
    %3594 = vmatpush2.msra.mxu0 0.0
    %3595 = vmatprep.subr.mxu0 0.0
    %3596 = vmatpush2.msra.mxu0 0.0
    %3597 = vmatprep.subr.mxu0 0.0
    %3598 = vmatpush2.msra.mxu0 0.0
    %3599 = vmatprep.subr.mxu0 0.0
    %3600 = vmatpush2.msra.mxu0 0.0
    %3601 = vmatprep.subr.mxu0 0.0
    %3602 = vmatpush2.msra.mxu0 0.0
    %3603 = vmatprep.subr.mxu0 0.0
    %3604 = vmatpush2.msra.mxu0 0.0
    %3605 = vmatprep.subr.mxu0 0.0
    %3606 = vmatpush2.msra.mxu0 0.0
    %3607 = vmatprep.subr.mxu0 0.0
    %3608 = vmatpush2.msra.mxu0 0.0
    %3609 = vmatprep.subr.mxu0 0.0
    %3610 = vmatpush2.msra.mxu0 0.0
    %3611 = vmatprep.subr.mxu0 0.0
    %3612 = vmatpush2.msra.mxu0 0.0
    %3613 = vmatprep.subr.mxu0 0.0
    %3614 = vmatpush2.msra.mxu0 0.0
    %3615 = vmatprep.subr.mxu0 0.0
    %3616 = vmatpush2.msra.mxu0 0.0
    %3617 = vmatprep.subr.mxu0 0.0
    %3618 = vmatpush2.msra.mxu0 0.0
    %3619 = vmatprep.subr.mxu0 0.0
    %3620 = vmatpush2.msra.mxu0 0.0
    %3621 = vmatprep.subr.mxu0 0.0
    %3622 = vmatpush2.msra.mxu0 0.0
    %3623 = vmatprep.mubr.f32.mxu0 0.0
    %v3624 = vand.u32 %v1278, 4294901760
    %v3625 = vsub.f32 %v1278, %v3624
    %v3626 = vand.u32 %v3625, 4294901760
    %v3627 = vsub.f32 %v3625, %v3626
    %v3628 = vand.u32 %v3627, 4294901760
    %3629 = vmatmul.mubr.f32.gmra.mxu0 %v3628
    %v3630 = vpop.f32.mrf.mxu0
    %v3631 = vadd.f32 1e-09, %v3630
    %v3632 = vpop.f32.mrf.mxu0
    %3633 = vdwg.mxu0
    %3634 = vmatprep.subr.mxu0 0.0
    %3635 = vmatpush1.msra.mxu0 0.0
    %3636 = vmatprep.subr.mxu0 0.0
    %3637 = vmatpush1.msra.mxu0 0.0
    %3638 = vmatprep.subr.mxu0 0.0
    %3639 = vmatpush1.msra.mxu0 0.0
    %3640 = vmatprep.subr.mxu0 0.0
    %3641 = vmatpush1.msra.mxu0 0.0
    %3642 = vmatprep.subr.mxu0 0.0
    %3643 = vmatpush1.msra.mxu0 0.0
    %3644 = vmatprep.subr.mxu0 0.0
    %3645 = vmatpush1.msra.mxu0 0.0
    %3646 = vmatprep.subr.mxu0 0.0
    %3647 = vmatpush1.msra.mxu0 0.0
    %3648 = vmatprep.subr.mxu0 0.0
    %3649 = vmatpush1.msra.mxu0 0.0
    %3650 = vmatprep.subr.mxu0 0.0
    %3651 = vmatpush1.msra.mxu0 0.0
    %3652 = vmatprep.subr.mxu0 0.0
    %3653 = vmatpush1.msra.mxu0 0.0
    %3654 = vmatprep.subr.mxu0 0.0
    %3655 = vmatpush1.msra.mxu0 0.0
    %3656 = vmatprep.subr.mxu0 0.0
    %3657 = vmatpush1.msra.mxu0 0.0
    %3658 = vmatprep.subr.mxu0 0.0
    %v3659 = vand.u32 %v3552, 4294901760
    %v3660 = vsub.f32 %v3552, %v3659
    %v3661 = vand.u32 %v3660, 4294901760
    %v3662 = vsub.f32 %v3660, %v3661
    %v3663 = vand.u32 %v3662, 4294901760
    %3664 = vmatpush1.msra.mxu0 %v3663
    %3665 = vmatprep.subr.mxu0 0.0
    %v3666 = vand.u32 %v3546, 4294901760
    %v3667 = vsub.f32 %v3546, %v3666
    %v3668 = vand.u32 %v3667, 4294901760
    %v3669 = vsub.f32 %v3667, %v3668
    %v3670 = vand.u32 %v3669, 4294901760
    %3671 = vmatpush1.msra.mxu0 %v3670
    %3672 = vmatprep.subr.mxu0 0.0
    %v3673 = vand.u32 %v3540, 4294901760
    %v3674 = vsub.f32 %v3540, %v3673
    %v3675 = vand.u32 %v3674, 4294901760
    %v3676 = vsub.f32 %v3674, %v3675
    %v3677 = vand.u32 %v3676, 4294901760
    %3678 = vmatpush1.msra.mxu0 %v3677
    %3679 = vmatprep.subr.mxu0 0.0
    %v3680 = vand.u32 %v3534, 4294901760
    %v3681 = vsub.f32 %v3534, %v3680
    %v3682 = vand.u32 %v3681, 4294901760
    %v3683 = vsub.f32 %v3681, %v3682
    %v3684 = vand.u32 %v3683, 4294901760
    %3685 = vmatpush1.msra.mxu0 %v3684
    %3686 = vmatprep.subr.mxu0 0.0
    %3687 = vmatpush2.msra.mxu0 0.0
    %3688 = vmatprep.subr.mxu0 0.0
    %3689 = vmatpush2.msra.mxu0 0.0
    %3690 = vmatprep.subr.mxu0 0.0
    %3691 = vmatpush2.msra.mxu0 0.0
    %3692 = vmatprep.subr.mxu0 0.0
    %3693 = vmatpush2.msra.mxu0 0.0
    %3694 = vmatprep.subr.mxu0 0.0
    %3695 = vmatpush2.msra.mxu0 0.0
    %3696 = vmatprep.subr.mxu0 0.0
    %3697 = vmatpush2.msra.mxu0 0.0
    %3698 = vmatprep.subr.mxu0 0.0
    %3699 = vmatpush2.msra.mxu0 0.0
    %3700 = vmatprep.subr.mxu0 0.0
    %3701 = vmatpush2.msra.mxu0 0.0
    %3702 = vmatprep.subr.mxu0 0.0
    %3703 = vmatpush2.msra.mxu0 0.0
    %3704 = vmatprep.subr.mxu0 0.0
    %3705 = vmatpush2.msra.mxu0 0.0
    %3706 = vmatprep.subr.mxu0 0.0
    %3707 = vmatpush2.msra.mxu0 0.0
    %3708 = vmatprep.subr.mxu0 0.0
    %3709 = vmatpush2.msra.mxu0 0.0
    %3710 = vmatprep.subr.mxu0 0.0
    %3711 = vmatpush2.msra.mxu0 0.0
    %3712 = vmatprep.subr.mxu0 0.0
    %3713 = vmatpush2.msra.mxu0 0.0
    %3714 = vmatprep.subr.mxu0 0.0
    %3715 = vmatpush2.msra.mxu0 0.0
    %3716 = vmatprep.subr.mxu0 0.0
    %3717 = vmatpush2.msra.mxu0 0.0
    %3718 = vmatprep.mubr.f32.mxu0 0.0
    %v3719 = vand.u32 %v1278, 4294901760
    %3720 = vmatmul.mubr.f32.gmra.mxu0 %v3719
    %v3721 = vpop.f32.mrf.mxu0
    %v3722 = vadd.f32 %v3631, %v3721
    %v3723 = vpop.f32.mrf.mxu0
    %3724 = vdwg.mxu0
    %3725 = vmatprep.subr.mxu0 0.0
    %3726 = vmatpush1.msra.mxu0 0.0
    %3727 = vmatprep.subr.mxu0 0.0
    %3728 = vmatpush1.msra.mxu0 0.0
    %3729 = vmatprep.subr.mxu0 0.0
    %3730 = vmatpush1.msra.mxu0 0.0
    %3731 = vmatprep.subr.mxu0 0.0
    %3732 = vmatpush1.msra.mxu0 0.0
    %3733 = vmatprep.subr.mxu0 0.0
    %3734 = vmatpush1.msra.mxu0 0.0
    %3735 = vmatprep.subr.mxu0 0.0
    %3736 = vmatpush1.msra.mxu0 0.0
    %3737 = vmatprep.subr.mxu0 0.0
    %3738 = vmatpush1.msra.mxu0 0.0
    %3739 = vmatprep.subr.mxu0 0.0
    %3740 = vmatpush1.msra.mxu0 0.0
    %3741 = vmatprep.subr.mxu0 0.0
    %3742 = vmatpush1.msra.mxu0 0.0
    %3743 = vmatprep.subr.mxu0 0.0
    %3744 = vmatpush1.msra.mxu0 0.0
    %3745 = vmatprep.subr.mxu0 0.0
    %3746 = vmatpush1.msra.mxu0 0.0
    %3747 = vmatprep.subr.mxu0 0.0
    %3748 = vmatpush1.msra.mxu0 0.0
    %3749 = vmatprep.subr.mxu0 0.0
    %v3750 = vand.u32 %v3552, 4294901760
    %v3751 = vsub.f32 %v3552, %v3750
    %3752 = vmatpush1.msra.mxu0 %v3751
    %3753 = vmatprep.subr.mxu0 0.0
    %v3754 = vand.u32 %v3546, 4294901760
    %v3755 = vsub.f32 %v3546, %v3754
    %3756 = vmatpush1.msra.mxu0 %v3755
    %3757 = vmatprep.subr.mxu0 0.0
    %v3758 = vand.u32 %v3540, 4294901760
    %v3759 = vsub.f32 %v3540, %v3758
    %3760 = vmatpush1.msra.mxu0 %v3759
    %3761 = vmatprep.subr.mxu0 0.0
    %v3762 = vand.u32 %v3534, 4294901760
    %v3763 = vsub.f32 %v3534, %v3762
    %3764 = vmatpush1.msra.mxu0 %v3763
    %3765 = vmatprep.subr.mxu0 0.0
    %3766 = vmatpush2.msra.mxu0 0.0
    %3767 = vmatprep.subr.mxu0 0.0
    %3768 = vmatpush2.msra.mxu0 0.0
    %3769 = vmatprep.subr.mxu0 0.0
    %3770 = vmatpush2.msra.mxu0 0.0
    %3771 = vmatprep.subr.mxu0 0.0
    %3772 = vmatpush2.msra.mxu0 0.0
    %3773 = vmatprep.subr.mxu0 0.0
    %3774 = vmatpush2.msra.mxu0 0.0
    %3775 = vmatprep.subr.mxu0 0.0
    %3776 = vmatpush2.msra.mxu0 0.0
    %3777 = vmatprep.subr.mxu0 0.0
    %3778 = vmatpush2.msra.mxu0 0.0
    %3779 = vmatprep.subr.mxu0 0.0
    %3780 = vmatpush2.msra.mxu0 0.0
    %3781 = vmatprep.subr.mxu0 0.0
    %3782 = vmatpush2.msra.mxu0 0.0
    %3783 = vmatprep.subr.mxu0 0.0
    %3784 = vmatpush2.msra.mxu0 0.0
    %3785 = vmatprep.subr.mxu0 0.0
    %3786 = vmatpush2.msra.mxu0 0.0
    %3787 = vmatprep.subr.mxu0 0.0
    %3788 = vmatpush2.msra.mxu0 0.0
    %3789 = vmatprep.subr.mxu0 0.0
    %3790 = vmatpush2.msra.mxu0 0.0
    %3791 = vmatprep.subr.mxu0 0.0
    %3792 = vmatpush2.msra.mxu0 0.0
    %3793 = vmatprep.subr.mxu0 0.0
    %3794 = vmatpush2.msra.mxu0 0.0
    %3795 = vmatprep.subr.mxu0 0.0
    %3796 = vmatpush2.msra.mxu0 0.0
    %3797 = vmatprep.mubr.f32.mxu0 0.0
    %v3798 = vand.u32 %v1278, 4294901760
    %v3799 = vsub.f32 %v1278, %v3798
    %3800 = vmatmul.mubr.f32.gmra.mxu0 %v3799
    %v3801 = vpop.f32.mrf.mxu0
    %v3802 = vadd.f32 %v3722, %v3801
    %v3803 = vpop.f32.mrf.mxu0
    %3804 = vdwg.mxu0
    %3805 = vmatprep.subr.mxu0 0.0
    %3806 = vmatpush1.msra.mxu0 0.0
    %3807 = vmatprep.subr.mxu0 0.0
    %3808 = vmatpush1.msra.mxu0 0.0
    %3809 = vmatprep.subr.mxu0 0.0
    %3810 = vmatpush1.msra.mxu0 0.0
    %3811 = vmatprep.subr.mxu0 0.0
    %3812 = vmatpush1.msra.mxu0 0.0
    %3813 = vmatprep.subr.mxu0 0.0
    %3814 = vmatpush1.msra.mxu0 0.0
    %3815 = vmatprep.subr.mxu0 0.0
    %3816 = vmatpush1.msra.mxu0 0.0
    %3817 = vmatprep.subr.mxu0 0.0
    %3818 = vmatpush1.msra.mxu0 0.0
    %3819 = vmatprep.subr.mxu0 0.0
    %3820 = vmatpush1.msra.mxu0 0.0
    %3821 = vmatprep.subr.mxu0 0.0
    %3822 = vmatpush1.msra.mxu0 0.0
    %3823 = vmatprep.subr.mxu0 0.0
    %3824 = vmatpush1.msra.mxu0 0.0
    %3825 = vmatprep.subr.mxu0 0.0
    %3826 = vmatpush1.msra.mxu0 0.0
    %3827 = vmatprep.subr.mxu0 0.0
    %3828 = vmatpush1.msra.mxu0 0.0
    %3829 = vmatprep.subr.mxu0 0.0
    %v3830 = vand.u32 %v3552, 4294901760
    %3831 = vmatpush1.msra.mxu0 %v3830
    %3832 = vmatprep.subr.mxu0 0.0
    %v3833 = vand.u32 %v3546, 4294901760
    %3834 = vmatpush1.msra.mxu0 %v3833
    %3835 = vmatprep.subr.mxu0 0.0
    %v3836 = vand.u32 %v3540, 4294901760
    %3837 = vmatpush1.msra.mxu0 %v3836
    %3838 = vmatprep.subr.mxu0 0.0
    %v3839 = vand.u32 %v3534, 4294901760
    %3840 = vmatpush1.msra.mxu0 %v3839
    %3841 = vmatprep.subr.mxu0 0.0
    %3842 = vmatpush2.msra.mxu0 0.0
    %3843 = vmatprep.subr.mxu0 0.0
    %3844 = vmatpush2.msra.mxu0 0.0
    %3845 = vmatprep.subr.mxu0 0.0
    %3846 = vmatpush2.msra.mxu0 0.0
    %3847 = vmatprep.subr.mxu0 0.0
    %3848 = vmatpush2.msra.mxu0 0.0
    %3849 = vmatprep.subr.mxu0 0.0
    %3850 = vmatpush2.msra.mxu0 0.0
    %3851 = vmatprep.subr.mxu0 0.0
    %3852 = vmatpush2.msra.mxu0 0.0
    %3853 = vmatprep.subr.mxu0 0.0
    %3854 = vmatpush2.msra.mxu0 0.0
    %3855 = vmatprep.subr.mxu0 0.0
    %3856 = vmatpush2.msra.mxu0 0.0
    %3857 = vmatprep.subr.mxu0 0.0
    %3858 = vmatpush2.msra.mxu0 0.0
    %3859 = vmatprep.subr.mxu0 0.0
    %3860 = vmatpush2.msra.mxu0 0.0
    %3861 = vmatprep.subr.mxu0 0.0
    %3862 = vmatpush2.msra.mxu0 0.0
    %3863 = vmatprep.subr.mxu0 0.0
    %3864 = vmatpush2.msra.mxu0 0.0
    %3865 = vmatprep.subr.mxu0 0.0
    %3866 = vmatpush2.msra.mxu0 0.0
    %3867 = vmatprep.subr.mxu0 0.0
    %3868 = vmatpush2.msra.mxu0 0.0
    %3869 = vmatprep.subr.mxu0 0.0
    %3870 = vmatpush2.msra.mxu0 0.0
    %3871 = vmatprep.subr.mxu0 0.0
    %3872 = vmatpush2.msra.mxu0 0.0
    %3873 = vmatprep.mubr.f32.mxu0 0.0
    %v3874 = vand.u32 %v1278, 4294901760
    %v3875 = vsub.f32 %v1278, %v3874
    %v3876 = vand.u32 %v3875, 4294901760
    %3877 = vmatmul.mubr.f32.gmra.mxu0 %v3876
    %v3878 = vpop.f32.mrf.mxu0
    %v3879 = vadd.f32 %v3802, %v3878
    %v3880 = vpop.f32.mrf.mxu0
    %3881 = vdwg.mxu0
    %3882 = vmatprep.subr.mxu0 0.0
    %3883 = vmatpush1.msra.mxu0 0.0
    %3884 = vmatprep.subr.mxu0 0.0
    %3885 = vmatpush1.msra.mxu0 0.0
    %3886 = vmatprep.subr.mxu0 0.0
    %3887 = vmatpush1.msra.mxu0 0.0
    %3888 = vmatprep.subr.mxu0 0.0
    %3889 = vmatpush1.msra.mxu0 0.0
    %3890 = vmatprep.subr.mxu0 0.0
    %3891 = vmatpush1.msra.mxu0 0.0
    %3892 = vmatprep.subr.mxu0 0.0
    %3893 = vmatpush1.msra.mxu0 0.0
    %3894 = vmatprep.subr.mxu0 0.0
    %3895 = vmatpush1.msra.mxu0 0.0
    %3896 = vmatprep.subr.mxu0 0.0
    %3897 = vmatpush1.msra.mxu0 0.0
    %3898 = vmatprep.subr.mxu0 0.0
    %3899 = vmatpush1.msra.mxu0 0.0
    %3900 = vmatprep.subr.mxu0 0.0
    %3901 = vmatpush1.msra.mxu0 0.0
    %3902 = vmatprep.subr.mxu0 0.0
    %3903 = vmatpush1.msra.mxu0 0.0
    %3904 = vmatprep.subr.mxu0 0.0
    %3905 = vmatpush1.msra.mxu0 0.0
    %3906 = vmatprep.subr.mxu0 0.0
    %v3907 = vand.u32 %v3552, 4294901760
    %v3908 = vsub.f32 %v3552, %v3907
    %v3909 = vand.u32 %v3908, 4294901760
    %3910 = vmatpush1.msra.mxu0 %v3909
    %3911 = vmatprep.subr.mxu0 0.0
    %v3912 = vand.u32 %v3546, 4294901760
    %v3913 = vsub.f32 %v3546, %v3912
    %v3914 = vand.u32 %v3913, 4294901760
    %3915 = vmatpush1.msra.mxu0 %v3914
    %3916 = vmatprep.subr.mxu0 0.0
    %v3917 = vand.u32 %v3540, 4294901760
    %v3918 = vsub.f32 %v3540, %v3917
    %v3919 = vand.u32 %v3918, 4294901760
    %3920 = vmatpush1.msra.mxu0 %v3919
    %3921 = vmatprep.subr.mxu0 0.0
    %v3922 = vand.u32 %v3534, 4294901760
    %v3923 = vsub.f32 %v3534, %v3922
    %v3924 = vand.u32 %v3923, 4294901760
    %3925 = vmatpush1.msra.mxu0 %v3924
    %3926 = vmatprep.subr.mxu0 0.0
    %3927 = vmatpush2.msra.mxu0 0.0
    %3928 = vmatprep.subr.mxu0 0.0
    %3929 = vmatpush2.msra.mxu0 0.0
    %3930 = vmatprep.subr.mxu0 0.0
    %3931 = vmatpush2.msra.mxu0 0.0
    %3932 = vmatprep.subr.mxu0 0.0
    %3933 = vmatpush2.msra.mxu0 0.0
    %3934 = vmatprep.subr.mxu0 0.0
    %3935 = vmatpush2.msra.mxu0 0.0
    %3936 = vmatprep.subr.mxu0 0.0
    %3937 = vmatpush2.msra.mxu0 0.0
    %3938 = vmatprep.subr.mxu0 0.0
    %3939 = vmatpush2.msra.mxu0 0.0
    %3940 = vmatprep.subr.mxu0 0.0
    %3941 = vmatpush2.msra.mxu0 0.0
    %3942 = vmatprep.subr.mxu0 0.0
    %3943 = vmatpush2.msra.mxu0 0.0
    %3944 = vmatprep.subr.mxu0 0.0
    %3945 = vmatpush2.msra.mxu0 0.0
    %3946 = vmatprep.subr.mxu0 0.0
    %3947 = vmatpush2.msra.mxu0 0.0
    %3948 = vmatprep.subr.mxu0 0.0
    %3949 = vmatpush2.msra.mxu0 0.0
    %3950 = vmatprep.subr.mxu0 0.0
    %3951 = vmatpush2.msra.mxu0 0.0
    %3952 = vmatprep.subr.mxu0 0.0
    %3953 = vmatpush2.msra.mxu0 0.0
    %3954 = vmatprep.subr.mxu0 0.0
    %3955 = vmatpush2.msra.mxu0 0.0
    %3956 = vmatprep.subr.mxu0 0.0
    %3957 = vmatpush2.msra.mxu0 0.0
    %3958 = vmatprep.mubr.f32.mxu0 0.0
    %v3959 = vand.u32 %v1278, 4294901760
    %3960 = vmatmul.mubr.f32.gmra.mxu0 %v3959
    %v3961 = vpop.f32.mrf.mxu0
    %v3962 = vadd.f32 %v3879, %v3961
    %v3963 = vpop.f32.mrf.mxu0
    %3964 = vdwg.mxu0
    %3965 = vmatprep.subr.mxu0 0.0
    %3966 = vmatpush1.msra.mxu0 0.0
    %3967 = vmatprep.subr.mxu0 0.0
    %3968 = vmatpush1.msra.mxu0 0.0
    %3969 = vmatprep.subr.mxu0 0.0
    %3970 = vmatpush1.msra.mxu0 0.0
    %3971 = vmatprep.subr.mxu0 0.0
    %3972 = vmatpush1.msra.mxu0 0.0
    %3973 = vmatprep.subr.mxu0 0.0
    %3974 = vmatpush1.msra.mxu0 0.0
    %3975 = vmatprep.subr.mxu0 0.0
    %3976 = vmatpush1.msra.mxu0 0.0
    %3977 = vmatprep.subr.mxu0 0.0
    %3978 = vmatpush1.msra.mxu0 0.0
    %3979 = vmatprep.subr.mxu0 0.0
    %3980 = vmatpush1.msra.mxu0 0.0
    %3981 = vmatprep.subr.mxu0 0.0
    %3982 = vmatpush1.msra.mxu0 0.0
    %3983 = vmatprep.subr.mxu0 0.0
    %3984 = vmatpush1.msra.mxu0 0.0
    %3985 = vmatprep.subr.mxu0 0.0
    %3986 = vmatpush1.msra.mxu0 0.0
    %3987 = vmatprep.subr.mxu0 0.0
    %3988 = vmatpush1.msra.mxu0 0.0
    %3989 = vmatprep.subr.mxu0 0.0
    %v3990 = vand.u32 %v3552, 4294901760
    %3991 = vmatpush1.msra.mxu0 %v3990
    %3992 = vmatprep.subr.mxu0 0.0
    %v3993 = vand.u32 %v3546, 4294901760
    %3994 = vmatpush1.msra.mxu0 %v3993
    %3995 = vmatprep.subr.mxu0 0.0
    %v3996 = vand.u32 %v3540, 4294901760
    %3997 = vmatpush1.msra.mxu0 %v3996
    %3998 = vmatprep.subr.mxu0 0.0
    %v3999 = vand.u32 %v3534, 4294901760
    %4000 = vmatpush1.msra.mxu0 %v3999
    %4001 = vmatprep.subr.mxu0 0.0
    %4002 = vmatpush2.msra.mxu0 0.0
    %4003 = vmatprep.subr.mxu0 0.0
    %4004 = vmatpush2.msra.mxu0 0.0
    %4005 = vmatprep.subr.mxu0 0.0
    %4006 = vmatpush2.msra.mxu0 0.0
    %4007 = vmatprep.subr.mxu0 0.0
    %4008 = vmatpush2.msra.mxu0 0.0
    %4009 = vmatprep.subr.mxu0 0.0
    %4010 = vmatpush2.msra.mxu0 0.0
    %4011 = vmatprep.subr.mxu0 0.0
    %4012 = vmatpush2.msra.mxu0 0.0
    %4013 = vmatprep.subr.mxu0 0.0
    %4014 = vmatpush2.msra.mxu0 0.0
    %4015 = vmatprep.subr.mxu0 0.0
    %4016 = vmatpush2.msra.mxu0 0.0
    %4017 = vmatprep.subr.mxu0 0.0
    %4018 = vmatpush2.msra.mxu0 0.0
    %4019 = vmatprep.subr.mxu0 0.0
    %4020 = vmatpush2.msra.mxu0 0.0
    %4021 = vmatprep.subr.mxu0 0.0
    %4022 = vmatpush2.msra.mxu0 0.0
    %4023 = vmatprep.subr.mxu0 0.0
    %4024 = vmatpush2.msra.mxu0 0.0
    %4025 = vmatprep.subr.mxu0 0.0
    %4026 = vmatpush2.msra.mxu0 0.0
    %4027 = vmatprep.subr.mxu0 0.0
    %4028 = vmatpush2.msra.mxu0 0.0
    %4029 = vmatprep.subr.mxu0 0.0
    %4030 = vmatpush2.msra.mxu0 0.0
    %4031 = vmatprep.subr.mxu0 0.0
    %4032 = vmatpush2.msra.mxu0 0.0
    %4033 = vmatprep.mubr.f32.mxu0 0.0
    %v4034 = vand.u32 %v1278, 4294901760
    %4035 = vmatmul.mubr.f32.gmra.mxu0 %v4034
    %v4036 = vpop.f32.mrf.mxu0
    %v4037 = vadd.f32 %v3962, %v4036
    %v4038 = vpop.f32.mrf.mxu0
    %4039 = vdwg.mxu0
    %v4040 = vrcp.pop %v4037
    %v4041 = vlaneseq
    %v4042 = vshrl.u32 %v4041, 7
    %v4043 = vsub.s32 0, %v4042
    %v4044 = vrot.slane %v4040, %v4043
    %v4045 = vmul.f32 %v3534, %v4044
    %v4046 = vmul.f32 %v3540, %v4044
    %v4047 = vmul.f32 %v3546, %v4044
    %v4048 = vmul.f32 %v3552, %v4044
    %v4050 = vsel %vm1774, %v2921, 0
    %v4053 = vsel %vm1774, %v2922, 0
    %v4056 = vsel %vm1774, %v4045, 0
    %v4059 = vsel %vm1774, %v4046, 0
    %v4062 = vsel %vm1774, %v4047, 0
    %v4065 = vsel %vm1774, %v4048, 0
    %4067 = vmatprep.subr.mxu0 0.0
    %4068 = vmatpush1.xpose.msra.mxu0 0.0
    %4069 = vmatprep.subr.mxu0 0.0
    %4070 = vmatpush1.xpose.msra.mxu0 0.0
    %4071 = vmatprep.subr.mxu0 0.0
    %4072 = vmatpush1.xpose.msra.mxu0 0.0
    %4073 = vmatprep.subr.mxu0 0.0
    %4074 = vmatpush1.xpose.msra.mxu0 0.0
    %4075 = vmatprep.subr.mxu0 0.0
    %4076 = vmatpush1.xpose.msra.mxu0 0.0
    %4077 = vmatprep.subr.mxu0 0.0
    %4078 = vmatpush1.xpose.msra.mxu0 0.0
    %4079 = vmatprep.subr.mxu0 0.0
    %4080 = vmatpush1.xpose.msra.mxu0 0.0
    %4081 = vmatprep.subr.mxu0 0.0
    %4082 = vmatpush1.xpose.msra.mxu0 0.0
    %4083 = vmatprep.subr.mxu0 0.0
    %4084 = vmatpush1.xpose.msra.mxu0 0.0
    %4085 = vmatprep.subr.mxu0 0.0
    %4086 = vmatpush1.xpose.msra.mxu0 0.0
    %4087 = vmatprep.subr.mxu0 0.0
    %4088 = vmatpush1.xpose.msra.mxu0 0.0
    %4089 = vmatprep.subr.mxu0 0.0
    %4090 = vmatpush1.xpose.msra.mxu0 0.0
    %4091 = vmatprep.subr.mxu0 0.0
    %v4092 = vand.u32 %v4065, 4294901760
    %4093 = vmatpush1.xpose.msra.mxu0 %v4092
    %4094 = vmatprep.subr.mxu0 0.0
    %v4095 = vand.u32 %v4062, 4294901760
    %4096 = vmatpush1.xpose.msra.mxu0 %v4095
    %4097 = vmatprep.subr.mxu0 0.0
    %v4098 = vand.u32 %v4059, 4294901760
    %4099 = vmatpush1.xpose.msra.mxu0 %v4098
    %4100 = vmatprep.subr.mxu0 0.0
    %v4101 = vand.u32 %v4056, 4294901760
    %4102 = vmatpush1.xpose.msra.mxu0 %v4101
    %4103 = vmatprep.subr.mxu0 0.0
    %4104 = vmatpush2.xpose.msra.mxu0 0.0
    %4105 = vmatprep.subr.mxu0 0.0
    %4106 = vmatpush2.xpose.msra.mxu0 0.0
    %4107 = vmatprep.subr.mxu0 0.0
    %4108 = vmatpush2.xpose.msra.mxu0 0.0
    %4109 = vmatprep.subr.mxu0 0.0
    %4110 = vmatpush2.xpose.msra.mxu0 0.0
    %4111 = vmatprep.subr.mxu0 0.0
    %4112 = vmatpush2.xpose.msra.mxu0 0.0
    %4113 = vmatprep.subr.mxu0 0.0
    %4114 = vmatpush2.xpose.msra.mxu0 0.0
    %4115 = vmatprep.subr.mxu0 0.0
    %4116 = vmatpush2.xpose.msra.mxu0 0.0
    %4117 = vmatprep.subr.mxu0 0.0
    %4118 = vmatpush2.xpose.msra.mxu0 0.0
    %4119 = vmatprep.subr.mxu0 0.0
    %4120 = vmatpush2.xpose.msra.mxu0 0.0
    %4121 = vmatprep.subr.mxu0 0.0
    %4122 = vmatpush2.xpose.msra.mxu0 0.0
    %4123 = vmatprep.subr.mxu0 0.0
    %4124 = vmatpush2.xpose.msra.mxu0 0.0
    %4125 = vmatprep.subr.mxu0 0.0
    %4126 = vmatpush2.xpose.msra.mxu0 0.0
    %4127 = vmatprep.subr.mxu0 0.0
    %4128 = vmatpush2.xpose.msra.mxu0 0.0
    %4129 = vmatprep.subr.mxu0 0.0
    %4130 = vmatpush2.xpose.msra.mxu0 0.0
    %4131 = vmatprep.subr.mxu0 0.0
    %4132 = vmatpush2.xpose.msra.mxu0 0.0
    %4133 = vmatprep.subr.mxu0 0.0
    %4134 = vmatpush2.xpose.msra.mxu0 0.0
    %4135 = vmatprep.mubr.f32.mxu0 0.0
    %v4136 = vand.u32 %v4050, 4294901760
    %v4137 = vsub.f32 %v4050, %v4136
    %v4138 = vand.u32 %v4137, 4294901760
    %v4139 = vsub.f32 %v4137, %v4138
    %v4140 = vand.u32 %v4139, 4294901760
    %4141 = vmatmul.mubr.f32.gmra.mxu0 %v4140
    %v4142 = vpop.f32.mrf.mxu0
    %v4143 = vadd.f32 0.0, %v4142
    %v4144 = vpop.f32.mrf.mxu0
    %4145 = vmatprep.mubr.f32.mxu0 0.0
    %v4146 = vand.u32 %v4053, 4294901760
    %v4147 = vsub.f32 %v4053, %v4146
    %v4148 = vand.u32 %v4147, 4294901760
    %v4149 = vsub.f32 %v4147, %v4148
    %v4150 = vand.u32 %v4149, 4294901760
    %4151 = vmatmul.mubr.f32.gmra.mxu0 %v4150
    %v4152 = vpop.f32.mrf.mxu0
    %v4153 = vadd.f32 0.0, %v4152
    %v4154 = vpop.f32.mrf.mxu0
    %4155 = vdwg.mxu0
    %4156 = vmatprep.subr.mxu0 0.0
    %4157 = vmatpush1.xpose.msra.mxu0 0.0
    %4158 = vmatprep.subr.mxu0 0.0
    %4159 = vmatpush1.xpose.msra.mxu0 0.0
    %4160 = vmatprep.subr.mxu0 0.0
    %4161 = vmatpush1.xpose.msra.mxu0 0.0
    %4162 = vmatprep.subr.mxu0 0.0
    %4163 = vmatpush1.xpose.msra.mxu0 0.0
    %4164 = vmatprep.subr.mxu0 0.0
    %4165 = vmatpush1.xpose.msra.mxu0 0.0
    %4166 = vmatprep.subr.mxu0 0.0
    %4167 = vmatpush1.xpose.msra.mxu0 0.0
    %4168 = vmatprep.subr.mxu0 0.0
    %4169 = vmatpush1.xpose.msra.mxu0 0.0
    %4170 = vmatprep.subr.mxu0 0.0
    %4171 = vmatpush1.xpose.msra.mxu0 0.0
    %4172 = vmatprep.subr.mxu0 0.0
    %4173 = vmatpush1.xpose.msra.mxu0 0.0
    %4174 = vmatprep.subr.mxu0 0.0
    %4175 = vmatpush1.xpose.msra.mxu0 0.0
    %4176 = vmatprep.subr.mxu0 0.0
    %4177 = vmatpush1.xpose.msra.mxu0 0.0
    %4178 = vmatprep.subr.mxu0 0.0
    %4179 = vmatpush1.xpose.msra.mxu0 0.0
    %4180 = vmatprep.subr.mxu0 0.0
    %v4181 = vand.u32 %v4065, 4294901760
    %v4182 = vsub.f32 %v4065, %v4181
    %v4183 = vand.u32 %v4182, 4294901760
    %v4184 = vsub.f32 %v4182, %v4183
    %v4185 = vand.u32 %v4184, 4294901760
    %4186 = vmatpush1.xpose.msra.mxu0 %v4185
    %4187 = vmatprep.subr.mxu0 0.0
    %v4188 = vand.u32 %v4062, 4294901760
    %v4189 = vsub.f32 %v4062, %v4188
    %v4190 = vand.u32 %v4189, 4294901760
    %v4191 = vsub.f32 %v4189, %v4190
    %v4192 = vand.u32 %v4191, 4294901760
    %4193 = vmatpush1.xpose.msra.mxu0 %v4192
    %4194 = vmatprep.subr.mxu0 0.0
    %v4195 = vand.u32 %v4059, 4294901760
    %v4196 = vsub.f32 %v4059, %v4195
    %v4197 = vand.u32 %v4196, 4294901760
    %v4198 = vsub.f32 %v4196, %v4197
    %v4199 = vand.u32 %v4198, 4294901760
    %4200 = vmatpush1.xpose.msra.mxu0 %v4199
    %4201 = vmatprep.subr.mxu0 0.0
    %v4202 = vand.u32 %v4056, 4294901760
    %v4203 = vsub.f32 %v4056, %v4202
    %v4204 = vand.u32 %v4203, 4294901760
    %v4205 = vsub.f32 %v4203, %v4204
    %v4206 = vand.u32 %v4205, 4294901760
    %4207 = vmatpush1.xpose.msra.mxu0 %v4206
    %4208 = vmatprep.subr.mxu0 0.0
    %4209 = vmatpush2.xpose.msra.mxu0 0.0
    %4210 = vmatprep.subr.mxu0 0.0
    %4211 = vmatpush2.xpose.msra.mxu0 0.0
    %4212 = vmatprep.subr.mxu0 0.0
    %4213 = vmatpush2.xpose.msra.mxu0 0.0
    %4214 = vmatprep.subr.mxu0 0.0
    %4215 = vmatpush2.xpose.msra.mxu0 0.0
    %4216 = vmatprep.subr.mxu0 0.0
    %4217 = vmatpush2.xpose.msra.mxu0 0.0
    %4218 = vmatprep.subr.mxu0 0.0
    %4219 = vmatpush2.xpose.msra.mxu0 0.0
    %4220 = vmatprep.subr.mxu0 0.0
    %4221 = vmatpush2.xpose.msra.mxu0 0.0
    %4222 = vmatprep.subr.mxu0 0.0
    %4223 = vmatpush2.xpose.msra.mxu0 0.0
    %4224 = vmatprep.subr.mxu0 0.0
    %4225 = vmatpush2.xpose.msra.mxu0 0.0
    %4226 = vmatprep.subr.mxu0 0.0
    %4227 = vmatpush2.xpose.msra.mxu0 0.0
    %4228 = vmatprep.subr.mxu0 0.0
    %4229 = vmatpush2.xpose.msra.mxu0 0.0
    %4230 = vmatprep.subr.mxu0 0.0
    %4231 = vmatpush2.xpose.msra.mxu0 0.0
    %4232 = vmatprep.subr.mxu0 0.0
    %4233 = vmatpush2.xpose.msra.mxu0 0.0
    %4234 = vmatprep.subr.mxu0 0.0
    %4235 = vmatpush2.xpose.msra.mxu0 0.0
    %4236 = vmatprep.subr.mxu0 0.0
    %4237 = vmatpush2.xpose.msra.mxu0 0.0
    %4238 = vmatprep.subr.mxu0 0.0
    %4239 = vmatpush2.xpose.msra.mxu0 0.0
    %4240 = vmatprep.mubr.f32.mxu0 0.0
    %v4241 = vand.u32 %v4050, 4294901760
    %4242 = vmatmul.mubr.f32.gmra.mxu0 %v4241
    %v4243 = vpop.f32.mrf.mxu0
    %v4244 = vadd.f32 %v4143, %v4243
    %v4245 = vpop.f32.mrf.mxu0
    %4246 = vmatprep.mubr.f32.mxu0 0.0
    %v4247 = vand.u32 %v4053, 4294901760
    %4248 = vmatmul.mubr.f32.gmra.mxu0 %v4247
    %v4249 = vpop.f32.mrf.mxu0
    %v4250 = vadd.f32 %v4153, %v4249
    %v4251 = vpop.f32.mrf.mxu0
    %4252 = vdwg.mxu0
    %4253 = vmatprep.subr.mxu0 0.0
    %4254 = vmatpush1.xpose.msra.mxu0 0.0
    %4255 = vmatprep.subr.mxu0 0.0
    %4256 = vmatpush1.xpose.msra.mxu0 0.0
    %4257 = vmatprep.subr.mxu0 0.0
    %4258 = vmatpush1.xpose.msra.mxu0 0.0
    %4259 = vmatprep.subr.mxu0 0.0
    %4260 = vmatpush1.xpose.msra.mxu0 0.0
    %4261 = vmatprep.subr.mxu0 0.0
    %4262 = vmatpush1.xpose.msra.mxu0 0.0
    %4263 = vmatprep.subr.mxu0 0.0
    %4264 = vmatpush1.xpose.msra.mxu0 0.0
    %4265 = vmatprep.subr.mxu0 0.0
    %4266 = vmatpush1.xpose.msra.mxu0 0.0
    %4267 = vmatprep.subr.mxu0 0.0
    %4268 = vmatpush1.xpose.msra.mxu0 0.0
    %4269 = vmatprep.subr.mxu0 0.0
    %4270 = vmatpush1.xpose.msra.mxu0 0.0
    %4271 = vmatprep.subr.mxu0 0.0
    %4272 = vmatpush1.xpose.msra.mxu0 0.0
    %4273 = vmatprep.subr.mxu0 0.0
    %4274 = vmatpush1.xpose.msra.mxu0 0.0
    %4275 = vmatprep.subr.mxu0 0.0
    %4276 = vmatpush1.xpose.msra.mxu0 0.0
    %4277 = vmatprep.subr.mxu0 0.0
    %v4278 = vand.u32 %v4065, 4294901760
    %v4279 = vsub.f32 %v4065, %v4278
    %4280 = vmatpush1.xpose.msra.mxu0 %v4279
    %4281 = vmatprep.subr.mxu0 0.0
    %v4282 = vand.u32 %v4062, 4294901760
    %v4283 = vsub.f32 %v4062, %v4282
    %4284 = vmatpush1.xpose.msra.mxu0 %v4283
    %4285 = vmatprep.subr.mxu0 0.0
    %v4286 = vand.u32 %v4059, 4294901760
    %v4287 = vsub.f32 %v4059, %v4286
    %4288 = vmatpush1.xpose.msra.mxu0 %v4287
    %4289 = vmatprep.subr.mxu0 0.0
    %v4290 = vand.u32 %v4056, 4294901760
    %v4291 = vsub.f32 %v4056, %v4290
    %4292 = vmatpush1.xpose.msra.mxu0 %v4291
    %4293 = vmatprep.subr.mxu0 0.0
    %4294 = vmatpush2.xpose.msra.mxu0 0.0
    %4295 = vmatprep.subr.mxu0 0.0
    %4296 = vmatpush2.xpose.msra.mxu0 0.0
    %4297 = vmatprep.subr.mxu0 0.0
    %4298 = vmatpush2.xpose.msra.mxu0 0.0
    %4299 = vmatprep.subr.mxu0 0.0
    %4300 = vmatpush2.xpose.msra.mxu0 0.0
    %4301 = vmatprep.subr.mxu0 0.0
    %4302 = vmatpush2.xpose.msra.mxu0 0.0
    %4303 = vmatprep.subr.mxu0 0.0
    %4304 = vmatpush2.xpose.msra.mxu0 0.0
    %4305 = vmatprep.subr.mxu0 0.0
    %4306 = vmatpush2.xpose.msra.mxu0 0.0
    %4307 = vmatprep.subr.mxu0 0.0
    %4308 = vmatpush2.xpose.msra.mxu0 0.0
    %4309 = vmatprep.subr.mxu0 0.0
    %4310 = vmatpush2.xpose.msra.mxu0 0.0
    %4311 = vmatprep.subr.mxu0 0.0
    %4312 = vmatpush2.xpose.msra.mxu0 0.0
    %4313 = vmatprep.subr.mxu0 0.0
    %4314 = vmatpush2.xpose.msra.mxu0 0.0
    %4315 = vmatprep.subr.mxu0 0.0
    %4316 = vmatpush2.xpose.msra.mxu0 0.0
    %4317 = vmatprep.subr.mxu0 0.0
    %4318 = vmatpush2.xpose.msra.mxu0 0.0
    %4319 = vmatprep.subr.mxu0 0.0
    %4320 = vmatpush2.xpose.msra.mxu0 0.0
    %4321 = vmatprep.subr.mxu0 0.0
    %4322 = vmatpush2.xpose.msra.mxu0 0.0
    %4323 = vmatprep.subr.mxu0 0.0
    %4324 = vmatpush2.xpose.msra.mxu0 0.0
    %4325 = vmatprep.mubr.f32.mxu0 0.0
    %v4326 = vand.u32 %v4050, 4294901760
    %v4327 = vsub.f32 %v4050, %v4326
    %4328 = vmatmul.mubr.f32.gmra.mxu0 %v4327
    %v4329 = vpop.f32.mrf.mxu0
    %v4330 = vadd.f32 %v4244, %v4329
    %v4331 = vpop.f32.mrf.mxu0
    %4332 = vmatprep.mubr.f32.mxu0 0.0
    %v4333 = vand.u32 %v4053, 4294901760
    %v4334 = vsub.f32 %v4053, %v4333
    %4335 = vmatmul.mubr.f32.gmra.mxu0 %v4334
    %v4336 = vpop.f32.mrf.mxu0
    %v4337 = vadd.f32 %v4250, %v4336
    %v4338 = vpop.f32.mrf.mxu0
    %4339 = vdwg.mxu0
    %4340 = vmatprep.subr.mxu0 0.0
    %4341 = vmatpush1.xpose.msra.mxu0 0.0
    %4342 = vmatprep.subr.mxu0 0.0
    %4343 = vmatpush1.xpose.msra.mxu0 0.0
    %4344 = vmatprep.subr.mxu0 0.0
    %4345 = vmatpush1.xpose.msra.mxu0 0.0
    %4346 = vmatprep.subr.mxu0 0.0
    %4347 = vmatpush1.xpose.msra.mxu0 0.0
    %4348 = vmatprep.subr.mxu0 0.0
    %4349 = vmatpush1.xpose.msra.mxu0 0.0
    %4350 = vmatprep.subr.mxu0 0.0
    %4351 = vmatpush1.xpose.msra.mxu0 0.0
    %4352 = vmatprep.subr.mxu0 0.0
    %4353 = vmatpush1.xpose.msra.mxu0 0.0
    %4354 = vmatprep.subr.mxu0 0.0
    %4355 = vmatpush1.xpose.msra.mxu0 0.0
    %4356 = vmatprep.subr.mxu0 0.0
    %4357 = vmatpush1.xpose.msra.mxu0 0.0
    %4358 = vmatprep.subr.mxu0 0.0
    %4359 = vmatpush1.xpose.msra.mxu0 0.0
    %4360 = vmatprep.subr.mxu0 0.0
    %4361 = vmatpush1.xpose.msra.mxu0 0.0
    %4362 = vmatprep.subr.mxu0 0.0
    %4363 = vmatpush1.xpose.msra.mxu0 0.0
    %4364 = vmatprep.subr.mxu0 0.0
    %v4365 = vand.u32 %v4065, 4294901760
    %4366 = vmatpush1.xpose.msra.mxu0 %v4365
    %4367 = vmatprep.subr.mxu0 0.0
    %v4368 = vand.u32 %v4062, 4294901760
    %4369 = vmatpush1.xpose.msra.mxu0 %v4368
    %4370 = vmatprep.subr.mxu0 0.0
    %v4371 = vand.u32 %v4059, 4294901760
    %4372 = vmatpush1.xpose.msra.mxu0 %v4371
    %4373 = vmatprep.subr.mxu0 0.0
    %v4374 = vand.u32 %v4056, 4294901760
    %4375 = vmatpush1.xpose.msra.mxu0 %v4374
    %4376 = vmatprep.subr.mxu0 0.0
    %4377 = vmatpush2.xpose.msra.mxu0 0.0
    %4378 = vmatprep.subr.mxu0 0.0
    %4379 = vmatpush2.xpose.msra.mxu0 0.0
    %4380 = vmatprep.subr.mxu0 0.0
    %4381 = vmatpush2.xpose.msra.mxu0 0.0
    %4382 = vmatprep.subr.mxu0 0.0
    %4383 = vmatpush2.xpose.msra.mxu0 0.0
    %4384 = vmatprep.subr.mxu0 0.0
    %4385 = vmatpush2.xpose.msra.mxu0 0.0
    %4386 = vmatprep.subr.mxu0 0.0
    %4387 = vmatpush2.xpose.msra.mxu0 0.0
    %4388 = vmatprep.subr.mxu0 0.0
    %4389 = vmatpush2.xpose.msra.mxu0 0.0
    %4390 = vmatprep.subr.mxu0 0.0
    %4391 = vmatpush2.xpose.msra.mxu0 0.0
    %4392 = vmatprep.subr.mxu0 0.0
    %4393 = vmatpush2.xpose.msra.mxu0 0.0
    %4394 = vmatprep.subr.mxu0 0.0
    %4395 = vmatpush2.xpose.msra.mxu0 0.0
    %4396 = vmatprep.subr.mxu0 0.0
    %4397 = vmatpush2.xpose.msra.mxu0 0.0
    %4398 = vmatprep.subr.mxu0 0.0
    %4399 = vmatpush2.xpose.msra.mxu0 0.0
    %4400 = vmatprep.subr.mxu0 0.0
    %4401 = vmatpush2.xpose.msra.mxu0 0.0
    %4402 = vmatprep.subr.mxu0 0.0
    %4403 = vmatpush2.xpose.msra.mxu0 0.0
    %4404 = vmatprep.subr.mxu0 0.0
    %4405 = vmatpush2.xpose.msra.mxu0 0.0
    %4406 = vmatprep.subr.mxu0 0.0
    %4407 = vmatpush2.xpose.msra.mxu0 0.0
    %4408 = vmatprep.mubr.f32.mxu0 0.0
    %v4409 = vand.u32 %v4050, 4294901760
    %v4410 = vsub.f32 %v4050, %v4409
    %v4411 = vand.u32 %v4410, 4294901760
    %4412 = vmatmul.mubr.f32.gmra.mxu0 %v4411
    %v4413 = vpop.f32.mrf.mxu0
    %v4414 = vadd.f32 %v4330, %v4413
    %v4415 = vpop.f32.mrf.mxu0
    %4416 = vmatprep.mubr.f32.mxu0 0.0
    %v4417 = vand.u32 %v4053, 4294901760
    %v4418 = vsub.f32 %v4053, %v4417
    %v4419 = vand.u32 %v4418, 4294901760
    %4420 = vmatmul.mubr.f32.gmra.mxu0 %v4419
    %v4421 = vpop.f32.mrf.mxu0
    %v4422 = vadd.f32 %v4337, %v4421
    %v4423 = vpop.f32.mrf.mxu0
    %4424 = vdwg.mxu0
    %4425 = vmatprep.subr.mxu0 0.0
    %4426 = vmatpush1.xpose.msra.mxu0 0.0
    %4427 = vmatprep.subr.mxu0 0.0
    %4428 = vmatpush1.xpose.msra.mxu0 0.0
    %4429 = vmatprep.subr.mxu0 0.0
    %4430 = vmatpush1.xpose.msra.mxu0 0.0
    %4431 = vmatprep.subr.mxu0 0.0
    %4432 = vmatpush1.xpose.msra.mxu0 0.0
    %4433 = vmatprep.subr.mxu0 0.0
    %4434 = vmatpush1.xpose.msra.mxu0 0.0
    %4435 = vmatprep.subr.mxu0 0.0
    %4436 = vmatpush1.xpose.msra.mxu0 0.0
    %4437 = vmatprep.subr.mxu0 0.0
    %4438 = vmatpush1.xpose.msra.mxu0 0.0
    %4439 = vmatprep.subr.mxu0 0.0
    %4440 = vmatpush1.xpose.msra.mxu0 0.0
    %4441 = vmatprep.subr.mxu0 0.0
    %4442 = vmatpush1.xpose.msra.mxu0 0.0
    %4443 = vmatprep.subr.mxu0 0.0
    %4444 = vmatpush1.xpose.msra.mxu0 0.0
    %4445 = vmatprep.subr.mxu0 0.0
    %4446 = vmatpush1.xpose.msra.mxu0 0.0
    %4447 = vmatprep.subr.mxu0 0.0
    %4448 = vmatpush1.xpose.msra.mxu0 0.0
    %4449 = vmatprep.subr.mxu0 0.0
    %v4450 = vand.u32 %v4065, 4294901760
    %v4451 = vsub.f32 %v4065, %v4450
    %v4452 = vand.u32 %v4451, 4294901760
    %4453 = vmatpush1.xpose.msra.mxu0 %v4452
    %4454 = vmatprep.subr.mxu0 0.0
    %v4455 = vand.u32 %v4062, 4294901760
    %v4456 = vsub.f32 %v4062, %v4455
    %v4457 = vand.u32 %v4456, 4294901760
    %4458 = vmatpush1.xpose.msra.mxu0 %v4457
    %4459 = vmatprep.subr.mxu0 0.0
    %v4460 = vand.u32 %v4059, 4294901760
    %v4461 = vsub.f32 %v4059, %v4460
    %v4462 = vand.u32 %v4461, 4294901760
    %4463 = vmatpush1.xpose.msra.mxu0 %v4462
    %4464 = vmatprep.subr.mxu0 0.0
    %v4465 = vand.u32 %v4056, 4294901760
    %v4466 = vsub.f32 %v4056, %v4465
    %v4467 = vand.u32 %v4466, 4294901760
    %4468 = vmatpush1.xpose.msra.mxu0 %v4467
    %4469 = vmatprep.subr.mxu0 0.0
    %4470 = vmatpush2.xpose.msra.mxu0 0.0
    %4471 = vmatprep.subr.mxu0 0.0
    %4472 = vmatpush2.xpose.msra.mxu0 0.0
    %4473 = vmatprep.subr.mxu0 0.0
    %4474 = vmatpush2.xpose.msra.mxu0 0.0
    %4475 = vmatprep.subr.mxu0 0.0
    %4476 = vmatpush2.xpose.msra.mxu0 0.0
    %4477 = vmatprep.subr.mxu0 0.0
    %4478 = vmatpush2.xpose.msra.mxu0 0.0
    %4479 = vmatprep.subr.mxu0 0.0
    %4480 = vmatpush2.xpose.msra.mxu0 0.0
    %4481 = vmatprep.subr.mxu0 0.0
    %4482 = vmatpush2.xpose.msra.mxu0 0.0
    %4483 = vmatprep.subr.mxu0 0.0
    %4484 = vmatpush2.xpose.msra.mxu0 0.0
    %4485 = vmatprep.subr.mxu0 0.0
    %4486 = vmatpush2.xpose.msra.mxu0 0.0
    %4487 = vmatprep.subr.mxu0 0.0
    %4488 = vmatpush2.xpose.msra.mxu0 0.0
    %4489 = vmatprep.subr.mxu0 0.0
    %4490 = vmatpush2.xpose.msra.mxu0 0.0
    %4491 = vmatprep.subr.mxu0 0.0
    %4492 = vmatpush2.xpose.msra.mxu0 0.0
    %4493 = vmatprep.subr.mxu0 0.0
    %4494 = vmatpush2.xpose.msra.mxu0 0.0
    %4495 = vmatprep.subr.mxu0 0.0
    %4496 = vmatpush2.xpose.msra.mxu0 0.0
    %4497 = vmatprep.subr.mxu0 0.0
    %4498 = vmatpush2.xpose.msra.mxu0 0.0
    %4499 = vmatprep.subr.mxu0 0.0
    %4500 = vmatpush2.xpose.msra.mxu0 0.0
    %4501 = vmatprep.mubr.f32.mxu0 0.0
    %v4502 = vand.u32 %v4050, 4294901760
    %4503 = vmatmul.mubr.f32.gmra.mxu0 %v4502
    %v4504 = vpop.f32.mrf.mxu0
    %v4505 = vadd.f32 %v4414, %v4504
    %v4506 = vpop.f32.mrf.mxu0
    %4507 = vmatprep.mubr.f32.mxu0 0.0
    %v4508 = vand.u32 %v4053, 4294901760
    %4509 = vmatmul.mubr.f32.gmra.mxu0 %v4508
    %v4510 = vpop.f32.mrf.mxu0
    %v4511 = vadd.f32 %v4422, %v4510
    %v4512 = vpop.f32.mrf.mxu0
    %4513 = vdwg.mxu0
    %4514 = vmatprep.subr.mxu0 0.0
    %4515 = vmatpush1.xpose.msra.mxu0 0.0
    %4516 = vmatprep.subr.mxu0 0.0
    %4517 = vmatpush1.xpose.msra.mxu0 0.0
    %4518 = vmatprep.subr.mxu0 0.0
    %4519 = vmatpush1.xpose.msra.mxu0 0.0
    %4520 = vmatprep.subr.mxu0 0.0
    %4521 = vmatpush1.xpose.msra.mxu0 0.0
    %4522 = vmatprep.subr.mxu0 0.0
    %4523 = vmatpush1.xpose.msra.mxu0 0.0
    %4524 = vmatprep.subr.mxu0 0.0
    %4525 = vmatpush1.xpose.msra.mxu0 0.0
    %4526 = vmatprep.subr.mxu0 0.0
    %4527 = vmatpush1.xpose.msra.mxu0 0.0
    %4528 = vmatprep.subr.mxu0 0.0
    %4529 = vmatpush1.xpose.msra.mxu0 0.0
    %4530 = vmatprep.subr.mxu0 0.0
    %4531 = vmatpush1.xpose.msra.mxu0 0.0
    %4532 = vmatprep.subr.mxu0 0.0
    %4533 = vmatpush1.xpose.msra.mxu0 0.0
    %4534 = vmatprep.subr.mxu0 0.0
    %4535 = vmatpush1.xpose.msra.mxu0 0.0
    %4536 = vmatprep.subr.mxu0 0.0
    %4537 = vmatpush1.xpose.msra.mxu0 0.0
    %4538 = vmatprep.subr.mxu0 0.0
    %v4539 = vand.u32 %v4065, 4294901760
    %4540 = vmatpush1.xpose.msra.mxu0 %v4539
    %4541 = vmatprep.subr.mxu0 0.0
    %v4542 = vand.u32 %v4062, 4294901760
    %4543 = vmatpush1.xpose.msra.mxu0 %v4542
    %4544 = vmatprep.subr.mxu0 0.0
    %v4545 = vand.u32 %v4059, 4294901760
    %4546 = vmatpush1.xpose.msra.mxu0 %v4545
    %4547 = vmatprep.subr.mxu0 0.0
    %v4548 = vand.u32 %v4056, 4294901760
    %4549 = vmatpush1.xpose.msra.mxu0 %v4548
    %4550 = vmatprep.subr.mxu0 0.0
    %4551 = vmatpush2.xpose.msra.mxu0 0.0
    %4552 = vmatprep.subr.mxu0 0.0
    %4553 = vmatpush2.xpose.msra.mxu0 0.0
    %4554 = vmatprep.subr.mxu0 0.0
    %4555 = vmatpush2.xpose.msra.mxu0 0.0
    %4556 = vmatprep.subr.mxu0 0.0
    %4557 = vmatpush2.xpose.msra.mxu0 0.0
    %4558 = vmatprep.subr.mxu0 0.0
    %4559 = vmatpush2.xpose.msra.mxu0 0.0
    %4560 = vmatprep.subr.mxu0 0.0
    %4561 = vmatpush2.xpose.msra.mxu0 0.0
    %4562 = vmatprep.subr.mxu0 0.0
    %4563 = vmatpush2.xpose.msra.mxu0 0.0
    %4564 = vmatprep.subr.mxu0 0.0
    %4565 = vmatpush2.xpose.msra.mxu0 0.0
    %4566 = vmatprep.subr.mxu0 0.0
    %4567 = vmatpush2.xpose.msra.mxu0 0.0
    %4568 = vmatprep.subr.mxu0 0.0
    %4569 = vmatpush2.xpose.msra.mxu0 0.0
    %4570 = vmatprep.subr.mxu0 0.0
    %4571 = vmatpush2.xpose.msra.mxu0 0.0
    %4572 = vmatprep.subr.mxu0 0.0
    %4573 = vmatpush2.xpose.msra.mxu0 0.0
    %4574 = vmatprep.subr.mxu0 0.0
    %4575 = vmatpush2.xpose.msra.mxu0 0.0
    %4576 = vmatprep.subr.mxu0 0.0
    %4577 = vmatpush2.xpose.msra.mxu0 0.0
    %4578 = vmatprep.subr.mxu0 0.0
    %4579 = vmatpush2.xpose.msra.mxu0 0.0
    %4580 = vmatprep.subr.mxu0 0.0
    %4581 = vmatpush2.xpose.msra.mxu0 0.0
    %4582 = vmatprep.mubr.f32.mxu0 0.0
    %v4583 = vand.u32 %v4050, 4294901760
    %4584 = vmatmul.mubr.f32.gmra.mxu0 %v4583
    %v4585 = vpop.f32.mrf.mxu0
    %v4586 = vadd.f32 %v4505, %v4585
    %v4587 = vpop.f32.mrf.mxu0
    %4588 = vmatprep.mubr.f32.mxu0 0.0
    %v4589 = vand.u32 %v4053, 4294901760
    %4590 = vmatmul.mubr.f32.gmra.mxu0 %v4589
    %v4591 = vpop.f32.mrf.mxu0
    %v4592 = vadd.f32 %v4511, %v4591
    %v4593 = vpop.f32.mrf.mxu0
    %4594 = vdwg.mxu0
    %s4595 = scalar_lea.vmem [#allocation2], 16
    %4596 = vst.msk [vmem:[%s4595] sm:$0xff] %vm1276, %v4586
    %4597 = vst.msk [vmem:[%s4595 + $0x8] sm:$0xff] %vm1276, %v4592
    %s4598 = scalar_lea.vmem [#allocation4], 32
    %4599 = vst.msk [vmem:[%s4598] sm:$0xff] %vm1774, %v4045
    %4600 = vst.msk [vmem:[%s4598 + $0x8] sm:$0xff] %vm1774, %v4046
    %4601 = vst.msk [vmem:[%s4598 + $0x10] sm:$0xff] %vm1774, %v4047
    %4602 = vst.msk [vmem:[%s4598 + $0x18] sm:$0xff] %vm1774, %v4048
    // Predicated region
    $region18: #{sa_layer_1.1} parent=1 // pred_check
      _
    $region19: #{sa_layer_1.1} parent=1 // pred_check_branch
      %4604 = sbr.rel (0) target = $region21
    $region20: #{sa_layer_1.1} parent=1 // pred_region
      %s4606 = ssub.s32 512, 512
      %4607 = vsyncadd [#allocation3], %s4606
      %s4608 = sshll.u32 [#allocation2], 4
      %s4609 = int_to_ptr.vmem [resolvable:$true] %s4608
      %4614 = dma.vmem_to_hbm [thread:$0]  %s4609, 512, %s4, [#allocation3], 128, 128, 8
    $region21: #{sa_layer_1.1} parent=1 // pred_fallthru
      _
    // Predicated region
    $region22: #{sa_layer_1.1} parent=1 // pred_check
      _
    $region23: #{sa_layer_1.1} parent=1 // pred_check_branch
      %4616 = sbr.rel (0) target = $region25
    $region24: #{sa_layer_1.1} parent=1 // pred_region
      %s4618 = ssub.s32 1024, 1024
      %4619 = vsyncadd [#allocation5], %s4618
      %s4620 = sshll.u32 [#allocation4], 4
      %s4621 = int_to_ptr.vmem [resolvable:$true] %s4620
      %4626 = dma.vmem_to_hbm [thread:$0]  %s4621, 1024, %s5, [#allocation5], 128, 128, 8
    $region25: #{sa_layer_1.1} parent=1 // pred_fallthru
      _
    // Predicated region
    $region26: #{sa_layer_1.1} parent=1 // pred_check
      _
    $region27: #{sa_layer_1.1} parent=1 // pred_check_branch
      %4628 = sbr.rel (0) target = $region29
    $region28: #{sa_layer_1.1} parent=1 // pred_region
      %4629 = dma.done [#allocation3], 512
    $region29: #{sa_layer_1.1} parent=1 // pred_fallthru
      _
    // Predicated region
    $region30: #{sa_layer_1.1} parent=1 // pred_check
      _
    $region31: #{sa_layer_1.1} parent=1 // pred_check_branch
      %4631 = sbr.rel (0) target = $region33
    $region32: #{sa_layer_1.1} parent=1 // pred_region
      %4632 = dma.done [#allocation5], 1024
    $region33: #{sa_layer_1.1} parent=1 // pred_fallthru
      _
    %4633 = vsyncpa [#allocation3], 1
    %4634 = vsyncpa [#allocation5], 1

</llo_original>
